<compile_context>
chip_gen: v7x
topology: tpu7x:2x2x1
jax: 0.10.0
libtpu: 0.0.40
codegen_flags: <defaults>
</compile_context>

<pallas_src>
import functools
import math

import jax
import jax.numpy as jnp
from jax import lax
from jax.experimental import pallas as pl
from jax.experimental.pallas import tpu as pltpu

_LN_EPS = 1e-5  # torch.nn.LayerNorm default


# ----------------------------------------------------------------------------
# small helpers
# ----------------------------------------------------------------------------

def _pick_block_n(batch, seq):
    """Batch elements per grid step (multiple of the batch, rows multiple of 8)."""
    if seq % 8 != 0:
        return batch                        # full-extent block satisfies (8,128) rule
    bn = max(1, min(batch, 256 // max(seq, 1), 8))
    while batch % bn:
        bn -= 1
    if bn > 1 and (batch // bn) < 2:        # keep >=2 parallel steps for v7x megacore
        half = bn // 2
        while half > 1 and batch % half:
            half -= 1
        bn = max(1, half)
    return bn


def _vmem_limit_bytes(per_step_bytes):
    # Explicit scoped-VMEM budget: enough for double-buffered blocks + temporaries,
    # capped below v7x's 64 MiB physical VMEM (safe on v5e/v6e too).
    return int(min(56 * 1024 * 1024, max(32 * 1024 * 1024, 4 * per_step_bytes)))


def _layernorm(x, g, b, eps=_LN_EPS):
    mean = jnp.mean(x, axis=-1, keepdims=True)
    var = jnp.mean((x - mean) ** 2, axis=-1, keepdims=True)
    return (x - mean) * lax.rsqrt(var + eps) * g + b


def _mha(q_src, v_src, wqkv, wo, bo, *, bn, seq, num_heads, head_dim, fused):
    """Multi-head attention on a (bn*seq, E) f32 slab; all intermediates are values.

    wqkv: block-diagonal (E, 3E) bf16 combined projection with 1/sqrt(embed_size)
    folded into the Q columns.  Q and K are projected from q_src, V from v_src
    (identical for self-attention).  Per-(batch, head) score blocks are computed on
    register values and merged with concatenation (no lane-masked scratch stores).
    """
    e_dim = num_heads * head_dim
    qsb = q_src.astype(jnp.bfloat16)
    if fused:
        qkv = jnp.dot(qsb, wqkv, preferred_element_type=jnp.float32)
        q_all = qkv[:, :e_dim]
        k_all = qkv[:, e_dim:2 * e_dim]
        v_all = qkv[:, 2 * e_dim:]
    else:
        qk = jnp.dot(qsb, wqkv[:, :2 * e_dim], preferred_element_type=jnp.float32)
        q_all = qk[:, :e_dim]
        k_all = qk[:, e_dim:]
        v_all = jnp.dot(v_src.astype(jnp.bfloat16), wqkv[:, 2 * e_dim:],
                        preferred_element_type=jnp.float32)

    # TODO(synk): for large num_heads / head_dim, switch to a head-batched
    # dot_general ((bn*H, L, d) layout) instead of this unrolled per-(b, h) loop.
    outs = []
    for b in range(bn):
        r0 = b * seq
        heads = []
        for h in range(num_heads):
            lo = h * head_dim
            qh = q_all[r0:r0 + seq, lo:lo + head_dim].astype(jnp.bfloat16)
            kh = k_all[r0:r0 + seq, lo:lo + head_dim].astype(jnp.bfloat16)
            vh = v_all[r0:r0 + seq, lo:lo + head_dim].astype(jnp.bfloat16)
            energy = lax.dot_general(qh, kh, (((1,), (1,)), ((), ())),
                                     preferred_element_type=jnp.float32)
            m = jnp.max(energy, axis=-1, keepdims=True)
            p = jnp.exp(energy - m)
            p = p * pl.reciprocal(jnp.sum(p, axis=-1, keepdims=True), approx=True)
            heads.append(jnp.dot(p.astype(jnp.bfloat16), vh,
                                 preferred_element_type=jnp.float32))
        merged = heads[0] if num_heads == 1 else jnp.concatenate(heads, axis=-1)
        outs.append(merged)
    att = outs[0] if bn == 1 else jnp.concatenate(outs, axis=0)
    return jnp.dot(att.astype(jnp.bfloat16), wo,
                   preferred_element_type=jnp.float32) + bo


# ----------------------------------------------------------------------------
# fused stack kernels (one pallas_call per encoder / decoder stack)
# ----------------------------------------------------------------------------

def _encoder_stack_kernel(x_ref, wqkv_ref, wo_ref, bo_ref,
                          ln1g_ref, ln1b_ref,
                          w1_ref, b1_ref, w2_ref, b2_ref,
                          ln2g_ref, ln2b_ref,
                          o_ref, *, num_heads, head_dim, bn, seq):
    layer = pl.program_id(1)

    @pl.when(layer == 0)
    def _():
        o_ref[...] = x_ref[...]           # activation carried layer-to-layer in o_ref

    x = o_ref[...]
    att = _mha(x, x, wqkv_ref[0], wo_ref[0], bo_ref[0],
               bn=bn, seq=seq, num_heads=num_heads, head_dim=head_dim, fused=True)
    x1 = _layernorm(att + x, ln1g_ref[0], ln1b_ref[0])
    h = jnp.maximum(jnp.dot(x1.astype(jnp.bfloat16), w1_ref[0],
                            preferred_element_type=jnp.float32) + b1_ref[0], 0.0)
    ff = jnp.dot(h.astype(jnp.bfloat16), w2_ref[0],
                 preferred_element_type=jnp.float32) + b2_ref[0]
    o_ref[...] = _layernorm(ff + x1, ln2g_ref[0], ln2b_ref[0])


def _decoder_stack_kernel(x_ref, enc_ref, wqkv_ref, wo_ref, bo_ref,
                          ln1g_ref, ln1b_ref, ln2g_ref, ln2b_ref,
                          w1_ref, b1_ref, w2_ref, b2_ref,
                          ln3g_ref, ln3b_ref,
                          o_ref, *, num_heads, head_dim, bn, seq):
    layer = pl.program_id(1)

    @pl.when(layer == 0)
    def _():
        o_ref[...] = x_ref[...]

    x = o_ref[...]
    enc = enc_ref[...]
    # self-attention (masks are None in the reference forward)
    att = _mha(x, x, wqkv_ref[0], wo_ref[0], bo_ref[0],
               bn=bn, seq=seq, num_heads=num_heads, head_dim=head_dim, fused=True)
    x1 = _layernorm(att + x, ln1g_ref[0], ln1b_ref[0])
    # reference quirk: attention(values=x1, keys=enc_out, queries=enc_out), SAME weights
    att = _mha(enc, x1, wqkv_ref[0], wo_ref[0], bo_ref[0],
               bn=bn, seq=seq, num_heads=num_heads, head_dim=head_dim, fused=False)
    x2 = _layernorm(att + x1, ln2g_ref[0], ln2b_ref[0])
    h = jnp.maximum(jnp.dot(x2.astype(jnp.bfloat16), w1_ref[0],
                            preferred_element_type=jnp.float32) + b1_ref[0], 0.0)
    ff = jnp.dot(h.astype(jnp.bfloat16), w2_ref[0],
                 preferred_element_type=jnp.float32) + b2_ref[0]
    o_ref[...] = _layernorm(ff + x2, ln3g_ref[0], ln3b_ref[0])


def _final_proj_kernel(x_ref, w_ref, b_ref, o_ref):
    o_ref[...] = (jnp.dot(x_ref[...].astype(jnp.bfloat16), w_ref[...],
                          preferred_element_type=jnp.float32) + b_ref[...])


# ----------------------------------------------------------------------------
# pallas_call wrappers
# ----------------------------------------------------------------------------

def encoder_stack(x_flat, sp, *, num_heads, batch, seq):
    rows, e_dim = x_flat.shape
    n_layers = sp["wqkv"].shape[0]
    ffn = sp["w1"].shape[2]
    head_dim = e_dim // num_heads
    bn = _pick_block_n(batch, seq)
    rb = bn * seq
    grid = (batch // bn, n_layers)

    def xmap(i, l):
        return (i, 0)

    def wmap(i, l):
        return (l, 0, 0)

    kernel = functools.partial(_encoder_stack_kernel, num_heads=num_heads,
                               head_dim=head_dim, bn=bn, seq=seq)

    flops = int(batch * n_layers * (2 * seq * e_dim * 3 * e_dim
                                    + 4 * num_heads * seq * seq * head_dim
                                    + 2 * seq * e_dim * e_dim
                                    + 4 * seq * e_dim * ffn))
    trans = int(batch * n_layers * num_heads * seq * seq)
    w_bytes = 2 * (3 * e_dim * e_dim + e_dim * e_dim + 2 * e_dim * ffn) \
        + 4 * (5 * e_dim + ffn)
    bytes_accessed = int(8 * rows * e_dim + (batch // bn) * n_layers * w_bytes)
    per_step = 2 * rb * e_dim * 4 + 2 * w_bytes + 4 * rb * 3 * e_dim * 4

    return pl.pallas_call(
        kernel,
        out_shape=jax.ShapeDtypeStruct((rows, e_dim), jnp.float32),
        grid=grid,
        in_specs=[
            pl.BlockSpec((rb, e_dim), xmap),
            pl.BlockSpec((1, e_dim, 3 * e_dim), wmap),
            pl.BlockSpec((1, e_dim, e_dim), wmap),
            pl.BlockSpec((1, 1, e_dim), wmap),
            pl.BlockSpec((1, 1, e_dim), wmap),
            pl.BlockSpec((1, 1, e_dim), wmap),
            pl.BlockSpec((1, e_dim, ffn), wmap),
            pl.BlockSpec((1, 1, ffn), wmap),
            pl.BlockSpec((1, ffn, e_dim), wmap),
            pl.BlockSpec((1, 1, e_dim), wmap),
            pl.BlockSpec((1, 1, e_dim), wmap),
            pl.BlockSpec((1, 1, e_dim), wmap),
        ],
        out_specs=pl.BlockSpec((rb, e_dim), xmap),
        compiler_params=pltpu.CompilerParams(
            dimension_semantics=("parallel", "arbitrary"),
            vmem_limit_bytes=_vmem_limit_bytes(per_step)),
        cost_estimate=pl.CostEstimate(flops=flops, transcendentals=trans,
                                      bytes_accessed=bytes_accessed),
    )(x_flat, sp["wqkv"], sp["wo"], sp["bo"], sp["ln1_g"], sp["ln1_b"],
      sp["w1"], sp["b1"], sp["w2"], sp["b2"], sp["ln2_g"], sp["ln2_b"])


def decoder_stack(x_flat, enc_flat, sp, *, num_heads, batch, seq):
    rows, e_dim = x_flat.shape
    assert enc_flat.shape == x_flat.shape, "reference einsum requires src_len == tgt_len"
    n_layers = sp["wqkv"].shape[0]
    ffn = sp["w1"].shape[2]
    head_dim = e_dim // num_heads
    bn = _pick_block_n(batch, seq)
    rb = bn * seq
    grid = (batch // bn, n_layers)

    def xmap(i, l):
        return (i, 0)

    def wmap(i, l):
        return (l, 0, 0)

    kernel = functools.partial(_decoder_stack_kernel, num_heads=num_heads,
                               head_dim=head_dim, bn=bn, seq=seq)

    flops = int(batch * n_layers * (2 * (2 * seq * e_dim * 3 * e_dim
                                         + 4 * num_heads * seq * seq * head_dim
                                         + 2 * seq * e_dim * e_dim)
                                    + 4 * seq * e_dim * ffn))
    trans = int(2 * batch * n_layers * num_heads * seq * seq)
    w_bytes = 2 * (3 * e_dim * e_dim + e_dim * e_dim + 2 * e_dim * ffn) \
        + 4 * (7 * e_dim + ffn)
    bytes_accessed = int(12 * rows * e_dim + (batch // bn) * n_layers * w_bytes)
    per_step = 3 * rb * e_dim * 4 + 2 * w_bytes + 4 * rb * 3 * e_dim * 4

    return pl.pallas_call(
        kernel,
        out_shape=jax.ShapeDtypeStruct((rows, e_dim), jnp.float32),
        grid=grid,
        in_specs=[
            pl.BlockSpec((rb, e_dim), xmap),
            pl.BlockSpec((rb, e_dim), xmap),
            pl.BlockSpec((1, e_dim, 3 * e_dim), wmap),
            pl.BlockSpec((1, e_dim, e_dim), wmap),
            pl.BlockSpec((1, 1, e_dim), wmap),
            pl.BlockSpec((1, 1, e_dim), wmap),
            pl.BlockSpec((1, 1, e_dim), wmap),
            pl.BlockSpec((1, 1, e_dim), wmap),
            pl.BlockSpec((1, 1, e_dim), wmap),
            pl.BlockSpec((1, e_dim, ffn), wmap),
            pl.BlockSpec((1, 1, ffn), wmap),
            pl.BlockSpec((1, ffn, e_dim), wmap),
            pl.BlockSpec((1, 1, e_dim), wmap),
            pl.BlockSpec((1, 1, e_dim), wmap),
            pl.BlockSpec((1, 1, e_dim), wmap),
        ],
        out_specs=pl.BlockSpec((rb, e_dim), xmap),
        compiler_params=pltpu.CompilerParams(
            dimension_semantics=("parallel", "arbitrary"),
            vmem_limit_bytes=_vmem_limit_bytes(per_step)),
        cost_estimate=pl.CostEstimate(flops=flops, transcendentals=trans,
                                      bytes_accessed=bytes_accessed),
    )(x_flat, enc_flat, sp["wqkv"], sp["wo"], sp["bo"],
      sp["ln1_g"], sp["ln1_b"], sp["ln2_g"], sp["ln2_b"],
      sp["w1"], sp["b1"], sp["w2"], sp["b2"], sp["ln3_g"], sp["ln3_b"])


def final_projection(x_flat, w_pad, b_pad, *, batch, seq):
    rows, e_dim = x_flat.shape
    v_pad = w_pad.shape[1]
    tile_v = min(512, v_pad)                 # v_pad is a multiple of tile_v by construction
    bn = _pick_block_n(batch, seq)
    rb = bn * seq
    grid = (rows // rb, v_pad // tile_v)

    flops = int(2 * rows * e_dim * v_pad)
    bytes_accessed = int(4 * rows * e_dim + 2 * e_dim * v_pad + 4 * v_pad
                         + 4 * rows * v_pad)
    per_step = rb * e_dim * 4 + 2 * (e_dim * tile_v * 2) + tile_v * 4 + rb * tile_v * 4

    return pl.pallas_call(
        _final_proj_kernel,
        out_shape=jax.ShapeDtypeStruct((rows, v_pad), jnp.float32),
        grid=grid,
        in_specs=[pl.BlockSpec((rb, e_dim), lambda i, j: (i, 0)),
                  pl.BlockSpec((e_dim, tile_v), lambda i, j: (0, j)),
                  pl.BlockSpec((1, tile_v), lambda i, j: (0, j))],
        out_specs=pl.BlockSpec((rb, tile_v), lambda i, j: (i, j)),
        compiler_params=pltpu.CompilerParams(
            dimension_semantics=("parallel", "parallel"),
            vmem_limit_bytes=_vmem_limit_bytes(per_step)),
        cost_estimate=pl.CostEstimate(flops=flops, transcendentals=0,
                                      bytes_accessed=bytes_accessed),
    )(x_flat, w_pad, b_pad)


# ----------------------------------------------------------------------------
# model forward
# ----------------------------------------------------------------------------

def transformer_forward(params, x_tok, tgt_tok, *, num_heads, vocab_size):
    emb = params["embedding"]
    pos = params["pos"]
    n, ls = x_tok.shape
    nt, lt = tgt_tok.shape
    assert n == nt and ls == lt, "reference cross-attention requires src_len == tgt_len"
    assert ls <= pos.shape[1]
    e_dim = emb.shape[1]

    # TODO(synk): embedding gather + positional add kept as JAX glue (tiny int gather).
    embed_x = (emb[x_tok] + pos[:, :ls, :]).reshape(n * ls, e_dim)
    embed_t = (emb[tgt_tok] + pos[:, :lt, :]).reshape(n * lt, e_dim)

    enc = encoder_stack(embed_x, params["enc"], num_heads=num_heads, batch=n, seq=ls)
    dec = decoder_stack(embed_t, enc, params["dec"], num_heads=num_heads, batch=n, seq=lt)
    out = final_projection(dec, params["fc_w_pad"], params["fc_b_pad"], batch=n, seq=lt)
    return out.reshape(n, lt, -1)[:, :, :vocab_size]   # strip vocab lane padding


# ----------------------------------------------------------------------------
# deterministic parameter init + kernel-ready preparation
# ----------------------------------------------------------------------------

def init_params(key, vocab_size, embed_size, num_heads,
                num_encoder_layers, num_decoder_layers,
                forward_expansion, max_len):
    d = embed_size // num_heads
    keys = iter(jax.random.split(key, 512))

    def w(shape, scale=0.05):
        return (scale * jax.random.normal(next(keys), shape)).astype(jnp.float32)

    def mha_params():
        return {"wv": w((d, d)), "wk": w((d, d)), "wq": w((d, d)),
                "wo": w((embed_size, embed_size)),
                "bo": jnp.zeros((embed_size,), jnp.float32)}

    def layer_params(is_decoder):
        p = {"attn": mha_params(),
             "ln1_g": jnp.ones((embed_size,), jnp.float32),
             "ln1_b": jnp.zeros((embed_size,), jnp.float32),
             "ln2_g": jnp.ones((embed_size,), jnp.float32),
             "ln2_b": jnp.zeros((embed_size,), jnp.float32),
             "w1": w((embed_size, forward_expansion)),
             "b1": jnp.zeros((forward_expansion,), jnp.float32),
             "w2": w((forward_expansion, embed_size)),
             "b2": jnp.zeros((embed_size,), jnp.float32)}
        if is_decoder:
            p["ln3_g"] = jnp.ones((embed_size,), jnp.float32)
            p["ln3_b"] = jnp.zeros((embed_size,), jnp.float32)
        return p

    return {"embedding": w((vocab_size, embed_size), scale=0.1),
            "pos": jnp.zeros((1, max_len, embed_size), jnp.float32),  # zeros parameter
            "enc_layers": [layer_params(False) for _ in range(num_encoder_layers)],
            "dec_layers": [layer_params(True) for _ in range(num_decoder_layers)],
            "fc_w": w((embed_size, vocab_size)),
            "fc_b": jnp.zeros((vocab_size,), jnp.float32)}


def _block_diag(wmat, num_heads):
    d = wmat.shape[0]
    eye = jnp.eye(num_heads, dtype=wmat.dtype)
    return (eye[:, None, :, None] * wmat[None, :, None, :]).reshape(
        num_heads * d, num_heads * d)


def prepare_params(raw, embed_size, num_heads):
    """One-time conversion into kernel-ready, layer-stacked, bf16-weight layout."""
    scale = 1.0 / math.sqrt(float(embed_size))   # reference: energy / sqrt(embed_size)

    def stack_layers(layers, is_decoder):
        def one(lp):
            a = lp["attn"]
            wq = _block_diag(a["wq"], num_heads) * scale  # fold softmax scale into Q
            wk = _block_diag(a["wk"], num_heads)
            wv = _block_diag(a["wv"], num_heads)
            entry = {
                "wqkv": jnp.concatenate([wq, wk, wv], axis=1).astype(jnp.bfloat16),
                "wo": a["wo"].astype(jnp.bfloat16),
                "bo": a["bo"].reshape(1, -1),
                "ln1_g": lp["ln1_g"].reshape(1, -1),
                "ln1_b": lp["ln1_b"].reshape(1, -1),
                "ln2_g": lp["ln2_g"].reshape(1, -1),
                "ln2_b": lp["ln2_b"].reshape(1, -1),
                "w1": lp["w1"].astype(jnp.bfloat16),
                "b1": lp["b1"].reshape(1, -1),
                "w2": lp["w2"].astype(jnp.bfloat16),
                "b2": lp["b2"].reshape(1, -1),
            }
            if is_decoder:
                entry["ln3_g"] = lp["ln3_g"].reshape(1, -1)
                entry["ln3_b"] = lp["ln3_b"].reshape(1, -1)
            return entry
        per = [one(lp) for lp in layers]
        return {k: jnp.stack([p[k] for p in per], axis=0) for k in per[0]}

    vocab = raw["fc_w"].shape[1]
    tile_v = 512 if vocab > 512 else ((vocab + 127) // 128) * 128
    v_pad = ((vocab + tile_v - 1) // tile_v) * tile_v
    return {"embedding": raw["embedding"], "pos": raw["pos"],
            "enc": stack_layers(raw["enc_layers"], False),
            "dec": stack_layers(raw["dec_layers"], True),
            "fc_w_pad": jnp.pad(raw["fc_w"],
                                ((0, 0), (0, v_pad - vocab))).astype(jnp.bfloat16),
            "fc_b_pad": jnp.pad(raw["fc_b"], (0, v_pad - vocab)).reshape(1, v_pad)}


# ----------------------------------------------------------------------------

if __name__ == "__main__":
    vocab_size = 50
    embed_size = 32
    num_heads = 4
    num_encoder_layers = 2
    num_decoder_layers = 2
    forward_expansion = 64   # FFN hidden units (as in the torch code)
    max_len = 16
    batch = 2
    seq = 8                  # src_len == tgt_len (required by the torch einsum)

    root = jax.random.PRNGKey(0)
    k_params, k_x, k_t = jax.random.split(root, 3)
    raw_params = init_params(k_params, vocab_size, embed_size, num_heads,
                             num_encoder_layers, num_decoder_layers,
                             forward_expansion, max_len)
    params = prepare_params(raw_params, embed_size, num_heads)

    x_tok = jax.random.randint(k_x, (batch, seq), 0, vocab_size, dtype=jnp.int32)
    tgt_tok = jax.random.randint(k_t, (batch, seq), 0, vocab_size, dtype=jnp.int32)

    # TODO(synk): src_mask / tgt_mask are None (masked_fill skipped) and dropout is
    #             identity (eval semantics); matmuls use bf16 operands with f32
    #             accumulation, LayerNorm/softmax stay in f32.
    fwd = jax.jit(functools.partial(transformer_forward,
                                    num_heads=num_heads, vocab_size=vocab_size))
    out = jax.block_until_ready(fwd(params, x_tok, tgt_tok))
    assert out.shape == (batch, seq, vocab_size)
    assert bool(jnp.all(jnp.isfinite(out)))
    print("KERNEL_OK")
</pallas_src>

<mosaic_0001>
module attributes {stable_mosaic.version = 11 : i64} {
  func.func @_decoder_stack_kernel(%arg0: i32, %arg1: i32, %arg2: memref<8x32xf32, #tpu.memory_space<vmem>>, %arg3: memref<8x32xf32, #tpu.memory_space<vmem>>, %arg4: memref<1x32x96xbf16, #tpu.memory_space<vmem>>, %arg5: memref<1x32x32xbf16, #tpu.memory_space<vmem>>, %arg6: memref<1x1x32xf32, #tpu.memory_space<vmem>>, %arg7: memref<1x1x32xf32, #tpu.memory_space<vmem>>, %arg8: memref<1x1x32xf32, #tpu.memory_space<vmem>>, %arg9: memref<1x1x32xf32, #tpu.memory_space<vmem>>, %arg10: memref<1x1x32xf32, #tpu.memory_space<vmem>>, %arg11: memref<1x32x64xbf16, #tpu.memory_space<vmem>>, %arg12: memref<1x1x64xf32, #tpu.memory_space<vmem>>, %arg13: memref<1x64x32xbf16, #tpu.memory_space<vmem>>, %arg14: memref<1x1x32xf32, #tpu.memory_space<vmem>>, %arg15: memref<1x1x32xf32, #tpu.memory_space<vmem>>, %arg16: memref<1x1x32xf32, #tpu.memory_space<vmem>>, %arg17: memref<8x32xf32, #tpu.memory_space<vmem>>) attributes {dimension_semantics = [#tpu.dimension_semantics<parallel>, #tpu.dimension_semantics<arbitrary>], iteration_bounds = array<i64: 2, 2>, scalar_prefetch = 0 : i64, scratch_operands = 0 : i64, tpu.core_type = #tpu.core_type<tc>, window_params = [{transform_indices = @transform_0, window_bounds = array<i64: 8, 32>}, {transform_indices = @transform_1, window_bounds = array<i64: 8, 32>}, {transform_indices = @transform_2, window_bounds = array<i64: 1, 32, 96>}, {transform_indices = @transform_3, window_bounds = array<i64: 1, 32, 32>}, {transform_indices = @transform_4, window_bounds = array<i64: 1, 1, 32>}, {transform_indices = @transform_5, window_bounds = array<i64: 1, 1, 32>}, {transform_indices = @transform_6, window_bounds = array<i64: 1, 1, 32>}, {transform_indices = @transform_7, window_bounds = array<i64: 1, 1, 32>}, {transform_indices = @transform_8, window_bounds = array<i64: 1, 1, 32>}, {transform_indices = @transform_9, window_bounds = array<i64: 1, 32, 64>}, {transform_indices = @transform_10, window_bounds = array<i64: 1, 1, 64>}, {transform_indices = @transform_11, window_bounds = array<i64: 1, 64, 32>}, {transform_indices = @transform_12, window_bounds = array<i64: 1, 1, 32>}, {transform_indices = @transform_13, window_bounds = array<i64: 1, 1, 32>}, {transform_indices = @transform_14, window_bounds = array<i64: 1, 1, 32>}, {transform_indices = @transform_15, window_bounds = array<i64: 8, 32>}]} {
    %c0_i32 = arith.constant 0 : i32
    %0 = arith.cmpi eq, %arg1, %c0_i32 : i32
    %1 = arith.extui %0 : i1 to i32
    %c0_i32_0 = arith.constant 0 : i32
    %2 = arith.cmpi ne, %1, %c0_i32_0 : i32
    scf.if %2 {
      %c0_108 = arith.constant 0 : index
      %c0_109 = arith.constant 0 : index
      %292 = vector.load %arg2[%c0_108, %c0_109] : memref<8x32xf32, #tpu.memory_space<vmem>>, vector<8x32xf32>
      %c0_110 = arith.constant 0 : index
      %c0_111 = arith.constant 0 : index
      %293 = vector.load %arg17[%c0_110, %c0_111] : memref<8x32xf32, #tpu.memory_space<vmem>>, vector<8x32xf32>
      tpu.vector_store %arg17[%c0_110, %c0_111], %292 {strides = array<i32>} : memref<8x32xf32, #tpu.memory_space<vmem>>, vector<8x32xf32>,
    } else {
    }
    %c0 = arith.constant 0 : index
    %c0_1 = arith.constant 0 : index
    %3 = vector.load %arg17[%c0, %c0_1] : memref<8x32xf32, #tpu.memory_space<vmem>>, vector<8x32xf32>
    %c0_2 = arith.constant 0 : index
    %c0_3 = arith.constant 0 : index
    %4 = vector.load %arg3[%c0_2, %c0_3] : memref<8x32xf32, #tpu.memory_space<vmem>>, vector<8x32xf32>
    %c0_4 = arith.constant 0 : index
    %c0_5 = arith.constant 0 : index
    %c0_6 = arith.constant 0 : index
    %5 = vector.load %arg4[%c0_4, %c0_5, %c0_6] : memref<1x32x96xbf16, #tpu.memory_space<vmem>>, vector<1x32x96xbf16>
    %6 = vector.shape_cast %5 : vector<1x32x96xbf16> to vector<32x96xbf16>
    %c0_7 = arith.constant 0 : index
    %c0_8 = arith.constant 0 : index
    %c0_9 = arith.constant 0 : index
    %7 = vector.load %arg5[%c0_7, %c0_8, %c0_9] : memref<1x32x32xbf16, #tpu.memory_space<vmem>>, vector<1x32x32xbf16>
    %8 = vector.shape_cast %7 : vector<1x32x32xbf16> to vector<32x32xbf16>
    %c0_10 = arith.constant 0 : index
    %c0_11 = arith.constant 0 : index
    %c0_12 = arith.constant 0 : index
    %9 = vector.load %arg6[%c0_10, %c0_11, %c0_12] : memref<1x1x32xf32, #tpu.memory_space<vmem>>, vector<1x1x32xf32>
    %10 = vector.shape_cast %9 : vector<1x1x32xf32> to vector<1x32xf32>
    %11 = arith.truncf %3 : vector<8x32xf32> to vector<8x32xbf16>
    %cst = arith.constant dense<0.000000e+00> : vector<8x96xf32>
    %12 = tpu.matmul %11, %6, %cst {dimension_numbers = #tpu.dot_dimension_numbers<[1], [0], [0], [1], [0, 0, 1, 1], [], []>} : vector<8x32xbf16>, vector<32x96xbf16>, vector<8x96xf32> -> vector<8x96xf32>
    %13 = vector.extract_strided_slice %12 {offsets = [0, 0], sizes = [8, 32], strides = [1, 1]} : vector<8x96xf32> to vector<8x32xf32>
    %14 = vector.extract_strided_slice %12 {offsets = [0, 32], sizes = [8, 32], strides = [1, 1]} : vector<8x96xf32> to vector<8x32xf32>
    %15 = vector.extract_strided_slice %12 {offsets = [0, 64], sizes = [8, 32], strides = [1, 1]} : vector<8x96xf32> to vector<8x32xf32>
    %16 = vector.extract_strided_slice %13 {offsets = [0, 0], sizes = [8, 8], strides = [1, 1]} : vector<8x32xf32> to vector<8x8xf32>
    %17 = arith.truncf %16 : vector<8x8xf32> to vector<8x8xbf16>
    %18 = vector.extract_strided_slice %14 {offsets = [0, 0], sizes = [8, 8], strides = [1, 1]} : vector<8x32xf32> to vector<8x8xf32>
    %19 = arith.truncf %18 : vector<8x8xf32> to vector<8x8xbf16>
    %20 = vector.extract_strided_slice %15 {offsets = [0, 0], sizes = [8, 8], strides = [1, 1]} : vector<8x32xf32> to vector<8x8xf32>
    %21 = arith.truncf %20 : vector<8x8xf32> to vector<8x8xbf16>
    %cst_13 = arith.constant dense<0.000000e+00> : vector<8x8xf32>
    %22 = tpu.matmul %17, %19, %cst_13 {dimension_numbers = #tpu.dot_dimension_numbers<[1], [1], [0], [0], [0, 0, 1, 0], [], []>} : vector<8x8xbf16>, vector<8x8xbf16>, vector<8x8xf32> -> vector<8x8xf32>
    %cst_14 = arith.constant dense<0xFF800000> : vector<8xf32>
    %23 = vector.multi_reduction <maximumf>, %22, %cst_14 [1] : vector<8x8xf32> to vector<8xf32>
    %24 = vector.shape_cast %23 : vector<8xf32> to vector<8x1xf32>
    %25 = vector.broadcast %24 : vector<8x1xf32> to vector<8x8xf32>
    %26 = arith.subf %22, %25 : vector<8x8xf32>
    %27 = math.exp %26 : vector<8x8xf32>
    %cst_15 = arith.constant dense<0.000000e+00> : vector<8xf32>
    %28 = vector.multi_reduction <add>, %27, %cst_15 [1] : vector<8x8xf32> to vector<8xf32>
    %29 = vector.shape_cast %28 : vector<8xf32> to vector<8x1xf32>
    %30 = tpu.reciprocal %29 {approx = true} : vector<8x1xf32> -> vector<8x1xf32>
    %31 = vector.broadcast %30 : vector<8x1xf32> to vector<8x8xf32>
    %32 = arith.mulf %27, %31 : vector<8x8xf32>
    %33 = arith.truncf %32 : vector<8x8xf32> to vector<8x8xbf16>
    %cst_16 = arith.constant dense<0.000000e+00> : vector<8x8xf32>
    %34 = tpu.matmul %33, %21, %cst_16 {dimension_numbers = #tpu.dot_dimension_numbers<[1], [0], [0], [1], [0, 0, 1, 1], [], []>} : vector<8x8xbf16>, vector<8x8xbf16>, vector<8x8xf32> -> vector<8x8xf32>
    %35 = vector.extract_strided_slice %13 {offsets = [0, 8], sizes = [8, 8], strides = [1, 1]} : vector<8x32xf32> to vector<8x8xf32>
    %36 = arith.truncf %35 : vector<8x8xf32> to vector<8x8xbf16>
    %37 = vector.extract_strided_slice %14 {offsets = [0, 8], sizes = [8, 8], strides = [1, 1]} : vector<8x32xf32> to vector<8x8xf32>
    %38 = arith.truncf %37 : vector<8x8xf32> to vector<8x8xbf16>
    %39 = vector.extract_strided_slice %15 {offsets = [0, 8], sizes = [8, 8], strides = [1, 1]} : vector<8x32xf32> to vector<8x8xf32>
    %40 = arith.truncf %39 : vector<8x8xf32> to vector<8x8xbf16>
    %cst_17 = arith.constant dense<0.000000e+00> : vector<8x8xf32>
    %41 = tpu.matmul %36, %38, %cst_17 {dimension_numbers = #tpu.dot_dimension_numbers<[1], [1], [0], [0], [0, 0, 1, 0], [], []>} : vector<8x8xbf16>, vector<8x8xbf16>, vector<8x8xf32> -> vector<8x8xf32>
    %cst_18 = arith.constant dense<0xFF800000> : vector<8xf32>
    %42 = vector.multi_reduction <maximumf>, %41, %cst_18 [1] : vector<8x8xf32> to vector<8xf32>
    %43 = vector.shape_cast %42 : vector<8xf32> to vector<8x1xf32>
    %44 = vector.broadcast %43 : vector<8x1xf32> to vector<8x8xf32>
    %45 = arith.subf %41, %44 : vector<8x8xf32>
    %46 = math.exp %45 : vector<8x8xf32>
    %cst_19 = arith.constant dense<0.000000e+00> : vector<8xf32>
    %47 = vector.multi_reduction <add>, %46, %cst_19 [1] : vector<8x8xf32> to vector<8xf32>
    %48 = vector.shape_cast %47 : vector<8xf32> to vector<8x1xf32>
    %49 = tpu.reciprocal %48 {approx = true} : vector<8x1xf32> -> vector<8x1xf32>
    %50 = vector.broadcast %49 : vector<8x1xf32> to vector<8x8xf32>
    %51 = arith.mulf %46, %50 : vector<8x8xf32>
    %52 = arith.truncf %51 : vector<8x8xf32> to vector<8x8xbf16>
    %cst_20 = arith.constant dense<0.000000e+00> : vector<8x8xf32>
    %53 = tpu.matmul %52, %40, %cst_20 {dimension_numbers = #tpu.dot_dimension_numbers<[1], [0], [0], [1], [0, 0, 1, 1], [], []>} : vector<8x8xbf16>, vector<8x8xbf16>, vector<8x8xf32> -> vector<8x8xf32>
    %54 = vector.extract_strided_slice %13 {offsets = [0, 16], sizes = [8, 8], strides = [1, 1]} : vector<8x32xf32> to vector<8x8xf32>
    %55 = arith.truncf %54 : vector<8x8xf32> to vector<8x8xbf16>
    %56 = vector.extract_strided_slice %14 {offsets = [0, 16], sizes = [8, 8], strides = [1, 1]} : vector<8x32xf32> to vector<8x8xf32>
    %57 = arith.truncf %56 : vector<8x8xf32> to vector<8x8xbf16>
    %58 = vector.extract_strided_slice %15 {offsets = [0, 16], sizes = [8, 8], strides = [1, 1]} : vector<8x32xf32> to vector<8x8xf32>
    %59 = arith.truncf %58 : vector<8x8xf32> to vector<8x8xbf16>
    %cst_21 = arith.constant dense<0.000000e+00> : vector<8x8xf32>
    %60 = tpu.matmul %55, %57, %cst_21 {dimension_numbers = #tpu.dot_dimension_numbers<[1], [1], [0], [0], [0, 0, 1, 0], [], []>} : vector<8x8xbf16>, vector<8x8xbf16>, vector<8x8xf32> -> vector<8x8xf32>
    %cst_22 = arith.constant dense<0xFF800000> : vector<8xf32>
    %61 = vector.multi_reduction <maximumf>, %60, %cst_22 [1] : vector<8x8xf32> to vector<8xf32>
    %62 = vector.shape_cast %61 : vector<8xf32> to vector<8x1xf32>
    %63 = vector.broadcast %62 : vector<8x1xf32> to vector<8x8xf32>
    %64 = arith.subf %60, %63 : vector<8x8xf32>
    %65 = math.exp %64 : vector<8x8xf32>
    %cst_23 = arith.constant dense<0.000000e+00> : vector<8xf32>
    %66 = vector.multi_reduction <add>, %65, %cst_23 [1] : vector<8x8xf32> to vector<8xf32>
    %67 = vector.shape_cast %66 : vector<8xf32> to vector<8x1xf32>
    %68 = tpu.reciprocal %67 {approx = true} : vector<8x1xf32> -> vector<8x1xf32>
    %69 = vector.broadcast %68 : vector<8x1xf32> to vector<8x8xf32>
    %70 = arith.mulf %65, %69 : vector<8x8xf32>
    %71 = arith.truncf %70 : vector<8x8xf32> to vector<8x8xbf16>
    %cst_24 = arith.constant dense<0.000000e+00> : vector<8x8xf32>
    %72 = tpu.matmul %71, %59, %cst_24 {dimension_numbers = #tpu.dot_dimension_numbers<[1], [0], [0], [1], [0, 0, 1, 1], [], []>} : vector<8x8xbf16>, vector<8x8xbf16>, vector<8x8xf32> -> vector<8x8xf32>
    %73 = vector.extract_strided_slice %13 {offsets = [0, 24], sizes = [8, 8], strides = [1, 1]} : vector<8x32xf32> to vector<8x8xf32>
    %74 = arith.truncf %73 : vector<8x8xf32> to vector<8x8xbf16>
    %75 = vector.extract_strided_slice %14 {offsets = [0, 24], sizes = [8, 8], strides = [1, 1]} : vector<8x32xf32> to vector<8x8xf32>
    %76 = arith.truncf %75 : vector<8x8xf32> to vector<8x8xbf16>
    %77 = vector.extract_strided_slice %15 {offsets = [0, 24], sizes = [8, 8], strides = [1, 1]} : vector<8x32xf32> to vector<8x8xf32>
    %78 = arith.truncf %77 : vector<8x8xf32> to vector<8x8xbf16>
    %cst_25 = arith.constant dense<0.000000e+00> : vector<8x8xf32>
    %79 = tpu.matmul %74, %76, %cst_25 {dimension_numbers = #tpu.dot_dimension_numbers<[1], [1], [0], [0], [0, 0, 1, 0], [], []>} : vector<8x8xbf16>, vector<8x8xbf16>, vector<8x8xf32> -> vector<8x8xf32>
    %cst_26 = arith.constant dense<0xFF800000> : vector<8xf32>
    %80 = vector.multi_reduction <maximumf>, %79, %cst_26 [1] : vector<8x8xf32> to vector<8xf32>
    %81 = vector.shape_cast %80 : vector<8xf32> to vector<8x1xf32>
    %82 = vector.broadcast %81 : vector<8x1xf32> to vector<8x8xf32>
    %83 = arith.subf %79, %82 : vector<8x8xf32>
    %84 = math.exp %83 : vector<8x8xf32>
    %cst_27 = arith.constant dense<0.000000e+00> : vector<8xf32>
    %85 = vector.multi_reduction <add>, %84, %cst_27 [1] : vector<8x8xf32> to vector<8xf32>
    %86 = vector.shape_cast %85 : vector<8xf32> to vector<8x1xf32>
    %87 = tpu.reciprocal %86 {approx = true} : vector<8x1xf32> -> vector<8x1xf32>
    %88 = vector.broadcast %87 : vector<8x1xf32> to vector<8x8xf32>
    %89 = arith.mulf %84, %88 : vector<8x8xf32>
    %90 = arith.truncf %89 : vector<8x8xf32> to vector<8x8xbf16>
    %cst_28 = arith.constant dense<0.000000e+00> : vector<8x8xf32>
    %91 = tpu.matmul %90, %78, %cst_28 {dimension_numbers = #tpu.dot_dimension_numbers<[1], [0], [0], [1], [0, 0, 1, 1], [], []>} : vector<8x8xbf16>, vector<8x8xbf16>, vector<8x8xf32> -> vector<8x8xf32>
    %92 = tpu.concatenate %34, %53, %72, %91 in 1 : vector<8x8xf32>, vector<8x8xf32>, vector<8x8xf32>, vector<8x8xf32> -> vector<8x32xf32>
    %93 = arith.truncf %92 : vector<8x32xf32> to vector<8x32xbf16>
    %cst_29 = arith.constant dense<0.000000e+00> : vector<8x32xf32>
    %94 = tpu.matmul %93, %8, %cst_29 {dimension_numbers = #tpu.dot_dimension_numbers<[1], [0], [0], [1], [0, 0, 1, 1], [], []>} : vector<8x32xbf16>, vector<32x32xbf16>, vector<8x32xf32> -> vector<8x32xf32>
    %95 = vector.broadcast %10 : vector<1x32xf32> to vector<8x32xf32>
    %96 = arith.addf %94, %95 : vector<8x32xf32>
    %97 = arith.addf %96, %3 : vector<8x32xf32>
    %c0_30 = arith.constant 0 : index
    %c0_31 = arith.constant 0 : index
    %c0_32 = arith.constant 0 : index
    %98 = vector.load %arg7[%c0_30, %c0_31, %c0_32] : memref<1x1x32xf32, #tpu.memory_space<vmem>>, vector<1x1x32xf32>
    %99 = vector.shape_cast %98 : vector<1x1x32xf32> to vector<1x32xf32>
    %c0_33 = arith.constant 0 : index
    %c0_34 = arith.constant 0 : index
    %c0_35 = arith.constant 0 : index
    %100 = vector.load %arg8[%c0_33, %c0_34, %c0_35] : memref<1x1x32xf32, #tpu.memory_space<vmem>>, vector<1x1x32xf32>
    %101 = vector.shape_cast %100 : vector<1x1x32xf32> to vector<1x32xf32>
    %cst_36 = arith.constant dense<0.000000e+00> : vector<8xf32>
    %102 = vector.multi_reduction <add>, %97, %cst_36 [1] : vector<8x32xf32> to vector<8xf32>
    %103 = vector.shape_cast %102 : vector<8xf32> to vector<8x1xf32>
    %cst_37 = arith.constant 3.200000e+01 : f32
    %104 = vector.broadcast %cst_37 : f32 to vector<8x1xf32>
    %105 = arith.divf %103, %104 : vector<8x1xf32>
    %106 = vector.broadcast %105 : vector<8x1xf32> to vector<8x32xf32>
    %107 = arith.subf %97, %106 : vector<8x32xf32>
    %108 = arith.mulf %107, %107 : vector<8x32xf32>
    %cst_38 = arith.constant dense<0.000000e+00> : vector<8xf32>
    %109 = vector.multi_reduction <add>, %108, %cst_38 [1] : vector<8x32xf32> to vector<8xf32>
    %110 = vector.shape_cast %109 : vector<8xf32> to vector<8x1xf32>
    %cst_39 = arith.constant 3.200000e+01 : f32
    %111 = vector.broadcast %cst_39 : f32 to vector<8x1xf32>
    %112 = arith.divf %110, %111 : vector<8x1xf32>
    %113 = vector.broadcast %105 : vector<8x1xf32> to vector<8x32xf32>
    %114 = arith.subf %97, %113 : vector<8x32xf32>
    %cst_40 = arith.constant 9.99999974E-6 : f32
    %115 = vector.broadcast %cst_40 : f32 to vector<8x1xf32>
    %116 = arith.addf %112, %115 : vector<8x1xf32>
    %117 = math.rsqrt %116 : vector<8x1xf32>
    %118 = vector.broadcast %117 : vector<8x1xf32> to vector<8x32xf32>
    %119 = arith.mulf %114, %118 : vector<8x32xf32>
    %120 = vector.broadcast %99 : vector<1x32xf32> to vector<8x32xf32>
    %121 = arith.mulf %119, %120 : vector<8x32xf32>
    %122 = vector.broadcast %101 : vector<1x32xf32> to vector<8x32xf32>
    %123 = arith.addf %121, %122 : vector<8x32xf32>
    %c0_41 = arith.constant 0 : index
    %c0_42 = arith.constant 0 : index
    %c0_43 = arith.constant 0 : index
    %124 = vector.load %arg4[%c0_41, %c0_42, %c0_43] : memref<1x32x96xbf16, #tpu.memory_space<vmem>>, vector<1x32x96xbf16>
    %125 = vector.shape_cast %124 : vector<1x32x96xbf16> to vector<32x96xbf16>
    %c0_44 = arith.constant 0 : index
    %c0_45 = arith.constant 0 : index
    %c0_46 = arith.constant 0 : index
    %126 = vector.load %arg5[%c0_44, %c0_45, %c0_46] : memref<1x32x32xbf16, #tpu.memory_space<vmem>>, vector<1x32x32xbf16>
    %127 = vector.shape_cast %126 : vector<1x32x32xbf16> to vector<32x32xbf16>
    %c0_47 = arith.constant 0 : index
    %c0_48 = arith.constant 0 : index
    %c0_49 = arith.constant 0 : index
    %128 = vector.load %arg6[%c0_47, %c0_48, %c0_49] : memref<1x1x32xf32, #tpu.memory_space<vmem>>, vector<1x1x32xf32>
    %129 = vector.shape_cast %128 : vector<1x1x32xf32> to vector<1x32xf32>
    %130 = arith.truncf %4 : vector<8x32xf32> to vector<8x32xbf16>
    %131 = vector.extract_strided_slice %125 {offsets = [0, 0], sizes = [32, 64], strides = [1, 1]} : vector<32x96xbf16> to vector<32x64xbf16>
    %cst_50 = arith.constant dense<0.000000e+00> : vector<8x64xf32>
    %132 = tpu.matmul %130, %131, %cst_50 {dimension_numbers = #tpu.dot_dimension_numbers<[1], [0], [0], [1], [0, 0, 1, 1], [], []>} : vector<8x32xbf16>, vector<32x64xbf16>, vector<8x64xf32> -> vector<8x64xf32>
    %133 = vector.extract_strided_slice %132 {offsets = [0, 0], sizes = [8, 32], strides = [1, 1]} : vector<8x64xf32> to vector<8x32xf32>
    %134 = vector.extract_strided_slice %132 {offsets = [0, 32], sizes = [8, 32], strides = [1, 1]} : vector<8x64xf32> to vector<8x32xf32>
    %135 = arith.truncf %123 : vector<8x32xf32> to vector<8x32xbf16>
    %136 = vector.extract_strided_slice %125 {offsets = [0, 64], sizes = [32, 32], strides = [1, 1]} : vector<32x96xbf16> to vector<32x32xbf16>
    %cst_51 = arith.constant dense<0.000000e+00> : vector<8x32xf32>
    %137 = tpu.matmul %135, %136, %cst_51 {dimension_numbers = #tpu.dot_dimension_numbers<[1], [0], [0], [1], [0, 0, 1, 1], [], []>} : vector<8x32xbf16>, vector<32x32xbf16>, vector<8x32xf32> -> vector<8x32xf32>
    %138 = vector.extract_strided_slice %133 {offsets = [0, 0], sizes = [8, 8], strides = [1, 1]} : vector<8x32xf32> to vector<8x8xf32>
    %139 = arith.truncf %138 : vector<8x8xf32> to vector<8x8xbf16>
    %140 = vector.extract_strided_slice %134 {offsets = [0, 0], sizes = [8, 8], strides = [1, 1]} : vector<8x32xf32> to vector<8x8xf32>
    %141 = arith.truncf %140 : vector<8x8xf32> to vector<8x8xbf16>
    %142 = vector.extract_strided_slice %137 {offsets = [0, 0], sizes = [8, 8], strides = [1, 1]} : vector<8x32xf32> to vector<8x8xf32>
    %143 = arith.truncf %142 : vector<8x8xf32> to vector<8x8xbf16>
    %cst_52 = arith.constant dense<0.000000e+00> : vector<8x8xf32>
    %144 = tpu.matmul %139, %141, %cst_52 {dimension_numbers = #tpu.dot_dimension_numbers<[1], [1], [0], [0], [0, 0, 1, 0], [], []>} : vector<8x8xbf16>, vector<8x8xbf16>, vector<8x8xf32> -> vector<8x8xf32>
    %cst_53 = arith.constant dense<0xFF800000> : vector<8xf32>
    %145 = vector.multi_reduction <maximumf>, %144, %cst_53 [1] : vector<8x8xf32> to vector<8xf32>
    %146 = vector.shape_cast %145 : vector<8xf32> to vector<8x1xf32>
    %147 = vector.broadcast %146 : vector<8x1xf32> to vector<8x8xf32>
    %148 = arith.subf %144, %147 : vector<8x8xf32>
    %149 = math.exp %148 : vector<8x8xf32>
    %cst_54 = arith.constant dense<0.000000e+00> : vector<8xf32>
    %150 = vector.multi_reduction <add>, %149, %cst_54 [1] : vector<8x8xf32> to vector<8xf32>
    %151 = vector.shape_cast %150 : vector<8xf32> to vector<8x1xf32>
    %152 = tpu.reciprocal %151 {approx = true} : vector<8x1xf32> -> vector<8x1xf32>
    %153 = vector.broadcast %152 : vector<8x1xf32> to vector<8x8xf32>
    %154 = arith.mulf %149, %153 : vector<8x8xf32>
    %155 = arith.truncf %154 : vector<8x8xf32> to vector<8x8xbf16>
    %cst_55 = arith.constant dense<0.000000e+00> : vector<8x8xf32>
    %156 = tpu.matmul %155, %143, %cst_55 {dimension_numbers = #tpu.dot_dimension_numbers<[1], [0], [0], [1], [0, 0, 1, 1], [], []>} : vector<8x8xbf16>, vector<8x8xbf16>, vector<8x8xf32> -> vector<8x8xf32>
    %157 = vector.extract_strided_slice %133 {offsets = [0, 8], sizes = [8, 8], strides = [1, 1]} : vector<8x32xf32> to vector<8x8xf32>
    %158 = arith.truncf %157 : vector<8x8xf32> to vector<8x8xbf16>
    %159 = vector.extract_strided_slice %134 {offsets = [0, 8], sizes = [8, 8], strides = [1, 1]} : vector<8x32xf32> to vector<8x8xf32>
    %160 = arith.truncf %159 : vector<8x8xf32> to vector<8x8xbf16>
    %161 = vector.extract_strided_slice %137 {offsets = [0, 8], sizes = [8, 8], strides = [1, 1]} : vector<8x32xf32> to vector<8x8xf32>
    %162 = arith.truncf %161 : vector<8x8xf32> to vector<8x8xbf16>
    %cst_56 = arith.constant dense<0.000000e+00> : vector<8x8xf32>
    %163 = tpu.matmul %158, %160, %cst_56 {dimension_numbers = #tpu.dot_dimension_numbers<[1], [1], [0], [0], [0, 0, 1, 0], [], []>} : vector<8x8xbf16>, vector<8x8xbf16>, vector<8x8xf32> -> vector<8x8xf32>
    %cst_57 = arith.constant dense<0xFF800000> : vector<8xf32>
    %164 = vector.multi_reduction <maximumf>, %163, %cst_57 [1] : vector<8x8xf32> to vector<8xf32>
    %165 = vector.shape_cast %164 : vector<8xf32> to vector<8x1xf32>
    %166 = vector.broadcast %165 : vector<8x1xf32> to vector<8x8xf32>
    %167 = arith.subf %163, %166 : vector<8x8xf32>
    %168 = math.exp %167 : vector<8x8xf32>
    %cst_58 = arith.constant dense<0.000000e+00> : vector<8xf32>
    %169 = vector.multi_reduction <add>, %168, %cst_58 [1] : vector<8x8xf32> to vector<8xf32>
    %170 = vector.shape_cast %169 : vector<8xf32> to vector<8x1xf32>
    %171 = tpu.reciprocal %170 {approx = true} : vector<8x1xf32> -> vector<8x1xf32>
    %172 = vector.broadcast %171 : vector<8x1xf32> to vector<8x8xf32>
    %173 = arith.mulf %168, %172 : vector<8x8xf32>
    %174 = arith.truncf %173 : vector<8x8xf32> to vector<8x8xbf16>
    %cst_59 = arith.constant dense<0.000000e+00> : vector<8x8xf32>
    %175 = tpu.matmul %174, %162, %cst_59 {dimension_numbers = #tpu.dot_dimension_numbers<[1], [0], [0], [1], [0, 0, 1, 1], [], []>} : vector<8x8xbf16>, vector<8x8xbf16>, vector<8x8xf32> -> vector<8x8xf32>
    %176 = vector.extract_strided_slice %133 {offsets = [0, 16], sizes = [8, 8], strides = [1, 1]} : vector<8x32xf32> to vector<8x8xf32>
    %177 = arith.truncf %176 : vector<8x8xf32> to vector<8x8xbf16>
    %178 = vector.extract_strided_slice %134 {offsets = [0, 16], sizes = [8, 8], strides = [1, 1]} : vector<8x32xf32> to vector<8x8xf32>
    %179 = arith.truncf %178 : vector<8x8xf32> to vector<8x8xbf16>
    %180 = vector.extract_strided_slice %137 {offsets = [0, 16], sizes = [8, 8], strides = [1, 1]} : vector<8x32xf32> to vector<8x8xf32>
    %181 = arith.truncf %180 : vector<8x8xf32> to vector<8x8xbf16>
    %cst_60 = arith.constant dense<0.000000e+00> : vector<8x8xf32>
    %182 = tpu.matmul %177, %179, %cst_60 {dimension_numbers = #tpu.dot_dimension_numbers<[1], [1], [0], [0], [0, 0, 1, 0], [], []>} : vector<8x8xbf16>, vector<8x8xbf16>, vector<8x8xf32> -> vector<8x8xf32>
    %cst_61 = arith.constant dense<0xFF800000> : vector<8xf32>
    %183 = vector.multi_reduction <maximumf>, %182, %cst_61 [1] : vector<8x8xf32> to vector<8xf32>
    %184 = vector.shape_cast %183 : vector<8xf32> to vector<8x1xf32>
    %185 = vector.broadcast %184 : vector<8x1xf32> to vector<8x8xf32>
    %186 = arith.subf %182, %185 : vector<8x8xf32>
    %187 = math.exp %186 : vector<8x8xf32>
    %cst_62 = arith.constant dense<0.000000e+00> : vector<8xf32>
    %188 = vector.multi_reduction <add>, %187, %cst_62 [1] : vector<8x8xf32> to vector<8xf32>
    %189 = vector.shape_cast %188 : vector<8xf32> to vector<8x1xf32>
    %190 = tpu.reciprocal %189 {approx = true} : vector<8x1xf32> -> vector<8x1xf32>
    %191 = vector.broadcast %190 : vector<8x1xf32> to vector<8x8xf32>
    %192 = arith.mulf %187, %191 : vector<8x8xf32>
    %193 = arith.truncf %192 : vector<8x8xf32> to vector<8x8xbf16>
    %cst_63 = arith.constant dense<0.000000e+00> : vector<8x8xf32>
    %194 = tpu.matmul %193, %181, %cst_63 {dimension_numbers = #tpu.dot_dimension_numbers<[1], [0], [0], [1], [0, 0, 1, 1], [], []>} : vector<8x8xbf16>, vector<8x8xbf16>, vector<8x8xf32> -> vector<8x8xf32>
    %195 = vector.extract_strided_slice %133 {offsets = [0, 24], sizes = [8, 8], strides = [1, 1]} : vector<8x32xf32> to vector<8x8xf32>
    %196 = arith.truncf %195 : vector<8x8xf32> to vector<8x8xbf16>
    %197 = vector.extract_strided_slice %134 {offsets = [0, 24], sizes = [8, 8], strides = [1, 1]} : vector<8x32xf32> to vector<8x8xf32>
    %198 = arith.truncf %197 : vector<8x8xf32> to vector<8x8xbf16>
    %199 = vector.extract_strided_slice %137 {offsets = [0, 24], sizes = [8, 8], strides = [1, 1]} : vector<8x32xf32> to vector<8x8xf32>
    %200 = arith.truncf %199 : vector<8x8xf32> to vector<8x8xbf16>
    %cst_64 = arith.constant dense<0.000000e+00> : vector<8x8xf32>
    %201 = tpu.matmul %196, %198, %cst_64 {dimension_numbers = #tpu.dot_dimension_numbers<[1], [1], [0], [0], [0, 0, 1, 0], [], []>} : vector<8x8xbf16>, vector<8x8xbf16>, vector<8x8xf32> -> vector<8x8xf32>
    %cst_65 = arith.constant dense<0xFF800000> : vector<8xf32>
    %202 = vector.multi_reduction <maximumf>, %201, %cst_65 [1] : vector<8x8xf32> to vector<8xf32>
    %203 = vector.shape_cast %202 : vector<8xf32> to vector<8x1xf32>
    %204 = vector.broadcast %203 : vector<8x1xf32> to vector<8x8xf32>
    %205 = arith.subf %201, %204 : vector<8x8xf32>
    %206 = math.exp %205 : vector<8x8xf32>
    %cst_66 = arith.constant dense<0.000000e+00> : vector<8xf32>
    %207 = vector.multi_reduction <add>, %206, %cst_66 [1] : vector<8x8xf32> to vector<8xf32>
    %208 = vector.shape_cast %207 : vector<8xf32> to vector<8x1xf32>
    %209 = tpu.reciprocal %208 {approx = true} : vector<8x1xf32> -> vector<8x1xf32>
    %210 = vector.broadcast %209 : vector<8x1xf32> to vector<8x8xf32>
    %211 = arith.mulf %206, %210 : vector<8x8xf32>
    %212 = arith.truncf %211 : vector<8x8xf32> to vector<8x8xbf16>
    %cst_67 = arith.constant dense<0.000000e+00> : vector<8x8xf32>
    %213 = tpu.matmul %212, %200, %cst_67 {dimension_numbers = #tpu.dot_dimension_numbers<[1], [0], [0], [1], [0, 0, 1, 1], [], []>} : vector<8x8xbf16>, vector<8x8xbf16>, vector<8x8xf32> -> vector<8x8xf32>
    %214 = tpu.concatenate %156, %175, %194, %213 in 1 : vector<8x8xf32>, vector<8x8xf32>, vector<8x8xf32>, vector<8x8xf32> -> vector<8x32xf32>
    %215 = arith.truncf %214 : vector<8x32xf32> to vector<8x32xbf16>
    %cst_68 = arith.constant dense<0.000000e+00> : vector<8x32xf32>
    %216 = tpu.matmul %215, %127, %cst_68 {dimension_numbers = #tpu.dot_dimension_numbers<[1], [0], [0], [1], [0, 0, 1, 1], [], []>} : vector<8x32xbf16>, vector<32x32xbf16>, vector<8x32xf32> -> vector<8x32xf32>
    %217 = vector.broadcast %129 : vector<1x32xf32> to vector<8x32xf32>
    %218 = arith.addf %216, %217 : vector<8x32xf32>
    %219 = arith.addf %218, %123 : vector<8x32xf32>
    %c0_69 = arith.constant 0 : index
    %c0_70 = arith.constant 0 : index
    %c0_71 = arith.constant 0 : index
    %220 = vector.load %arg9[%c0_69, %c0_70, %c0_71] : memref<1x1x32xf32, #tpu.memory_space<vmem>>, vector<1x1x32xf32>
    %221 = vector.shape_cast %220 : vector<1x1x32xf32> to vector<1x32xf32>
    %c0_72 = arith.constant 0 : index
    %c0_73 = arith.constant 0 : index
    %c0_74 = arith.constant 0 : index
    %222 = vector.load %arg10[%c0_72, %c0_73, %c0_74] : memref<1x1x32xf32, #tpu.memory_space<vmem>>, vector<1x1x32xf32>
    %223 = vector.shape_cast %222 : vector<1x1x32xf32> to vector<1x32xf32>
    %cst_75 = arith.constant dense<0.000000e+00> : vector<8xf32>
    %224 = vector.multi_reduction <add>, %219, %cst_75 [1] : vector<8x32xf32> to vector<8xf32>
    %225 = vector.shape_cast %224 : vector<8xf32> to vector<8x1xf32>
    %cst_76 = arith.constant 3.200000e+01 : f32
    %226 = vector.broadcast %cst_76 : f32 to vector<8x1xf32>
    %227 = arith.divf %225, %226 : vector<8x1xf32>
    %228 = vector.broadcast %227 : vector<8x1xf32> to vector<8x32xf32>
    %229 = arith.subf %219, %228 : vector<8x32xf32>
    %230 = arith.mulf %229, %229 : vector<8x32xf32>
    %cst_77 = arith.constant dense<0.000000e+00> : vector<8xf32>
    %231 = vector.multi_reduction <add>, %230, %cst_77 [1] : vector<8x32xf32> to vector<8xf32>
    %232 = vector.shape_cast %231 : vector<8xf32> to vector<8x1xf32>
    %cst_78 = arith.constant 3.200000e+01 : f32
    %233 = vector.broadcast %cst_78 : f32 to vector<8x1xf32>
    %234 = arith.divf %232, %233 : vector<8x1xf32>
    %235 = vector.broadcast %227 : vector<8x1xf32> to vector<8x32xf32>
    %236 = arith.subf %219, %235 : vector<8x32xf32>
    %cst_79 = arith.constant 9.99999974E-6 : f32
    %237 = vector.broadcast %cst_79 : f32 to vector<8x1xf32>
    %238 = arith.addf %234, %237 : vector<8x1xf32>
    %239 = math.rsqrt %238 : vector<8x1xf32>
    %240 = vector.broadcast %239 : vector<8x1xf32> to vector<8x32xf32>
    %241 = arith.mulf %236, %240 : vector<8x32xf32>
    %242 = vector.broadcast %221 : vector<1x32xf32> to vector<8x32xf32>
    %243 = arith.mulf %241, %242 : vector<8x32xf32>
    %244 = vector.broadcast %223 : vector<1x32xf32> to vector<8x32xf32>
    %245 = arith.addf %243, %244 : vector<8x32xf32>
    %246 = arith.truncf %245 : vector<8x32xf32> to vector<8x32xbf16>
    %c0_80 = arith.constant 0 : index
    %c0_81 = arith.constant 0 : index
    %c0_82 = arith.constant 0 : index
    %247 = vector.load %arg11[%c0_80, %c0_81, %c0_82] : memref<1x32x64xbf16, #tpu.memory_space<vmem>>, vector<1x32x64xbf16>
    %248 = vector.shape_cast %247 : vector<1x32x64xbf16> to vector<32x64xbf16>
    %cst_83 = arith.constant dense<0.000000e+00> : vector<8x64xf32>
    %249 = tpu.matmul %246, %248, %cst_83 {dimension_numbers = #tpu.dot_dimension_numbers<[1], [0], [0], [1], [0, 0, 1, 1], [], []>} : vector<8x32xbf16>, vector<32x64xbf16>, vector<8x64xf32> -> vector<8x64xf32>
    %c0_84 = arith.constant 0 : index
    %c0_85 = arith.constant 0 : index
    %c0_86 = arith.constant 0 : index
    %250 = vector.load %arg12[%c0_84, %c0_85, %c0_86] : memref<1x1x64xf32, #tpu.memory_space<vmem>>, vector<1x1x64xf32>
    %251 = vector.shape_cast %250 : vector<1x1x64xf32> to vector<1x64xf32>
    %252 = vector.broadcast %251 : vector<1x64xf32> to vector<8x64xf32>
    %253 = arith.addf %249, %252 : vector<8x64xf32>
    %cst_87 = arith.constant 0.000000e+00 : f32
    %254 = vector.broadcast %cst_87 : f32 to vector<8x64xf32>
    %255 = arith.maximumf %253, %254 : vector<8x64xf32>
    %256 = arith.truncf %255 : vector<8x64xf32> to vector<8x64xbf16>
    %c0_88 = arith.constant 0 : index
    %c0_89 = arith.constant 0 : index
    %c0_90 = arith.constant 0 : index
    %257 = vector.load %arg13[%c0_88, %c0_89, %c0_90] : memref<1x64x32xbf16, #tpu.memory_space<vmem>>, vector<1x64x32xbf16>
    %258 = vector.shape_cast %257 : vector<1x64x32xbf16> to vector<64x32xbf16>
    %cst_91 = arith.constant dense<0.000000e+00> : vector<8x32xf32>
    %259 = tpu.matmul %256, %258, %cst_91 {dimension_numbers = #tpu.dot_dimension_numbers<[1], [0], [0], [1], [0, 0, 1, 1], [], []>} : vector<8x64xbf16>, vector<64x32xbf16>, vector<8x32xf32> -> vector<8x32xf32>
    %c0_92 = arith.constant 0 : index
    %c0_93 = arith.constant 0 : index
    %c0_94 = arith.constant 0 : index
    %260 = vector.load %arg14[%c0_92, %c0_93, %c0_94] : memref<1x1x32xf32, #tpu.memory_space<vmem>>, vector<1x1x32xf32>
    %261 = vector.shape_cast %260 : vector<1x1x32xf32> to vector<1x32xf32>
    %262 = vector.broadcast %261 : vector<1x32xf32> to vector<8x32xf32>
    %263 = arith.addf %259, %262 : vector<8x32xf32>
    %264 = arith.addf %263, %245 : vector<8x32xf32>
    %c0_95 = arith.constant 0 : index
    %c0_96 = arith.constant 0 : index
    %c0_97 = arith.constant 0 : index
    %265 = vector.load %arg15[%c0_95, %c0_96, %c0_97] : memref<1x1x32xf32, #tpu.memory_space<vmem>>, vector<1x1x32xf32>
    %266 = vector.shape_cast %265 : vector<1x1x32xf32> to vector<1x32xf32>
    %c0_98 = arith.constant 0 : index
    %c0_99 = arith.constant 0 : index
    %c0_100 = arith.constant 0 : index
    %267 = vector.load %arg16[%c0_98, %c0_99, %c0_100] : memref<1x1x32xf32, #tpu.memory_space<vmem>>, vector<1x1x32xf32>
    %268 = vector.shape_cast %267 : vector<1x1x32xf32> to vector<1x32xf32>
    %cst_101 = arith.constant dense<0.000000e+00> : vector<8xf32>
    %269 = vector.multi_reduction <add>, %264, %cst_101 [1] : vector<8x32xf32> to vector<8xf32>
    %270 = vector.shape_cast %269 : vector<8xf32> to vector<8x1xf32>
    %cst_102 = arith.constant 3.200000e+01 : f32
    %271 = vector.broadcast %cst_102 : f32 to vector<8x1xf32>
    %272 = arith.divf %270, %271 : vector<8x1xf32>
    %273 = vector.broadcast %272 : vector<8x1xf32> to vector<8x32xf32>
    %274 = arith.subf %264, %273 : vector<8x32xf32>
    %275 = arith.mulf %274, %274 : vector<8x32xf32>
    %cst_103 = arith.constant dense<0.000000e+00> : vector<8xf32>
    %276 = vector.multi_reduction <add>, %275, %cst_103 [1] : vector<8x32xf32> to vector<8xf32>
    %277 = vector.shape_cast %276 : vector<8xf32> to vector<8x1xf32>
    %cst_104 = arith.constant 3.200000e+01 : f32
    %278 = vector.broadcast %cst_104 : f32 to vector<8x1xf32>
    %279 = arith.divf %277, %278 : vector<8x1xf32>
    %280 = vector.broadcast %272 : vector<8x1xf32> to vector<8x32xf32>
    %281 = arith.subf %264, %280 : vector<8x32xf32>
    %cst_105 = arith.constant 9.99999974E-6 : f32
    %282 = vector.broadcast %cst_105 : f32 to vector<8x1xf32>
    %283 = arith.addf %279, %282 : vector<8x1xf32>
    %284 = math.rsqrt %283 : vector<8x1xf32>
    %285 = vector.broadcast %284 : vector<8x1xf32> to vector<8x32xf32>
    %286 = arith.mulf %281, %285 : vector<8x32xf32>
    %287 = vector.broadcast %266 : vector<1x32xf32> to vector<8x32xf32>
    %288 = arith.mulf %286, %287 : vector<8x32xf32>
    %289 = vector.broadcast %268 : vector<1x32xf32> to vector<8x32xf32>
    %290 = arith.addf %288, %289 : vector<8x32xf32>
    %c0_106 = arith.constant 0 : index
    %c0_107 = arith.constant 0 : index
    %291 = vector.load %arg17[%c0_106, %c0_107] : memref<8x32xf32, #tpu.memory_space<vmem>>, vector<8x32xf32>
    tpu.vector_store %arg17[%c0_106, %c0_107], %290 {strides = array<i32>} : memref<8x32xf32, #tpu.memory_space<vmem>>, vector<8x32xf32>,
    return
  }
  func.func @transform_0(%arg0: i32, %arg1: i32) -> (i32, i32) {
    %c0_i32 = arith.constant 0 : i32
    %c0_i32_0 = arith.constant 0 : i32
    return %arg0, %c0_i32 : i32, i32
  }
  func.func @transform_1(%arg0: i32, %arg1: i32) -> (i32, i32) {
    %c0_i32 = arith.constant 0 : i32
    %c0_i32_0 = arith.constant 0 : i32
    return %arg0, %c0_i32 : i32, i32
  }
  func.func @transform_2(%arg0: i32, %arg1: i32) -> (i32, i32, i32) {
    %c0_i32 = arith.constant 0 : i32
    %c0_i32_0 = arith.constant 0 : i32
    %c0_i32_1 = arith.constant 0 : i32
    return %arg1, %c0_i32, %c0_i32_0 : i32, i32, i32
  }
  func.func @transform_3(%arg0: i32, %arg1: i32) -> (i32, i32, i32) {
    %c0_i32 = arith.constant 0 : i32
    %c0_i32_0 = arith.constant 0 : i32
    %c0_i32_1 = arith.constant 0 : i32
    return %arg1, %c0_i32, %c0_i32_0 : i32, i32, i32
  }
  func.func @transform_4(%arg0: i32, %arg1: i32) -> (i32, i32, i32) {
    %c0_i32 = arith.constant 0 : i32
    %c0_i32_0 = arith.constant 0 : i32
    %c0_i32_1 = arith.constant 0 : i32
    return %arg1, %c0_i32, %c0_i32_0 : i32, i32, i32
  }
  func.func @transform_5(%arg0: i32, %arg1: i32) -> (i32, i32, i32) {
    %c0_i32 = arith.constant 0 : i32
    %c0_i32_0 = arith.constant 0 : i32
    %c0_i32_1 = arith.constant 0 : i32
    return %arg1, %c0_i32, %c0_i32_0 : i32, i32, i32
  }
  func.func @transform_6(%arg0: i32, %arg1: i32) -> (i32, i32, i32) {
    %c0_i32 = arith.constant 0 : i32
    %c0_i32_0 = arith.constant 0 : i32
    %c0_i32_1 = arith.constant 0 : i32
    return %arg1, %c0_i32, %c0_i32_0 : i32, i32, i32
  }
  func.func @transform_7(%arg0: i32, %arg1: i32) -> (i32, i32, i32) {
    %c0_i32 = arith.constant 0 : i32
    %c0_i32_0 = arith.constant 0 : i32
    %c0_i32_1 = arith.constant 0 : i32
    return %arg1, %c0_i32, %c0_i32_0 : i32, i32, i32
  }
  func.func @transform_8(%arg0: i32, %arg1: i32) -> (i32, i32, i32) {
    %c0_i32 = arith.constant 0 : i32
    %c0_i32_0 = arith.constant 0 : i32
    %c0_i32_1 = arith.constant 0 : i32
    return %arg1, %c0_i32, %c0_i32_0 : i32, i32, i32
  }
  func.func @transform_9(%arg0: i32, %arg1: i32) -> (i32, i32, i32) {
    %c0_i32 = arith.constant 0 : i32
    %c0_i32_0 = arith.constant 0 : i32
    %c0_i32_1 = arith.constant 0 : i32
    return %arg1, %c0_i32, %c0_i32_0 : i32, i32, i32
  }
  func.func @transform_10(%arg0: i32, %arg1: i32) -> (i32, i32, i32) {
    %c0_i32 = arith.constant 0 : i32
    %c0_i32_0 = arith.constant 0 : i32
    %c0_i32_1 = arith.constant 0 : i32
    return %arg1, %c0_i32, %c0_i32_0 : i32, i32, i32
  }
  func.func @transform_11(%arg0: i32, %arg1: i32) -> (i32, i32, i32) {
    %c0_i32 = arith.constant 0 : i32
    %c0_i32_0 = arith.constant 0 : i32
    %c0_i32_1 = arith.constant 0 : i32
    return %arg1, %c0_i32, %c0_i32_0 : i32, i32, i32
  }
  func.func @transform_12(%arg0: i32, %arg1: i32) -> (i32, i32, i32) {
    %c0_i32 = arith.constant 0 : i32
    %c0_i32_0 = arith.constant 0 : i32
    %c0_i32_1 = arith.constant 0 : i32
    return %arg1, %c0_i32, %c0_i32_0 : i32, i32, i32
  }
  func.func @transform_13(%arg0: i32, %arg1: i32) -> (i32, i32, i32) {
    %c0_i32 = arith.constant 0 : i32
    %c0_i32_0 = arith.constant 0 : i32
    %c0_i32_1 = arith.constant 0 : i32
    return %arg1, %c0_i32, %c0_i32_0 : i32, i32, i32
  }
  func.func @transform_14(%arg0: i32, %arg1: i32) -> (i32, i32, i32) {
    %c0_i32 = arith.constant 0 : i32
    %c0_i32_0 = arith.constant 0 : i32
    %c0_i32_1 = arith.constant 0 : i32
    return %arg1, %c0_i32, %c0_i32_0 : i32, i32, i32
  }
  func.func @transform_15(%arg0: i32, %arg1: i32) -> (i32, i32) {
    %c0_i32 = arith.constant 0 : i32
    %c0_i32_0 = arith.constant 0 : i32
    return %arg0, %c0_i32 : i32, i32
  }
}

module attributes {stable_mosaic.version = 11 : i64} {
  func.func @_encoder_stack_kernel(%arg0: i32, %arg1: i32, %arg2: memref<8x32xf32, #tpu.memory_space<vmem>>, %arg3: memref<1x32x96xbf16, #tpu.memory_space<vmem>>, %arg4: memref<1x32x32xbf16, #tpu.memory_space<vmem>>, %arg5: memref<1x1x32xf32, #tpu.memory_space<vmem>>, %arg6: memref<1x1x32xf32, #tpu.memory_space<vmem>>, %arg7: memref<1x1x32xf32, #tpu.memory_space<vmem>>, %arg8: memref<1x32x64xbf16, #tpu.memory_space<vmem>>, %arg9: memref<1x1x64xf32, #tpu.memory_space<vmem>>, %arg10: memref<1x64x32xbf16, #tpu.memory_space<vmem>>, %arg11: memref<1x1x32xf32, #tpu.memory_space<vmem>>, %arg12: memref<1x1x32xf32, #tpu.memory_space<vmem>>, %arg13: memref<1x1x32xf32, #tpu.memory_space<vmem>>, %arg14: memref<8x32xf32, #tpu.memory_space<vmem>>) attributes {dimension_semantics = [#tpu.dimension_semantics<parallel>, #tpu.dimension_semantics<arbitrary>], iteration_bounds = array<i64: 2, 2>, scalar_prefetch = 0 : i64, scratch_operands = 0 : i64, tpu.core_type = #tpu.core_type<tc>, window_params = [{transform_indices = @transform_0, window_bounds = array<i64: 8, 32>}, {transform_indices = @transform_1, window_bounds = array<i64: 1, 32, 96>}, {transform_indices = @transform_2, window_bounds = array<i64: 1, 32, 32>}, {transform_indices = @transform_3, window_bounds = array<i64: 1, 1, 32>}, {transform_indices = @transform_4, window_bounds = array<i64: 1, 1, 32>}, {transform_indices = @transform_5, window_bounds = array<i64: 1, 1, 32>}, {transform_indices = @transform_6, window_bounds = array<i64: 1, 32, 64>}, {transform_indices = @transform_7, window_bounds = array<i64: 1, 1, 64>}, {transform_indices = @transform_8, window_bounds = array<i64: 1, 64, 32>}, {transform_indices = @transform_9, window_bounds = array<i64: 1, 1, 32>}, {transform_indices = @transform_10, window_bounds = array<i64: 1, 1, 32>}, {transform_indices = @transform_11, window_bounds = array<i64: 1, 1, 32>}, {transform_indices = @transform_12, window_bounds = array<i64: 8, 32>}]} {
    %c0_i32 = arith.constant 0 : i32
    %0 = arith.cmpi eq, %arg1, %c0_i32 : i32
    %1 = arith.extui %0 : i1 to i32
    %c0_i32_0 = arith.constant 0 : i32
    %2 = arith.cmpi ne, %1, %c0_i32_0 : i32
    scf.if %2 {
      %c0_67 = arith.constant 0 : index
      %c0_68 = arith.constant 0 : index
      %169 = vector.load %arg2[%c0_67, %c0_68] : memref<8x32xf32, #tpu.memory_space<vmem>>, vector<8x32xf32>
      %c0_69 = arith.constant 0 : index
      %c0_70 = arith.constant 0 : index
      %170 = vector.load %arg14[%c0_69, %c0_70] : memref<8x32xf32, #tpu.memory_space<vmem>>, vector<8x32xf32>
      tpu.vector_store %arg14[%c0_69, %c0_70], %169 {strides = array<i32>} : memref<8x32xf32, #tpu.memory_space<vmem>>, vector<8x32xf32>,
    } else {
    }
    %c0 = arith.constant 0 : index
    %c0_1 = arith.constant 0 : index
    %3 = vector.load %arg14[%c0, %c0_1] : memref<8x32xf32, #tpu.memory_space<vmem>>, vector<8x32xf32>
    %c0_2 = arith.constant 0 : index
    %c0_3 = arith.constant 0 : index
    %c0_4 = arith.constant 0 : index
    %4 = vector.load %arg3[%c0_2, %c0_3, %c0_4] : memref<1x32x96xbf16, #tpu.memory_space<vmem>>, vector<1x32x96xbf16>
    %5 = vector.shape_cast %4 : vector<1x32x96xbf16> to vector<32x96xbf16>
    %c0_5 = arith.constant 0 : index
    %c0_6 = arith.constant 0 : index
    %c0_7 = arith.constant 0 : index
    %6 = vector.load %arg4[%c0_5, %c0_6, %c0_7] : memref<1x32x32xbf16, #tpu.memory_space<vmem>>, vector<1x32x32xbf16>
    %7 = vector.shape_cast %6 : vector<1x32x32xbf16> to vector<32x32xbf16>
    %c0_8 = arith.constant 0 : index
    %c0_9 = arith.constant 0 : index
    %c0_10 = arith.constant 0 : index
    %8 = vector.load %arg5[%c0_8, %c0_9, %c0_10] : memref<1x1x32xf32, #tpu.memory_space<vmem>>, vector<1x1x32xf32>
    %9 = vector.shape_cast %8 : vector<1x1x32xf32> to vector<1x32xf32>
    %10 = arith.truncf %3 : vector<8x32xf32> to vector<8x32xbf16>
    %cst = arith.constant dense<0.000000e+00> : vector<8x96xf32>
    %11 = tpu.matmul %10, %5, %cst {dimension_numbers = #tpu.dot_dimension_numbers<[1], [0], [0], [1], [0, 0, 1, 1], [], []>} : vector<8x32xbf16>, vector<32x96xbf16>, vector<8x96xf32> -> vector<8x96xf32>
    %12 = vector.extract_strided_slice %11 {offsets = [0, 0], sizes = [8, 32], strides = [1, 1]} : vector<8x96xf32> to vector<8x32xf32>
    %13 = vector.extract_strided_slice %11 {offsets = [0, 32], sizes = [8, 32], strides = [1, 1]} : vector<8x96xf32> to vector<8x32xf32>
    %14 = vector.extract_strided_slice %11 {offsets = [0, 64], sizes = [8, 32], strides = [1, 1]} : vector<8x96xf32> to vector<8x32xf32>
    %15 = vector.extract_strided_slice %12 {offsets = [0, 0], sizes = [8, 8], strides = [1, 1]} : vector<8x32xf32> to vector<8x8xf32>
    %16 = arith.truncf %15 : vector<8x8xf32> to vector<8x8xbf16>
    %17 = vector.extract_strided_slice %13 {offsets = [0, 0], sizes = [8, 8], strides = [1, 1]} : vector<8x32xf32> to vector<8x8xf32>
    %18 = arith.truncf %17 : vector<8x8xf32> to vector<8x8xbf16>
    %19 = vector.extract_strided_slice %14 {offsets = [0, 0], sizes = [8, 8], strides = [1, 1]} : vector<8x32xf32> to vector<8x8xf32>
    %20 = arith.truncf %19 : vector<8x8xf32> to vector<8x8xbf16>
    %cst_11 = arith.constant dense<0.000000e+00> : vector<8x8xf32>
    %21 = tpu.matmul %16, %18, %cst_11 {dimension_numbers = #tpu.dot_dimension_numbers<[1], [1], [0], [0], [0, 0, 1, 0], [], []>} : vector<8x8xbf16>, vector<8x8xbf16>, vector<8x8xf32> -> vector<8x8xf32>
    %cst_12 = arith.constant dense<0xFF800000> : vector<8xf32>
    %22 = vector.multi_reduction <maximumf>, %21, %cst_12 [1] : vector<8x8xf32> to vector<8xf32>
    %23 = vector.shape_cast %22 : vector<8xf32> to vector<8x1xf32>
    %24 = vector.broadcast %23 : vector<8x1xf32> to vector<8x8xf32>
    %25 = arith.subf %21, %24 : vector<8x8xf32>
    %26 = math.exp %25 : vector<8x8xf32>
    %cst_13 = arith.constant dense<0.000000e+00> : vector<8xf32>
    %27 = vector.multi_reduction <add>, %26, %cst_13 [1] : vector<8x8xf32> to vector<8xf32>
    %28 = vector.shape_cast %27 : vector<8xf32> to vector<8x1xf32>
    %29 = tpu.reciprocal %28 {approx = true} : vector<8x1xf32> -> vector<8x1xf32>
    %30 = vector.broadcast %29 : vector<8x1xf32> to vector<8x8xf32>
    %31 = arith.mulf %26, %30 : vector<8x8xf32>
    %32 = arith.truncf %31 : vector<8x8xf32> to vector<8x8xbf16>
    %cst_14 = arith.constant dense<0.000000e+00> : vector<8x8xf32>
    %33 = tpu.matmul %32, %20, %cst_14 {dimension_numbers = #tpu.dot_dimension_numbers<[1], [0], [0], [1], [0, 0, 1, 1], [], []>} : vector<8x8xbf16>, vector<8x8xbf16>, vector<8x8xf32> -> vector<8x8xf32>
    %34 = vector.extract_strided_slice %12 {offsets = [0, 8], sizes = [8, 8], strides = [1, 1]} : vector<8x32xf32> to vector<8x8xf32>
    %35 = arith.truncf %34 : vector<8x8xf32> to vector<8x8xbf16>
    %36 = vector.extract_strided_slice %13 {offsets = [0, 8], sizes = [8, 8], strides = [1, 1]} : vector<8x32xf32> to vector<8x8xf32>
    %37 = arith.truncf %36 : vector<8x8xf32> to vector<8x8xbf16>
    %38 = vector.extract_strided_slice %14 {offsets = [0, 8], sizes = [8, 8], strides = [1, 1]} : vector<8x32xf32> to vector<8x8xf32>
    %39 = arith.truncf %38 : vector<8x8xf32> to vector<8x8xbf16>
    %cst_15 = arith.constant dense<0.000000e+00> : vector<8x8xf32>
    %40 = tpu.matmul %35, %37, %cst_15 {dimension_numbers = #tpu.dot_dimension_numbers<[1], [1], [0], [0], [0, 0, 1, 0], [], []>} : vector<8x8xbf16>, vector<8x8xbf16>, vector<8x8xf32> -> vector<8x8xf32>
    %cst_16 = arith.constant dense<0xFF800000> : vector<8xf32>
    %41 = vector.multi_reduction <maximumf>, %40, %cst_16 [1] : vector<8x8xf32> to vector<8xf32>
    %42 = vector.shape_cast %41 : vector<8xf32> to vector<8x1xf32>
    %43 = vector.broadcast %42 : vector<8x1xf32> to vector<8x8xf32>
    %44 = arith.subf %40, %43 : vector<8x8xf32>
    %45 = math.exp %44 : vector<8x8xf32>
    %cst_17 = arith.constant dense<0.000000e+00> : vector<8xf32>
    %46 = vector.multi_reduction <add>, %45, %cst_17 [1] : vector<8x8xf32> to vector<8xf32>
    %47 = vector.shape_cast %46 : vector<8xf32> to vector<8x1xf32>
    %48 = tpu.reciprocal %47 {approx = true} : vector<8x1xf32> -> vector<8x1xf32>
    %49 = vector.broadcast %48 : vector<8x1xf32> to vector<8x8xf32>
    %50 = arith.mulf %45, %49 : vector<8x8xf32>
    %51 = arith.truncf %50 : vector<8x8xf32> to vector<8x8xbf16>
    %cst_18 = arith.constant dense<0.000000e+00> : vector<8x8xf32>
    %52 = tpu.matmul %51, %39, %cst_18 {dimension_numbers = #tpu.dot_dimension_numbers<[1], [0], [0], [1], [0, 0, 1, 1], [], []>} : vector<8x8xbf16>, vector<8x8xbf16>, vector<8x8xf32> -> vector<8x8xf32>
    %53 = vector.extract_strided_slice %12 {offsets = [0, 16], sizes = [8, 8], strides = [1, 1]} : vector<8x32xf32> to vector<8x8xf32>
    %54 = arith.truncf %53 : vector<8x8xf32> to vector<8x8xbf16>
    %55 = vector.extract_strided_slice %13 {offsets = [0, 16], sizes = [8, 8], strides = [1, 1]} : vector<8x32xf32> to vector<8x8xf32>
    %56 = arith.truncf %55 : vector<8x8xf32> to vector<8x8xbf16>
    %57 = vector.extract_strided_slice %14 {offsets = [0, 16], sizes = [8, 8], strides = [1, 1]} : vector<8x32xf32> to vector<8x8xf32>
    %58 = arith.truncf %57 : vector<8x8xf32> to vector<8x8xbf16>
    %cst_19 = arith.constant dense<0.000000e+00> : vector<8x8xf32>
    %59 = tpu.matmul %54, %56, %cst_19 {dimension_numbers = #tpu.dot_dimension_numbers<[1], [1], [0], [0], [0, 0, 1, 0], [], []>} : vector<8x8xbf16>, vector<8x8xbf16>, vector<8x8xf32> -> vector<8x8xf32>
    %cst_20 = arith.constant dense<0xFF800000> : vector<8xf32>
    %60 = vector.multi_reduction <maximumf>, %59, %cst_20 [1] : vector<8x8xf32> to vector<8xf32>
    %61 = vector.shape_cast %60 : vector<8xf32> to vector<8x1xf32>
    %62 = vector.broadcast %61 : vector<8x1xf32> to vector<8x8xf32>
    %63 = arith.subf %59, %62 : vector<8x8xf32>
    %64 = math.exp %63 : vector<8x8xf32>
    %cst_21 = arith.constant dense<0.000000e+00> : vector<8xf32>
    %65 = vector.multi_reduction <add>, %64, %cst_21 [1] : vector<8x8xf32> to vector<8xf32>
    %66 = vector.shape_cast %65 : vector<8xf32> to vector<8x1xf32>
    %67 = tpu.reciprocal %66 {approx = true} : vector<8x1xf32> -> vector<8x1xf32>
    %68 = vector.broadcast %67 : vector<8x1xf32> to vector<8x8xf32>
    %69 = arith.mulf %64, %68 : vector<8x8xf32>
    %70 = arith.truncf %69 : vector<8x8xf32> to vector<8x8xbf16>
    %cst_22 = arith.constant dense<0.000000e+00> : vector<8x8xf32>
    %71 = tpu.matmul %70, %58, %cst_22 {dimension_numbers = #tpu.dot_dimension_numbers<[1], [0], [0], [1], [0, 0, 1, 1], [], []>} : vector<8x8xbf16>, vector<8x8xbf16>, vector<8x8xf32> -> vector<8x8xf32>
    %72 = vector.extract_strided_slice %12 {offsets = [0, 24], sizes = [8, 8], strides = [1, 1]} : vector<8x32xf32> to vector<8x8xf32>
    %73 = arith.truncf %72 : vector<8x8xf32> to vector<8x8xbf16>
    %74 = vector.extract_strided_slice %13 {offsets = [0, 24], sizes = [8, 8], strides = [1, 1]} : vector<8x32xf32> to vector<8x8xf32>
    %75 = arith.truncf %74 : vector<8x8xf32> to vector<8x8xbf16>
    %76 = vector.extract_strided_slice %14 {offsets = [0, 24], sizes = [8, 8], strides = [1, 1]} : vector<8x32xf32> to vector<8x8xf32>
    %77 = arith.truncf %76 : vector<8x8xf32> to vector<8x8xbf16>
    %cst_23 = arith.constant dense<0.000000e+00> : vector<8x8xf32>
    %78 = tpu.matmul %73, %75, %cst_23 {dimension_numbers = #tpu.dot_dimension_numbers<[1], [1], [0], [0], [0, 0, 1, 0], [], []>} : vector<8x8xbf16>, vector<8x8xbf16>, vector<8x8xf32> -> vector<8x8xf32>
    %cst_24 = arith.constant dense<0xFF800000> : vector<8xf32>
    %79 = vector.multi_reduction <maximumf>, %78, %cst_24 [1] : vector<8x8xf32> to vector<8xf32>
    %80 = vector.shape_cast %79 : vector<8xf32> to vector<8x1xf32>
    %81 = vector.broadcast %80 : vector<8x1xf32> to vector<8x8xf32>
    %82 = arith.subf %78, %81 : vector<8x8xf32>
    %83 = math.exp %82 : vector<8x8xf32>
    %cst_25 = arith.constant dense<0.000000e+00> : vector<8xf32>
    %84 = vector.multi_reduction <add>, %83, %cst_25 [1] : vector<8x8xf32> to vector<8xf32>
    %85 = vector.shape_cast %84 : vector<8xf32> to vector<8x1xf32>
    %86 = tpu.reciprocal %85 {approx = true} : vector<8x1xf32> -> vector<8x1xf32>
    %87 = vector.broadcast %86 : vector<8x1xf32> to vector<8x8xf32>
    %88 = arith.mulf %83, %87 : vector<8x8xf32>
    %89 = arith.truncf %88 : vector<8x8xf32> to vector<8x8xbf16>
    %cst_26 = arith.constant dense<0.000000e+00> : vector<8x8xf32>
    %90 = tpu.matmul %89, %77, %cst_26 {dimension_numbers = #tpu.dot_dimension_numbers<[1], [0], [0], [1], [0, 0, 1, 1], [], []>} : vector<8x8xbf16>, vector<8x8xbf16>, vector<8x8xf32> -> vector<8x8xf32>
    %91 = tpu.concatenate %33, %52, %71, %90 in 1 : vector<8x8xf32>, vector<8x8xf32>, vector<8x8xf32>, vector<8x8xf32> -> vector<8x32xf32>
    %92 = arith.truncf %91 : vector<8x32xf32> to vector<8x32xbf16>
    %cst_27 = arith.constant dense<0.000000e+00> : vector<8x32xf32>
    %93 = tpu.matmul %92, %7, %cst_27 {dimension_numbers = #tpu.dot_dimension_numbers<[1], [0], [0], [1], [0, 0, 1, 1], [], []>} : vector<8x32xbf16>, vector<32x32xbf16>, vector<8x32xf32> -> vector<8x32xf32>
    %94 = vector.broadcast %9 : vector<1x32xf32> to vector<8x32xf32>
    %95 = arith.addf %93, %94 : vector<8x32xf32>
    %96 = arith.addf %95, %3 : vector<8x32xf32>
    %c0_28 = arith.constant 0 : index
    %c0_29 = arith.constant 0 : index
    %c0_30 = arith.constant 0 : index
    %97 = vector.load %arg6[%c0_28, %c0_29, %c0_30] : memref<1x1x32xf32, #tpu.memory_space<vmem>>, vector<1x1x32xf32>
    %98 = vector.shape_cast %97 : vector<1x1x32xf32> to vector<1x32xf32>
    %c0_31 = arith.constant 0 : index
    %c0_32 = arith.constant 0 : index
    %c0_33 = arith.constant 0 : index
    %99 = vector.load %arg7[%c0_31, %c0_32, %c0_33] : memref<1x1x32xf32, #tpu.memory_space<vmem>>, vector<1x1x32xf32>
    %100 = vector.shape_cast %99 : vector<1x1x32xf32> to vector<1x32xf32>
    %cst_34 = arith.constant dense<0.000000e+00> : vector<8xf32>
    %101 = vector.multi_reduction <add>, %96, %cst_34 [1] : vector<8x32xf32> to vector<8xf32>
    %102 = vector.shape_cast %101 : vector<8xf32> to vector<8x1xf32>
    %cst_35 = arith.constant 3.200000e+01 : f32
    %103 = vector.broadcast %cst_35 : f32 to vector<8x1xf32>
    %104 = arith.divf %102, %103 : vector<8x1xf32>
    %105 = vector.broadcast %104 : vector<8x1xf32> to vector<8x32xf32>
    %106 = arith.subf %96, %105 : vector<8x32xf32>
    %107 = arith.mulf %106, %106 : vector<8x32xf32>
    %cst_36 = arith.constant dense<0.000000e+00> : vector<8xf32>
    %108 = vector.multi_reduction <add>, %107, %cst_36 [1] : vector<8x32xf32> to vector<8xf32>
    %109 = vector.shape_cast %108 : vector<8xf32> to vector<8x1xf32>
    %cst_37 = arith.constant 3.200000e+01 : f32
    %110 = vector.broadcast %cst_37 : f32 to vector<8x1xf32>
    %111 = arith.divf %109, %110 : vector<8x1xf32>
    %112 = vector.broadcast %104 : vector<8x1xf32> to vector<8x32xf32>
    %113 = arith.subf %96, %112 : vector<8x32xf32>
    %cst_38 = arith.constant 9.99999974E-6 : f32
    %114 = vector.broadcast %cst_38 : f32 to vector<8x1xf32>
    %115 = arith.addf %111, %114 : vector<8x1xf32>
    %116 = math.rsqrt %115 : vector<8x1xf32>
    %117 = vector.broadcast %116 : vector<8x1xf32> to vector<8x32xf32>
    %118 = arith.mulf %113, %117 : vector<8x32xf32>
    %119 = vector.broadcast %98 : vector<1x32xf32> to vector<8x32xf32>
    %120 = arith.mulf %118, %119 : vector<8x32xf32>
    %121 = vector.broadcast %100 : vector<1x32xf32> to vector<8x32xf32>
    %122 = arith.addf %120, %121 : vector<8x32xf32>
    %123 = arith.truncf %122 : vector<8x32xf32> to vector<8x32xbf16>
    %c0_39 = arith.constant 0 : index
    %c0_40 = arith.constant 0 : index
    %c0_41 = arith.constant 0 : index
    %124 = vector.load %arg8[%c0_39, %c0_40, %c0_41] : memref<1x32x64xbf16, #tpu.memory_space<vmem>>, vector<1x32x64xbf16>
    %125 = vector.shape_cast %124 : vector<1x32x64xbf16> to vector<32x64xbf16>
    %cst_42 = arith.constant dense<0.000000e+00> : vector<8x64xf32>
    %126 = tpu.matmul %123, %125, %cst_42 {dimension_numbers = #tpu.dot_dimension_numbers<[1], [0], [0], [1], [0, 0, 1, 1], [], []>} : vector<8x32xbf16>, vector<32x64xbf16>, vector<8x64xf32> -> vector<8x64xf32>
    %c0_43 = arith.constant 0 : index
    %c0_44 = arith.constant 0 : index
    %c0_45 = arith.constant 0 : index
    %127 = vector.load %arg9[%c0_43, %c0_44, %c0_45] : memref<1x1x64xf32, #tpu.memory_space<vmem>>, vector<1x1x64xf32>
    %128 = vector.shape_cast %127 : vector<1x1x64xf32> to vector<1x64xf32>
    %129 = vector.broadcast %128 : vector<1x64xf32> to vector<8x64xf32>
    %130 = arith.addf %126, %129 : vector<8x64xf32>
    %cst_46 = arith.constant 0.000000e+00 : f32
    %131 = vector.broadcast %cst_46 : f32 to vector<8x64xf32>
    %132 = arith.maximumf %130, %131 : vector<8x64xf32>
    %133 = arith.truncf %132 : vector<8x64xf32> to vector<8x64xbf16>
    %c0_47 = arith.constant 0 : index
    %c0_48 = arith.constant 0 : index
    %c0_49 = arith.constant 0 : index
    %134 = vector.load %arg10[%c0_47, %c0_48, %c0_49] : memref<1x64x32xbf16, #tpu.memory_space<vmem>>, vector<1x64x32xbf16>
    %135 = vector.shape_cast %134 : vector<1x64x32xbf16> to vector<64x32xbf16>
    %cst_50 = arith.constant dense<0.000000e+00> : vector<8x32xf32>
    %136 = tpu.matmul %133, %135, %cst_50 {dimension_numbers = #tpu.dot_dimension_numbers<[1], [0], [0], [1], [0, 0, 1, 1], [], []>} : vector<8x64xbf16>, vector<64x32xbf16>, vector<8x32xf32> -> vector<8x32xf32>
    %c0_51 = arith.constant 0 : index
    %c0_52 = arith.constant 0 : index
    %c0_53 = arith.constant 0 : index
    %137 = vector.load %arg11[%c0_51, %c0_52, %c0_53] : memref<1x1x32xf32, #tpu.memory_space<vmem>>, vector<1x1x32xf32>
    %138 = vector.shape_cast %137 : vector<1x1x32xf32> to vector<1x32xf32>
    %139 = vector.broadcast %138 : vector<1x32xf32> to vector<8x32xf32>
    %140 = arith.addf %136, %139 : vector<8x32xf32>
    %141 = arith.addf %140, %122 : vector<8x32xf32>
    %c0_54 = arith.constant 0 : index
    %c0_55 = arith.constant 0 : index
    %c0_56 = arith.constant 0 : index
    %142 = vector.load %arg12[%c0_54, %c0_55, %c0_56] : memref<1x1x32xf32, #tpu.memory_space<vmem>>, vector<1x1x32xf32>
    %143 = vector.shape_cast %142 : vector<1x1x32xf32> to vector<1x32xf32>
    %c0_57 = arith.constant 0 : index
    %c0_58 = arith.constant 0 : index
    %c0_59 = arith.constant 0 : index
    %144 = vector.load %arg13[%c0_57, %c0_58, %c0_59] : memref<1x1x32xf32, #tpu.memory_space<vmem>>, vector<1x1x32xf32>
    %145 = vector.shape_cast %144 : vector<1x1x32xf32> to vector<1x32xf32>
    %cst_60 = arith.constant dense<0.000000e+00> : vector<8xf32>
    %146 = vector.multi_reduction <add>, %141, %cst_60 [1] : vector<8x32xf32> to vector<8xf32>
    %147 = vector.shape_cast %146 : vector<8xf32> to vector<8x1xf32>
    %cst_61 = arith.constant 3.200000e+01 : f32
    %148 = vector.broadcast %cst_61 : f32 to vector<8x1xf32>
    %149 = arith.divf %147, %148 : vector<8x1xf32>
    %150 = vector.broadcast %149 : vector<8x1xf32> to vector<8x32xf32>
    %151 = arith.subf %141, %150 : vector<8x32xf32>
    %152 = arith.mulf %151, %151 : vector<8x32xf32>
    %cst_62 = arith.constant dense<0.000000e+00> : vector<8xf32>
    %153 = vector.multi_reduction <add>, %152, %cst_62 [1] : vector<8x32xf32> to vector<8xf32>
    %154 = vector.shape_cast %153 : vector<8xf32> to vector<8x1xf32>
    %cst_63 = arith.constant 3.200000e+01 : f32
    %155 = vector.broadcast %cst_63 : f32 to vector<8x1xf32>
    %156 = arith.divf %154, %155 : vector<8x1xf32>
    %157 = vector.broadcast %149 : vector<8x1xf32> to vector<8x32xf32>
    %158 = arith.subf %141, %157 : vector<8x32xf32>
    %cst_64 = arith.constant 9.99999974E-6 : f32
    %159 = vector.broadcast %cst_64 : f32 to vector<8x1xf32>
    %160 = arith.addf %156, %159 : vector<8x1xf32>
    %161 = math.rsqrt %160 : vector<8x1xf32>
    %162 = vector.broadcast %161 : vector<8x1xf32> to vector<8x32xf32>
    %163 = arith.mulf %158, %162 : vector<8x32xf32>
    %164 = vector.broadcast %143 : vector<1x32xf32> to vector<8x32xf32>
    %165 = arith.mulf %163, %164 : vector<8x32xf32>
    %166 = vector.broadcast %145 : vector<1x32xf32> to vector<8x32xf32>
    %167 = arith.addf %165, %166 : vector<8x32xf32>
    %c0_65 = arith.constant 0 : index
    %c0_66 = arith.constant 0 : index
    %168 = vector.load %arg14[%c0_65, %c0_66] : memref<8x32xf32, #tpu.memory_space<vmem>>, vector<8x32xf32>
    tpu.vector_store %arg14[%c0_65, %c0_66], %167 {strides = array<i32>} : memref<8x32xf32, #tpu.memory_space<vmem>>, vector<8x32xf32>,
    return
  }
  func.func @transform_0(%arg0: i32, %arg1: i32) -> (i32, i32) {
    %c0_i32 = arith.constant 0 : i32
    %c0_i32_0 = arith.constant 0 : i32
    return %arg0, %c0_i32 : i32, i32
  }
  func.func @transform_1(%arg0: i32, %arg1: i32) -> (i32, i32, i32) {
    %c0_i32 = arith.constant 0 : i32
    %c0_i32_0 = arith.constant 0 : i32
    %c0_i32_1 = arith.constant 0 : i32
    return %arg1, %c0_i32, %c0_i32_0 : i32, i32, i32
  }
  func.func @transform_2(%arg0: i32, %arg1: i32) -> (i32, i32, i32) {
    %c0_i32 = arith.constant 0 : i32
    %c0_i32_0 = arith.constant 0 : i32
    %c0_i32_1 = arith.constant 0 : i32
    return %arg1, %c0_i32, %c0_i32_0 : i32, i32, i32
  }
  func.func @transform_3(%arg0: i32, %arg1: i32) -> (i32, i32, i32) {
    %c0_i32 = arith.constant 0 : i32
    %c0_i32_0 = arith.constant 0 : i32
    %c0_i32_1 = arith.constant 0 : i32
    return %arg1, %c0_i32, %c0_i32_0 : i32, i32, i32
  }
  func.func @transform_4(%arg0: i32, %arg1: i32) -> (i32, i32, i32) {
    %c0_i32 = arith.constant 0 : i32
    %c0_i32_0 = arith.constant 0 : i32
    %c0_i32_1 = arith.constant 0 : i32
    return %arg1, %c0_i32, %c0_i32_0 : i32, i32, i32
  }
  func.func @transform_5(%arg0: i32, %arg1: i32) -> (i32, i32, i32) {
    %c0_i32 = arith.constant 0 : i32
    %c0_i32_0 = arith.constant 0 : i32
    %c0_i32_1 = arith.constant 0 : i32
    return %arg1, %c0_i32, %c0_i32_0 : i32, i32, i32
  }
  func.func @transform_6(%arg0: i32, %arg1: i32) -> (i32, i32, i32) {
    %c0_i32 = arith.constant 0 : i32
    %c0_i32_0 = arith.constant 0 : i32
    %c0_i32_1 = arith.constant 0 : i32
    return %arg1, %c0_i32, %c0_i32_0 : i32, i32, i32
  }
  func.func @transform_7(%arg0: i32, %arg1: i32) -> (i32, i32, i32) {
    %c0_i32 = arith.constant 0 : i32
    %c0_i32_0 = arith.constant 0 : i32
    %c0_i32_1 = arith.constant 0 : i32
    return %arg1, %c0_i32, %c0_i32_0 : i32, i32, i32
  }
  func.func @transform_8(%arg0: i32, %arg1: i32) -> (i32, i32, i32) {
    %c0_i32 = arith.constant 0 : i32
    %c0_i32_0 = arith.constant 0 : i32
    %c0_i32_1 = arith.constant 0 : i32
    return %arg1, %c0_i32, %c0_i32_0 : i32, i32, i32
  }
  func.func @transform_9(%arg0: i32, %arg1: i32) -> (i32, i32, i32) {
    %c0_i32 = arith.constant 0 : i32
    %c0_i32_0 = arith.constant 0 : i32
    %c0_i32_1 = arith.constant 0 : i32
    return %arg1, %c0_i32, %c0_i32_0 : i32, i32, i32
  }
  func.func @transform_10(%arg0: i32, %arg1: i32) -> (i32, i32, i32) {
    %c0_i32 = arith.constant 0 : i32
    %c0_i32_0 = arith.constant 0 : i32
    %c0_i32_1 = arith.constant 0 : i32
    return %arg1, %c0_i32, %c0_i32_0 : i32, i32, i32
  }
  func.func @transform_11(%arg0: i32, %arg1: i32) -> (i32, i32, i32) {
    %c0_i32 = arith.constant 0 : i32
    %c0_i32_0 = arith.constant 0 : i32
    %c0_i32_1 = arith.constant 0 : i32
    return %arg1, %c0_i32, %c0_i32_0 : i32, i32, i32
  }
  func.func @transform_12(%arg0: i32, %arg1: i32) -> (i32, i32) {
    %c0_i32 = arith.constant 0 : i32
    %c0_i32_0 = arith.constant 0 : i32
    return %arg0, %c0_i32 : i32, i32
  }
}

module attributes {stable_mosaic.version = 11 : i64} {
  func.func @_final_proj_kernel(%arg0: i32, %arg1: i32, %arg2: memref<8x32xf32, #tpu.memory_space<vmem>>, %arg3: memref<32x128xbf16, #tpu.memory_space<vmem>>, %arg4: memref<1x128xf32, #tpu.memory_space<vmem>>, %arg5: memref<8x128xf32, #tpu.memory_space<vmem>>) attributes {dimension_semantics = [#tpu.dimension_semantics<parallel>, #tpu.dimension_semantics<parallel>], iteration_bounds = array<i64: 2, 1>, scalar_prefetch = 0 : i64, scratch_operands = 0 : i64, tpu.core_type = #tpu.core_type<tc>, window_params = [{transform_indices = @transform_0, window_bounds = array<i64: 8, 32>}, {transform_indices = @transform_1, window_bounds = array<i64: 32, 128>}, {transform_indices = @transform_2, window_bounds = array<i64: 1, 128>}, {transform_indices = @transform_3, window_bounds = array<i64: 8, 128>}]} {
    %c0 = arith.constant 0 : index
    %c0_0 = arith.constant 0 : index
    %0 = vector.load %arg2[%c0, %c0_0] : memref<8x32xf32, #tpu.memory_space<vmem>>, vector<8x32xf32>
    %1 = arith.truncf %0 : vector<8x32xf32> to vector<8x32xbf16>
    %c0_1 = arith.constant 0 : index
    %c0_2 = arith.constant 0 : index
    %2 = vector.load %arg3[%c0_1, %c0_2] : memref<32x128xbf16, #tpu.memory_space<vmem>>, vector<32x128xbf16>
    %cst = arith.constant dense<0.000000e+00> : vector<8x128xf32>
    %3 = tpu.matmul %1, %2, %cst {dimension_numbers = #tpu.dot_dimension_numbers<[1], [0], [0], [1], [0, 0, 1, 1], [], []>} : vector<8x32xbf16>, vector<32x128xbf16>, vector<8x128xf32> -> vector<8x128xf32>
    %c0_3 = arith.constant 0 : index
    %c0_4 = arith.constant 0 : index
    %4 = vector.load %arg4[%c0_3, %c0_4] : memref<1x128xf32, #tpu.memory_space<vmem>>, vector<1x128xf32>
    %5 = vector.broadcast %4 : vector<1x128xf32> to vector<8x128xf32>
    %6 = arith.addf %3, %5 : vector<8x128xf32>
    %c0_5 = arith.constant 0 : index
    %c0_6 = arith.constant 0 : index
    %7 = vector.load %arg5[%c0_5, %c0_6] : memref<8x128xf32, #tpu.memory_space<vmem>>, vector<8x128xf32>
    tpu.vector_store %arg5[%c0_5, %c0_6], %6 {strides = array<i32>} : memref<8x128xf32, #tpu.memory_space<vmem>>, vector<8x128xf32>,
    return
  }
  func.func @transform_0(%arg0: i32, %arg1: i32) -> (i32, i32) {
    %c0_i32 = arith.constant 0 : i32
    %c0_i32_0 = arith.constant 0 : i32
    return %arg0, %c0_i32 : i32, i32
  }
  func.func @transform_1(%arg0: i32, %arg1: i32) -> (i32, i32) {
    %c0_i32 = arith.constant 0 : i32
    %c0_i32_0 = arith.constant 0 : i32
    return %c0_i32, %arg1 : i32, i32
  }
  func.func @transform_2(%arg0: i32, %arg1: i32) -> (i32, i32) {
    %c0_i32 = arith.constant 0 : i32
    %c0_i32_0 = arith.constant 0 : i32
    return %c0_i32, %arg1 : i32, i32
  }
  func.func @transform_3(%arg0: i32, %arg1: i32) -> (i32, i32) {
    %c0_i32 = arith.constant 0 : i32
    return %arg0, %arg1 : i32, i32
  }
}

</mosaic_0001>

<llo_original>
// kernel: transformer_forward.5
$region0: #{transformer_forward.5}
  #allocation0 [shape = 'u32[]', space=smem, size = 0x4, offset = 0x4, fixed_abs, tag = 'smem constant byte address 0x4 - core index']
  #allocation1 [shape = 'u32[144,128]{1,0:T(1,128)}', space=vmem, size = 0x12000, scoped, tag = 'internal scratch']
  %s0 = inlined_call_operand.vmem [shape: f32[16,32], index: 0, kind: input, shape index: {}]
  %s1 = inlined_call_operand.vmem [shape: bf16[32,128], index: 1, kind: input, shape index: {}]
  %s2 = inlined_call_operand.vmem [shape: f32[1,128], index: 2, kind: input, shape index: {}]
  %s3 = inlined_call_operand.hbm [shape: f32[16,128], index: 3, kind: output, shape index: {}]
  %s4 = sld [smem:[#allocation0]]
  $region45: #{transformer_forward.5} parent=0
    _
  %s6 = ssub.s32 1, %s4
  %s7 = scalar_select 0, %s6, %s4
  $region1: #{transformer_forward.5} parent=0
    #allocation2 [shape = 'u8[8192]{0}', space=vmem, size = 0x2000, scoped, tag = 'output window, operand 0']
    #allocation3 [shape = 's32[2]{0}', space=sflag, size = 0x8, scoped, tag = 'scoped memory for transformer_forward.5']
    %8 = vsyncpa [#allocation3], 0
    %s9 = scalar_lea.sflag [#allocation3], 1
    %10 = vsyncpa %s9, 0
    loop: start=0, step=1, limit=4
    $region2: #{transformer_forward.5} parent=1 // loop_pre_header
      _
    $region3: #{transformer_forward.5} parent=1 // loop_header
      %s12 = sphi 0, %s16
      %p13 = scmp.ge.s32.totalorder %s12, 4
      %s19 = sphi 0, %s31
      %s20 = sphi 0, %s27
      %s21 = sphi 0, %s19
      %s22 = sphi 0, %s20
      %s23 = sphi 0, %s21
      %s24 = sphi 0, %s22
      %s34 = sphi 0, %s36
      %s37 = sphi 0, %s34
      %s38 = sphi 0, %s37
      %s54 = sphi 0, %s38
      %s60 = sphi 0, %s62
      %s63 = sphi 0, %s60
      %s64 = sphi 0, %s63
      %s80 = sphi 0, %s64
      %s86 = sphi 0, %s88
      %s89 = sphi 0, %s86
      %s90 = sphi 0, %s89
      %s106 = sphi 0, %s90
      %s114 = sphi 0, %s116
      %s117 = sphi 0, %s114
      %s118 = sphi 0, %s117
      %s134 = sphi 0, %s118
    $region4: #{transformer_forward.5} parent=1 // loop_header_branch
      %15 = sbr.rel (%p13) target = $region8
    $region5: #{transformer_forward.5} parent=1 // loop_body
      %s17 = ssub.s32 %s12, 1
      %s18 = ssub.s32 %s12, 2
      %s25 = sadd.s32 1, %s20
      %p26 = scmp.ge.s32.totalorder %s25, 1
      %s27 = scalar_select %p26, 0, %s25
      %s28 = sadd.s32 1, %s19
      %s29 = scalar_select %p26, %s28, %s19
      %p30 = scmp.ge.s32.totalorder %s29, 2
      %s31 = scalar_select %p30, 0, %s29
      %s32 = ssub.s32 %s19, %s31
      %p33 = scmp.eq.s32.totalorder %s32, 0
      %s35 = sadd.s32 %s34, 1
      %s36 = scalar_select %p33, %s34, %s35
      %p39 = pneg %p33
      %p40 = scmp.eq.s32.totalorder %s12, 1
      %p41 = por %p39, %p40
      %p42 = scmp.ne.s32.totalorder %s34, %s37
      %p43 = scmp.eq.s32.totalorder %s12, 0
      %p44 = por %p42, %p43
      %p45 = scmp.ne.s32.totalorder %s34, %s37
      %p46 = scmp.eq.s32.totalorder %s17, 1
      %p47 = por %p45, %p46
      %p48 = scmp.ne.s32.totalorder %s37, %s38
      %p49 = scmp.eq.s32.totalorder %s17, 0
      %p50 = por %p48, %p49
      %p51 = scmp.ne.s32.totalorder %s37, %s38
      %p52 = scmp.eq.s32.totalorder %s18, 1
      %p53 = por %p51, %p52
      %p55 = scmp.ne.s32.totalorder %s38, %s54
      %p56 = scmp.eq.s32.totalorder %s18, 0
      %p57 = por %p55, %p56
      %s58 = ssub.s32 %s20, %s27
      %p59 = scmp.eq.s32.totalorder %s58, 0
      %s61 = sadd.s32 %s60, 1
      %s62 = scalar_select %p59, %s60, %s61
      %p65 = pneg %p59
      %p66 = scmp.eq.s32.totalorder %s12, 1
      %p67 = por %p65, %p66
      %p68 = scmp.ne.s32.totalorder %s60, %s63
      %p69 = scmp.eq.s32.totalorder %s12, 0
      %p70 = por %p68, %p69
      %p71 = scmp.ne.s32.totalorder %s60, %s63
      %p72 = scmp.eq.s32.totalorder %s17, 1
      %p73 = por %p71, %p72
      %p74 = scmp.ne.s32.totalorder %s63, %s64
      %p75 = scmp.eq.s32.totalorder %s17, 0
      %p76 = por %p74, %p75
      %p77 = scmp.ne.s32.totalorder %s63, %s64
      %p78 = scmp.eq.s32.totalorder %s18, 1
      %p79 = por %p77, %p78
      %p81 = scmp.ne.s32.totalorder %s64, %s80
      %p82 = scmp.eq.s32.totalorder %s18, 0
      %p83 = por %p81, %p82
      %s84 = ssub.s32 %s20, %s27
      %p85 = scmp.eq.s32.totalorder %s84, 0
      %s87 = sadd.s32 %s86, 1
      %s88 = scalar_select %p85, %s86, %s87
      %p91 = pneg %p85
      %p92 = scmp.eq.s32.totalorder %s12, 1
      %p93 = por %p91, %p92
      %p94 = scmp.ne.s32.totalorder %s86, %s89
      %p95 = scmp.eq.s32.totalorder %s12, 0
      %p96 = por %p94, %p95
      %p97 = scmp.ne.s32.totalorder %s86, %s89
      %p98 = scmp.eq.s32.totalorder %s17, 1
      %p99 = por %p97, %p98
      %p100 = scmp.ne.s32.totalorder %s89, %s90
      %p101 = scmp.eq.s32.totalorder %s17, 0
      %p102 = por %p100, %p101
      %p103 = scmp.ne.s32.totalorder %s89, %s90
      %p104 = scmp.eq.s32.totalorder %s18, 1
      %p105 = por %p103, %p104
      %p107 = scmp.ne.s32.totalorder %s90, %s106
      %p108 = scmp.eq.s32.totalorder %s18, 0
      %p109 = por %p107, %p108
      %s110 = ssub.s32 %s19, %s31
      %s111 = ssub.s32 %s20, %s27
      %s112 = sor.u32 %s110, %s111
      %p113 = scmp.eq.s32.totalorder %s112, 0
      %s115 = sadd.s32 %s114, 1
      %s116 = scalar_select %p113, %s114, %s115
      %p119 = pneg %p113
      %p120 = scmp.eq.s32.totalorder %s12, 1
      %p121 = por %p119, %p120
      %p122 = scmp.ne.s32.totalorder %s114, %s117
      %p123 = scmp.eq.s32.totalorder %s12, 0
      %p124 = por %p122, %p123
      %p125 = scmp.ne.s32.totalorder %s114, %s117
      %p126 = scmp.eq.s32.totalorder %s17, 1
      %p127 = por %p125, %p126
      %p128 = scmp.ne.s32.totalorder %s117, %s118
      %p129 = scmp.eq.s32.totalorder %s17, 0
      %p130 = por %p128, %p129
      %p131 = scmp.ne.s32.totalorder %s117, %s118
      %p132 = scmp.eq.s32.totalorder %s18, 1
      %p133 = por %p131, %p132
      %p135 = scmp.ne.s32.totalorder %s118, %s134
      %p136 = scmp.eq.s32.totalorder %s18, 0
      %p137 = por %p135, %p136
      %p138 = scmp.le.s32.totalorder 1, %s12
      %p139 = scmp.lt.s32.totalorder %s12, 3
      %p140 = pnand %p138, %p139
      %p141 = pneg %p140
      // Predicated region
      $region9: #{transformer_forward.5} parent=5 // pred_check
        _
      $region10: #{transformer_forward.5} parent=5 // pred_check_branch
        %143 = sbr.rel (%p140) target = $region12
      $region11: #{transformer_forward.5} parent=5 // pred_region
        %s144 = ssub.s32 %s12, 1
        // Predicated region
        $region13: #{transformer_forward.5} parent=11 // pred_check
          %p145 = pneg %p76
        $region14: #{transformer_forward.5} parent=11 // pred_check_branch
          %147 = sbr.rel (%p145) target = $region16
        $region15: #{transformer_forward.5} parent=11 // pred_region
          %p148 = scmp.lt.s32.totalorder %s22, 0
          %s149 = scalar_select %p148, %s22, 0
          %s150 = smul.addr %s149, 4
          %s151 = scalar_lea.vmem %s1, %s150
        $region16: #{transformer_forward.5} parent=11 // pred_fallthru
          _
        // Predicated region
        $region17: #{transformer_forward.5} parent=11 // pred_check
          %p152 = pneg %p102
        $region18: #{transformer_forward.5} parent=11 // pred_check_branch
          %154 = sbr.rel (%p152) target = $region20
        $region19: #{transformer_forward.5} parent=11 // pred_region
          %p155 = scmp.lt.s32.totalorder %s22, 0
          %s156 = scalar_select %p155, %s22, 0
          %s157 = scalar_lea.vmem %s2, %s156
        $region20: #{transformer_forward.5} parent=11 // pred_fallthru
          _
      $region12: #{transformer_forward.5} parent=5 // pred_fallthru
        _
      %p158 = scmp.lt.s32.totalorder %s12, 2
      // Predicated region
      $region21: #{transformer_forward.5} parent=5 // pred_check
        %p159 = pneg %p158
      $region22: #{transformer_forward.5} parent=5 // pred_check_branch
        %161 = sbr.rel (%p159) target = $region24
      $region23: #{transformer_forward.5} parent=5 // pred_region
        // Predicated region
        $region25: #{transformer_forward.5} parent=23 // pred_check
          %p162 = pneg %p44
        $region26: #{transformer_forward.5} parent=23 // pred_check_branch
          %164 = sbr.rel (%p162) target = $region28
        $region27: #{transformer_forward.5} parent=23 // pred_region
          %p165 = scmp.lt.s32.totalorder %s19, 1
          %s166 = scalar_select %p165, %s19, 1
          %s167 = smul.addr %s166, 8
          %s168 = scalar_lea.vmem %s0, %s167
        $region28: #{transformer_forward.5} parent=23 // pred_fallthru
          _
      $region24: #{transformer_forward.5} parent=5 // pred_fallthru
        _
      %p169 = scmp.le.s32.totalorder 1, %s12
      %p170 = scmp.lt.s32.totalorder %s12, 3
      %p171 = pnand %p169, %p170
      %p172 = pneg %p171
      // Predicated region
      $region29: #{transformer_forward.5} parent=5 // pred_check
        _
      $region30: #{transformer_forward.5} parent=5 // pred_check_branch
        %174 = sbr.rel (%p171) target = $region32
      $region31: #{transformer_forward.5} parent=5 // pred_region
        %s175 = ssub.s32 %s12, 1
        %p176 = scmp.lt.s32.totalorder %s21, 1
        %s177 = scalar_select %p176, %s21, 1
        %s178 = smul.addr %s177, 8
        %s179 = scalar_lea.vmem %s0, %s178
        %p180 = pneg %p50
        %p181 = pneg %p47
        %p182 = scmp.lt.s32.totalorder %s22, 0
        %s183 = scalar_select %p182, %s22, 0
        %s184 = smul.addr %s183, 4
        %s185 = scalar_lea.vmem %s1, %s184
        %p186 = pneg %p76
        %p187 = pneg %p73
        %p188 = scmp.lt.s32.totalorder %s22, 0
        %s189 = scalar_select %p188, %s22, 0
        %s190 = scalar_lea.vmem %s2, %s189
        %p191 = pneg %p102
        %p192 = pneg %p99
        %p193 = pneg %p130
        %p194 = pneg %p127
        %s195 = sand.u32 %s117, 1
        %s196 = scalar_lea.sflag [#allocation3], %s195
        %s197 = sand.u32 %s117, 1
        %s198 = smul.addr %s197, 8
        %s199 = scalar_lea.vmem [#allocation2], %s198
        %p200 = scmp.lt.s32.totalorder %s21, 1
        %s201 = scalar_select %p200, %s21, 1
        %s202 = smul.addr %s201, 8
        %s203 = scalar_lea.vmem %s0, %s202
        %p204 = scmp.lt.s32.totalorder %s22, 0
        %s205 = scalar_select %p204, %s22, 0
        %s206 = smul.addr %s205, 4
        %s207 = scalar_lea.vmem %s1, %s206
        %p208 = scmp.lt.s32.totalorder %s22, 0
        %s209 = scalar_select %p208, %s22, 0
        %s210 = scalar_lea.vmem %s2, %s209
        %v212 = vld [vmem:[%s203] sm:$0xff]
        %v213 = vpack.c.bf16 %v212, %v212
        %v214 = vld [vmem:[%s207] sm:$0xf]
        %v215 = vld [vmem:[%s207 + $0x4] sm:$0xf]
        %v216 = vld [vmem:[%s207 + $0x8] sm:$0xf]
        %v217 = vld [vmem:[%s207 + $0xc] sm:$0xf]
        %v218 = vld [vmem:[%s210] sm:$0x1]
        %v220 = vlaneseq
        %v221 = vshrl.u32 %v220, 7
        %v222 = vsub.s32 0, %v221
        %v223 = vrot.slane %v218, %v222
        %v229 = vunpack.c.l.b16 %v214
        %v230 = vunpack.c.l.b16 %v215
        %v231 = vunpack.c.l.b16 %v216
        %v232 = vunpack.c.l.b16 %v217
        %v233 = vpack.c.b16 %v230, %v229
        %v234 = vpack.c.b16 %v232, %v231
        %vm237 = vcmask 261120
        %v239 = vsel %vm237, %v213, 0
        %241 = vmatprep.subr.bf16.mxu0 0
        %242 = vmatpush1.bf16.msra.mxu0 %v233
        %243 = vmatprep.subr.bf16.mxu0 0
        %244 = vmatpush1.bf16.msra.mxu0 %v234
        %245 = vmatprep.subr.bf16.mxu0 0
        %246 = vmatpush1.bf16.msra.mxu0 0
        %247 = vmatprep.subr.bf16.mxu0 0
        %248 = vmatpush1.bf16.msra.mxu0 0
        %249 = vmatprep.subr.bf16.mxu0 0
        %250 = vmatpush1.bf16.msra.mxu0 0
        %251 = vmatprep.subr.bf16.mxu0 0
        %252 = vmatpush1.bf16.msra.mxu0 0
        %253 = vmatprep.subr.bf16.mxu0 0
        %254 = vmatpush1.bf16.msra.mxu0 0
        %255 = vmatprep.subr.bf16.mxu0 0
        %256 = vmatpush1.bf16.msra.mxu0 0
        %257 = vmatprep.subr.bf16.mxu0 0
        %258 = vmatpush1.bf16.msra.mxu0 0
        %259 = vmatprep.subr.bf16.mxu0 0
        %260 = vmatpush1.bf16.msra.mxu0 0
        %261 = vmatprep.subr.bf16.mxu0 0
        %262 = vmatpush1.bf16.msra.mxu0 0
        %263 = vmatprep.subr.bf16.mxu0 0
        %264 = vmatpush1.bf16.msra.mxu0 0
        %265 = vmatprep.subr.bf16.mxu0 0
        %266 = vmatpush1.bf16.msra.mxu0 0
        %267 = vmatprep.subr.bf16.mxu0 0
        %268 = vmatpush1.bf16.msra.mxu0 0
        %269 = vmatprep.subr.bf16.mxu0 0
        %270 = vmatpush1.bf16.msra.mxu0 0
        %271 = vmatprep.subr.bf16.mxu0 0
        %272 = vmatpush1.bf16.msra.mxu0 0
        %273 = vmatprep.mubr.bf16.mxu0 0
        %274 = vmatmul.mubr.bf16.gmra.mrb[0].mxu0 %v239
        %v275 = vpop.f32.mrb[0].mxu0
        %v276 = vadd.f32 %v223, %v275
        %v277 = vpop.f32.mrb[0].mxu0
        %v278 = vpop.f32.mrb[0].mxu0
        %v279 = vpop.f32.mrb[0].mxu0
        %280 = vdwg.mxu0
        %281 = vst [vmem:[%s199] sm:$0xff] %v276
        %s282 = sand.u32 %s117, 1
        %s283 = scalar_lea.sflag [#allocation3], %s282
        %s284 = sand.u32 %s117, 1
        %s285 = smul.addr %s284, 8
        %s286 = scalar_lea.vmem [#allocation2], %s285
        // Predicated region
        $region33: #{transformer_forward.5} parent=31 // pred_check
          %p287 = pneg %p127
        $region34: #{transformer_forward.5} parent=31 // pred_check_branch
          %289 = sbr.rel (%p287) target = $region36
        $region35: #{transformer_forward.5} parent=31 // pred_region
          %s291 = ssub.s32 128, 128
          %292 = vsyncadd %s283, %s291
          %s293 = sadd.s32 %s22, %s21
          %s294 = smul.addr %s293, 128
          %s295 = scalar_lea.hbm %s3, %s294
          %s297 = sshll.u32 %s286, 4
          %s298 = int_to_ptr.vmem [resolvable:$true] %s297
          %300 = dma.vmem_to_hbm [thread:$0]  %s298, 128, %s295, %s283
        $region36: #{transformer_forward.5} parent=31 // pred_fallthru
          _
      $region32: #{transformer_forward.5} parent=5 // pred_fallthru
        _
      %p301 = scmp.le.s32.totalorder 2, %s12
      // Predicated region
      $region37: #{transformer_forward.5} parent=5 // pred_check
        %p302 = pneg %p301
      $region38: #{transformer_forward.5} parent=5 // pred_check_branch
        %304 = sbr.rel (%p302) target = $region40
      $region39: #{transformer_forward.5} parent=5 // pred_region
        %s305 = ssub.s32 %s12, 2
        // Predicated region
        $region41: #{transformer_forward.5} parent=39 // pred_check
          %p306 = pneg %p133
        $region42: #{transformer_forward.5} parent=39 // pred_check_branch
          %308 = sbr.rel (%p306) target = $region44
        $region43: #{transformer_forward.5} parent=39 // pred_region
          %s309 = sand.u32 %s118, 1
          %s310 = scalar_lea.sflag [#allocation3], %s309
          %s311 = sand.u32 %s118, 1
          %s312 = smul.addr %s311, 8
          %s313 = scalar_lea.vmem [#allocation2], %s312
          %314 = dma.done %s310, 128
        $region44: #{transformer_forward.5} parent=39 // pred_fallthru
          _
      $region40: #{transformer_forward.5} parent=5 // pred_fallthru
        _
    $region6: #{transformer_forward.5} parent=1 // loop_footer
      %s16 = sadd.s32 1, %s12
    $region7: #{transformer_forward.5} parent=1 // loop_footer_branch
      %11 = sbr.rel target = $region3
    $region8: #{transformer_forward.5} parent=1 // loop_exit
      _
    %315 = vsyncpa [#allocation3], 1
    %s316 = scalar_lea.sflag [#allocation3], 1
    %317 = vsyncpa %s316, 1

// kernel: transformer_forward.3
$region0: #{transformer_forward.3}
  #allocation0 [shape = 'u32[]', space=smem, size = 0x4, offset = 0x4, fixed_abs, tag = 'smem constant byte address 0x4 - core index']
  #allocation1 [shape = 'u32[144,128]{1,0:T(1,128)}', space=vmem, size = 0x12000, scoped, tag = 'internal scratch']
  %s0 = inlined_call_operand.vmem [shape: f32[16,32], index: 0, kind: input, shape index: {}]
  %s1 = inlined_call_operand.vmem [shape: bf16[2,32,96], index: 1, kind: input, shape index: {}]
  %s2 = inlined_call_operand.vmem [shape: bf16[2,32,32], index: 2, kind: input, shape index: {}]
  %s3 = inlined_call_operand.vmem [shape: f32[2,1,32], index: 3, kind: input, shape index: {}]
  %s4 = inlined_call_operand.vmem [shape: f32[2,1,32], index: 4, kind: input, shape index: {}]
  %s5 = inlined_call_operand.vmem [shape: f32[2,1,32], index: 5, kind: input, shape index: {}]
  %s6 = inlined_call_operand.vmem [shape: bf16[2,32,64], index: 6, kind: input, shape index: {}]
  %s7 = inlined_call_operand.vmem [shape: f32[2,1,64], index: 7, kind: input, shape index: {}]
  %s8 = inlined_call_operand.vmem [shape: bf16[2,64,32], index: 8, kind: input, shape index: {}]
  %s9 = inlined_call_operand.vmem [shape: f32[2,1,32], index: 9, kind: input, shape index: {}]
  %s10 = inlined_call_operand.vmem [shape: f32[2,1,32], index: 10, kind: input, shape index: {}]
  %s11 = inlined_call_operand.vmem [shape: f32[2,1,32], index: 11, kind: input, shape index: {}]
  %s12 = inlined_call_operand.vmem [shape: f32[16,32], index: 12, kind: output, shape index: {}]
  %s13 = sld [smem:[#allocation0]]
  $region85: #{transformer_forward.3} parent=0
    _
  %s15 = ssub.s32 1, %s13
  %s16 = scalar_select 0, %s15, %s13
  loop: start=0, step=1, limit=6
  $region2: #{transformer_forward.3} parent=0 // loop_pre_header
    _
  $region3: #{transformer_forward.3} parent=0 // loop_header
    %s18 = sphi 0, %s22
    %p19 = scmp.ge.s32.totalorder %s18, 6
    %s25 = sphi 0, %s37
    %s26 = sphi 0, %s33
    %s27 = sphi 0, %s25
    %s28 = sphi 0, %s26
    %s29 = sphi 0, %s27
    %s30 = sphi 0, %s28
    %s40 = sphi 0, %s42
    %s43 = sphi 0, %s40
    %s44 = sphi 0, %s43
    %s60 = sphi 0, %s44
    %s66 = sphi 0, %s68
    %s69 = sphi 0, %s66
    %s70 = sphi 0, %s69
    %s86 = sphi 0, %s70
    %s92 = sphi 0, %s94
    %s95 = sphi 0, %s92
    %s96 = sphi 0, %s95
    %s112 = sphi 0, %s96
    %s118 = sphi 0, %s120
    %s121 = sphi 0, %s118
    %s122 = sphi 0, %s121
    %s138 = sphi 0, %s122
    %s144 = sphi 0, %s146
    %s147 = sphi 0, %s144
    %s148 = sphi 0, %s147
    %s164 = sphi 0, %s148
    %s170 = sphi 0, %s172
    %s173 = sphi 0, %s170
    %s174 = sphi 0, %s173
    %s190 = sphi 0, %s174
    %s196 = sphi 0, %s198
    %s199 = sphi 0, %s196
    %s200 = sphi 0, %s199
    %s216 = sphi 0, %s200
    %s222 = sphi 0, %s224
    %s225 = sphi 0, %s222
    %s226 = sphi 0, %s225
    %s242 = sphi 0, %s226
    %s248 = sphi 0, %s250
    %s251 = sphi 0, %s248
    %s252 = sphi 0, %s251
    %s268 = sphi 0, %s252
    %s274 = sphi 0, %s276
    %s277 = sphi 0, %s274
    %s278 = sphi 0, %s277
    %s294 = sphi 0, %s278
    %s300 = sphi 0, %s302
    %s303 = sphi 0, %s300
    %s304 = sphi 0, %s303
    %s320 = sphi 0, %s304
    %s326 = sphi 0, %s328
    %s329 = sphi 0, %s326
    %s330 = sphi 0, %s329
    %s346 = sphi 0, %s330
    %s352 = sphi 0, %s354
    %s355 = sphi 0, %s352
    %s356 = sphi 0, %s355
    %s372 = sphi 0, %s356
  $region4: #{transformer_forward.3} parent=0 // loop_header_branch
    %21 = sbr.rel (%p19) target = $region8
  $region5: #{transformer_forward.3} parent=0 // loop_body
    %s23 = ssub.s32 %s18, 1
    %s24 = ssub.s32 %s18, 2
    %s31 = sadd.s32 1, %s26
    %p32 = scmp.ge.s32.totalorder %s31, 2
    %s33 = scalar_select %p32, 0, %s31
    %s34 = sadd.s32 1, %s25
    %s35 = scalar_select %p32, %s34, %s25
    %p36 = scmp.ge.s32.totalorder %s35, 2
    %s37 = scalar_select %p36, 0, %s35
    %s38 = ssub.s32 %s25, %s37
    %p39 = scmp.eq.s32.totalorder %s38, 0
    %s41 = sadd.s32 %s40, 1
    %s42 = scalar_select %p39, %s40, %s41
    %p45 = pneg %p39
    %p46 = scmp.eq.s32.totalorder %s18, 3
    %p47 = por %p45, %p46
    %p48 = scmp.ne.s32.totalorder %s40, %s43
    %p49 = scmp.eq.s32.totalorder %s18, 0
    %p50 = por %p48, %p49
    %p51 = scmp.ne.s32.totalorder %s40, %s43
    %p52 = scmp.eq.s32.totalorder %s23, 3
    %p53 = por %p51, %p52
    %p54 = scmp.ne.s32.totalorder %s43, %s44
    %p55 = scmp.eq.s32.totalorder %s23, 0
    %p56 = por %p54, %p55
    %p57 = scmp.ne.s32.totalorder %s43, %s44
    %p58 = scmp.eq.s32.totalorder %s24, 3
    %p59 = por %p57, %p58
    %p61 = scmp.ne.s32.totalorder %s44, %s60
    %p62 = scmp.eq.s32.totalorder %s24, 0
    %p63 = por %p61, %p62
    %s64 = ssub.s32 %s26, %s33
    %p65 = scmp.eq.s32.totalorder %s64, 0
    %s67 = sadd.s32 %s66, 1
    %s68 = scalar_select %p65, %s66, %s67
    %p71 = pneg %p65
    %p72 = scmp.eq.s32.totalorder %s18, 3
    %p73 = por %p71, %p72
    %p74 = scmp.ne.s32.totalorder %s66, %s69
    %p75 = scmp.eq.s32.totalorder %s18, 0
    %p76 = por %p74, %p75
    %p77 = scmp.ne.s32.totalorder %s66, %s69
    %p78 = scmp.eq.s32.totalorder %s23, 3
    %p79 = por %p77, %p78
    %p80 = scmp.ne.s32.totalorder %s69, %s70
    %p81 = scmp.eq.s32.totalorder %s23, 0
    %p82 = por %p80, %p81
    %p83 = scmp.ne.s32.totalorder %s69, %s70
    %p84 = scmp.eq.s32.totalorder %s24, 3
    %p85 = por %p83, %p84
    %p87 = scmp.ne.s32.totalorder %s70, %s86
    %p88 = scmp.eq.s32.totalorder %s24, 0
    %p89 = por %p87, %p88
    %s90 = ssub.s32 %s26, %s33
    %p91 = scmp.eq.s32.totalorder %s90, 0
    %s93 = sadd.s32 %s92, 1
    %s94 = scalar_select %p91, %s92, %s93
    %p97 = pneg %p91
    %p98 = scmp.eq.s32.totalorder %s18, 3
    %p99 = por %p97, %p98
    %p100 = scmp.ne.s32.totalorder %s92, %s95
    %p101 = scmp.eq.s32.totalorder %s18, 0
    %p102 = por %p100, %p101
    %p103 = scmp.ne.s32.totalorder %s92, %s95
    %p104 = scmp.eq.s32.totalorder %s23, 3
    %p105 = por %p103, %p104
    %p106 = scmp.ne.s32.totalorder %s95, %s96
    %p107 = scmp.eq.s32.totalorder %s23, 0
    %p108 = por %p106, %p107
    %p109 = scmp.ne.s32.totalorder %s95, %s96
    %p110 = scmp.eq.s32.totalorder %s24, 3
    %p111 = por %p109, %p110
    %p113 = scmp.ne.s32.totalorder %s96, %s112
    %p114 = scmp.eq.s32.totalorder %s24, 0
    %p115 = por %p113, %p114
    %s116 = ssub.s32 %s26, %s33
    %p117 = scmp.eq.s32.totalorder %s116, 0
    %s119 = sadd.s32 %s118, 1
    %s120 = scalar_select %p117, %s118, %s119
    %p123 = pneg %p117
    %p124 = scmp.eq.s32.totalorder %s18, 3
    %p125 = por %p123, %p124
    %p126 = scmp.ne.s32.totalorder %s118, %s121
    %p127 = scmp.eq.s32.totalorder %s18, 0
    %p128 = por %p126, %p127
    %p129 = scmp.ne.s32.totalorder %s118, %s121
    %p130 = scmp.eq.s32.totalorder %s23, 3
    %p131 = por %p129, %p130
    %p132 = scmp.ne.s32.totalorder %s121, %s122
    %p133 = scmp.eq.s32.totalorder %s23, 0
    %p134 = por %p132, %p133
    %p135 = scmp.ne.s32.totalorder %s121, %s122
    %p136 = scmp.eq.s32.totalorder %s24, 3
    %p137 = por %p135, %p136
    %p139 = scmp.ne.s32.totalorder %s122, %s138
    %p140 = scmp.eq.s32.totalorder %s24, 0
    %p141 = por %p139, %p140
    %s142 = ssub.s32 %s26, %s33
    %p143 = scmp.eq.s32.totalorder %s142, 0
    %s145 = sadd.s32 %s144, 1
    %s146 = scalar_select %p143, %s144, %s145
    %p149 = pneg %p143
    %p150 = scmp.eq.s32.totalorder %s18, 3
    %p151 = por %p149, %p150
    %p152 = scmp.ne.s32.totalorder %s144, %s147
    %p153 = scmp.eq.s32.totalorder %s18, 0
    %p154 = por %p152, %p153
    %p155 = scmp.ne.s32.totalorder %s144, %s147
    %p156 = scmp.eq.s32.totalorder %s23, 3
    %p157 = por %p155, %p156
    %p158 = scmp.ne.s32.totalorder %s147, %s148
    %p159 = scmp.eq.s32.totalorder %s23, 0
    %p160 = por %p158, %p159
    %p161 = scmp.ne.s32.totalorder %s147, %s148
    %p162 = scmp.eq.s32.totalorder %s24, 3
    %p163 = por %p161, %p162
    %p165 = scmp.ne.s32.totalorder %s148, %s164
    %p166 = scmp.eq.s32.totalorder %s24, 0
    %p167 = por %p165, %p166
    %s168 = ssub.s32 %s26, %s33
    %p169 = scmp.eq.s32.totalorder %s168, 0
    %s171 = sadd.s32 %s170, 1
    %s172 = scalar_select %p169, %s170, %s171
    %p175 = pneg %p169
    %p176 = scmp.eq.s32.totalorder %s18, 3
    %p177 = por %p175, %p176
    %p178 = scmp.ne.s32.totalorder %s170, %s173
    %p179 = scmp.eq.s32.totalorder %s18, 0
    %p180 = por %p178, %p179
    %p181 = scmp.ne.s32.totalorder %s170, %s173
    %p182 = scmp.eq.s32.totalorder %s23, 3
    %p183 = por %p181, %p182
    %p184 = scmp.ne.s32.totalorder %s173, %s174
    %p185 = scmp.eq.s32.totalorder %s23, 0
    %p186 = por %p184, %p185
    %p187 = scmp.ne.s32.totalorder %s173, %s174
    %p188 = scmp.eq.s32.totalorder %s24, 3
    %p189 = por %p187, %p188
    %p191 = scmp.ne.s32.totalorder %s174, %s190
    %p192 = scmp.eq.s32.totalorder %s24, 0
    %p193 = por %p191, %p192
    %s194 = ssub.s32 %s26, %s33
    %p195 = scmp.eq.s32.totalorder %s194, 0
    %s197 = sadd.s32 %s196, 1
    %s198 = scalar_select %p195, %s196, %s197
    %p201 = pneg %p195
    %p202 = scmp.eq.s32.totalorder %s18, 3
    %p203 = por %p201, %p202
    %p204 = scmp.ne.s32.totalorder %s196, %s199
    %p205 = scmp.eq.s32.totalorder %s18, 0
    %p206 = por %p204, %p205
    %p207 = scmp.ne.s32.totalorder %s196, %s199
    %p208 = scmp.eq.s32.totalorder %s23, 3
    %p209 = por %p207, %p208
    %p210 = scmp.ne.s32.totalorder %s199, %s200
    %p211 = scmp.eq.s32.totalorder %s23, 0
    %p212 = por %p210, %p211
    %p213 = scmp.ne.s32.totalorder %s199, %s200
    %p214 = scmp.eq.s32.totalorder %s24, 3
    %p215 = por %p213, %p214
    %p217 = scmp.ne.s32.totalorder %s200, %s216
    %p218 = scmp.eq.s32.totalorder %s24, 0
    %p219 = por %p217, %p218
    %s220 = ssub.s32 %s26, %s33
    %p221 = scmp.eq.s32.totalorder %s220, 0
    %s223 = sadd.s32 %s222, 1
    %s224 = scalar_select %p221, %s222, %s223
    %p227 = pneg %p221
    %p228 = scmp.eq.s32.totalorder %s18, 3
    %p229 = por %p227, %p228
    %p230 = scmp.ne.s32.totalorder %s222, %s225
    %p231 = scmp.eq.s32.totalorder %s18, 0
    %p232 = por %p230, %p231
    %p233 = scmp.ne.s32.totalorder %s222, %s225
    %p234 = scmp.eq.s32.totalorder %s23, 3
    %p235 = por %p233, %p234
    %p236 = scmp.ne.s32.totalorder %s225, %s226
    %p237 = scmp.eq.s32.totalorder %s23, 0
    %p238 = por %p236, %p237
    %p239 = scmp.ne.s32.totalorder %s225, %s226
    %p240 = scmp.eq.s32.totalorder %s24, 3
    %p241 = por %p239, %p240
    %p243 = scmp.ne.s32.totalorder %s226, %s242
    %p244 = scmp.eq.s32.totalorder %s24, 0
    %p245 = por %p243, %p244
    %s246 = ssub.s32 %s26, %s33
    %p247 = scmp.eq.s32.totalorder %s246, 0
    %s249 = sadd.s32 %s248, 1
    %s250 = scalar_select %p247, %s248, %s249
    %p253 = pneg %p247
    %p254 = scmp.eq.s32.totalorder %s18, 3
    %p255 = por %p253, %p254
    %p256 = scmp.ne.s32.totalorder %s248, %s251
    %p257 = scmp.eq.s32.totalorder %s18, 0
    %p258 = por %p256, %p257
    %p259 = scmp.ne.s32.totalorder %s248, %s251
    %p260 = scmp.eq.s32.totalorder %s23, 3
    %p261 = por %p259, %p260
    %p262 = scmp.ne.s32.totalorder %s251, %s252
    %p263 = scmp.eq.s32.totalorder %s23, 0
    %p264 = por %p262, %p263
    %p265 = scmp.ne.s32.totalorder %s251, %s252
    %p266 = scmp.eq.s32.totalorder %s24, 3
    %p267 = por %p265, %p266
    %p269 = scmp.ne.s32.totalorder %s252, %s268
    %p270 = scmp.eq.s32.totalorder %s24, 0
    %p271 = por %p269, %p270
    %s272 = ssub.s32 %s26, %s33
    %p273 = scmp.eq.s32.totalorder %s272, 0
    %s275 = sadd.s32 %s274, 1
    %s276 = scalar_select %p273, %s274, %s275
    %p279 = pneg %p273
    %p280 = scmp.eq.s32.totalorder %s18, 3
    %p281 = por %p279, %p280
    %p282 = scmp.ne.s32.totalorder %s274, %s277
    %p283 = scmp.eq.s32.totalorder %s18, 0
    %p284 = por %p282, %p283
    %p285 = scmp.ne.s32.totalorder %s274, %s277
    %p286 = scmp.eq.s32.totalorder %s23, 3
    %p287 = por %p285, %p286
    %p288 = scmp.ne.s32.totalorder %s277, %s278
    %p289 = scmp.eq.s32.totalorder %s23, 0
    %p290 = por %p288, %p289
    %p291 = scmp.ne.s32.totalorder %s277, %s278
    %p292 = scmp.eq.s32.totalorder %s24, 3
    %p293 = por %p291, %p292
    %p295 = scmp.ne.s32.totalorder %s278, %s294
    %p296 = scmp.eq.s32.totalorder %s24, 0
    %p297 = por %p295, %p296
    %s298 = ssub.s32 %s26, %s33
    %p299 = scmp.eq.s32.totalorder %s298, 0
    %s301 = sadd.s32 %s300, 1
    %s302 = scalar_select %p299, %s300, %s301
    %p305 = pneg %p299
    %p306 = scmp.eq.s32.totalorder %s18, 3
    %p307 = por %p305, %p306
    %p308 = scmp.ne.s32.totalorder %s300, %s303
    %p309 = scmp.eq.s32.totalorder %s18, 0
    %p310 = por %p308, %p309
    %p311 = scmp.ne.s32.totalorder %s300, %s303
    %p312 = scmp.eq.s32.totalorder %s23, 3
    %p313 = por %p311, %p312
    %p314 = scmp.ne.s32.totalorder %s303, %s304
    %p315 = scmp.eq.s32.totalorder %s23, 0
    %p316 = por %p314, %p315
    %p317 = scmp.ne.s32.totalorder %s303, %s304
    %p318 = scmp.eq.s32.totalorder %s24, 3
    %p319 = por %p317, %p318
    %p321 = scmp.ne.s32.totalorder %s304, %s320
    %p322 = scmp.eq.s32.totalorder %s24, 0
    %p323 = por %p321, %p322
    %s324 = ssub.s32 %s26, %s33
    %p325 = scmp.eq.s32.totalorder %s324, 0
    %s327 = sadd.s32 %s326, 1
    %s328 = scalar_select %p325, %s326, %s327
    %p331 = pneg %p325
    %p332 = scmp.eq.s32.totalorder %s18, 3
    %p333 = por %p331, %p332
    %p334 = scmp.ne.s32.totalorder %s326, %s329
    %p335 = scmp.eq.s32.totalorder %s18, 0
    %p336 = por %p334, %p335
    %p337 = scmp.ne.s32.totalorder %s326, %s329
    %p338 = scmp.eq.s32.totalorder %s23, 3
    %p339 = por %p337, %p338
    %p340 = scmp.ne.s32.totalorder %s329, %s330
    %p341 = scmp.eq.s32.totalorder %s23, 0
    %p342 = por %p340, %p341
    %p343 = scmp.ne.s32.totalorder %s329, %s330
    %p344 = scmp.eq.s32.totalorder %s24, 3
    %p345 = por %p343, %p344
    %p347 = scmp.ne.s32.totalorder %s330, %s346
    %p348 = scmp.eq.s32.totalorder %s24, 0
    %p349 = por %p347, %p348
    %s350 = ssub.s32 %s25, %s37
    %p351 = scmp.eq.s32.totalorder %s350, 0
    %s353 = sadd.s32 %s352, 1
    %s354 = scalar_select %p351, %s352, %s353
    %p357 = pneg %p351
    %p358 = scmp.eq.s32.totalorder %s18, 3
    %p359 = por %p357, %p358
    %p360 = scmp.ne.s32.totalorder %s352, %s355
    %p361 = scmp.eq.s32.totalorder %s18, 0
    %p362 = por %p360, %p361
    %p363 = scmp.ne.s32.totalorder %s352, %s355
    %p364 = scmp.eq.s32.totalorder %s23, 3
    %p365 = por %p363, %p364
    %p366 = scmp.ne.s32.totalorder %s355, %s356
    %p367 = scmp.eq.s32.totalorder %s23, 0
    %p368 = por %p366, %p367
    %p369 = scmp.ne.s32.totalorder %s355, %s356
    %p370 = scmp.eq.s32.totalorder %s24, 3
    %p371 = por %p369, %p370
    %p373 = scmp.ne.s32.totalorder %s356, %s372
    %p374 = scmp.eq.s32.totalorder %s24, 0
    %p375 = por %p373, %p374
    %p376 = scmp.le.s32.totalorder 1, %s18
    %p377 = scmp.lt.s32.totalorder %s18, 5
    %p378 = pnand %p376, %p377
    %p379 = pneg %p378
    // Predicated region
    $region9: #{transformer_forward.3} parent=5 // pred_check
      _
    $region10: #{transformer_forward.3} parent=5 // pred_check_branch
      %381 = sbr.rel (%p378) target = $region12
    $region11: #{transformer_forward.3} parent=5 // pred_region
      %s382 = ssub.s32 %s18, 1
    $region12: #{transformer_forward.3} parent=5 // pred_fallthru
      _
    %p383 = scmp.lt.s32.totalorder %s18, 4
    // Predicated region
    $region13: #{transformer_forward.3} parent=5 // pred_check
      %p384 = pneg %p383
    $region14: #{transformer_forward.3} parent=5 // pred_check_branch
      %386 = sbr.rel (%p384) target = $region16
    $region15: #{transformer_forward.3} parent=5 // pred_region
      // Predicated region
      $region17: #{transformer_forward.3} parent=15 // pred_check
        %p387 = pneg %p50
      $region18: #{transformer_forward.3} parent=15 // pred_check_branch
        %389 = sbr.rel (%p387) target = $region20
      $region19: #{transformer_forward.3} parent=15 // pred_region
        %p390 = scmp.lt.s32.totalorder %s25, 1
        %s391 = scalar_select %p390, %s25, 1
        %s392 = smul.addr %s391, 8
        %s393 = scalar_lea.vmem %s0, %s392
      $region20: #{transformer_forward.3} parent=15 // pred_fallthru
        _
      // Predicated region
      $region21: #{transformer_forward.3} parent=15 // pred_check
        %p394 = pneg %p76
      $region22: #{transformer_forward.3} parent=15 // pred_check_branch
        %396 = sbr.rel (%p394) target = $region24
      $region23: #{transformer_forward.3} parent=15 // pred_region
        %p397 = scmp.lt.s32.totalorder %s26, 1
        %s398 = scalar_select %p397, %s26, 1
        %s399 = smul.addr %s398, 4
        %s400 = smul.addr %s399, 4
        %s401 = scalar_lea.vmem %s1, %s400
      $region24: #{transformer_forward.3} parent=15 // pred_fallthru
        _
      // Predicated region
      $region25: #{transformer_forward.3} parent=15 // pred_check
        %p402 = pneg %p102
      $region26: #{transformer_forward.3} parent=15 // pred_check_branch
        %404 = sbr.rel (%p402) target = $region28
      $region27: #{transformer_forward.3} parent=15 // pred_region
        %p405 = scmp.lt.s32.totalorder %s26, 1
        %s406 = scalar_select %p405, %s26, 1
        %s407 = smul.addr %s406, 4
        %s408 = smul.addr %s407, 4
        %s409 = scalar_lea.vmem %s2, %s408
      $region28: #{transformer_forward.3} parent=15 // pred_fallthru
        _
      // Predicated region
      $region29: #{transformer_forward.3} parent=15 // pred_check
        %p410 = pneg %p128
      $region30: #{transformer_forward.3} parent=15 // pred_check_branch
        %412 = sbr.rel (%p410) target = $region32
      $region31: #{transformer_forward.3} parent=15 // pred_region
        %p413 = scmp.lt.s32.totalorder %s26, 1
        %s414 = scalar_select %p413, %s26, 1
        %s415 = scalar_lea.vmem %s3, %s414
      $region32: #{transformer_forward.3} parent=15 // pred_fallthru
        _
      // Predicated region
      $region33: #{transformer_forward.3} parent=15 // pred_check
        %p416 = pneg %p154
      $region34: #{transformer_forward.3} parent=15 // pred_check_branch
        %418 = sbr.rel (%p416) target = $region36
      $region35: #{transformer_forward.3} parent=15 // pred_region
        %p419 = scmp.lt.s32.totalorder %s26, 1
        %s420 = scalar_select %p419, %s26, 1
        %s421 = scalar_lea.vmem %s4, %s420
      $region36: #{transformer_forward.3} parent=15 // pred_fallthru
        _
      // Predicated region
      $region37: #{transformer_forward.3} parent=15 // pred_check
        %p422 = pneg %p180
      $region38: #{transformer_forward.3} parent=15 // pred_check_branch
        %424 = sbr.rel (%p422) target = $region40
      $region39: #{transformer_forward.3} parent=15 // pred_region
        %p425 = scmp.lt.s32.totalorder %s26, 1
        %s426 = scalar_select %p425, %s26, 1
        %s427 = scalar_lea.vmem %s5, %s426
      $region40: #{transformer_forward.3} parent=15 // pred_fallthru
        _
      // Predicated region
      $region41: #{transformer_forward.3} parent=15 // pred_check
        %p428 = pneg %p206
      $region42: #{transformer_forward.3} parent=15 // pred_check_branch
        %430 = sbr.rel (%p428) target = $region44
      $region43: #{transformer_forward.3} parent=15 // pred_region
        %p431 = scmp.lt.s32.totalorder %s26, 1
        %s432 = scalar_select %p431, %s26, 1
        %s433 = smul.addr %s432, 4
        %s434 = smul.addr %s433, 4
        %s435 = scalar_lea.vmem %s6, %s434
      $region44: #{transformer_forward.3} parent=15 // pred_fallthru
        _
      // Predicated region
      $region45: #{transformer_forward.3} parent=15 // pred_check
        %p436 = pneg %p232
      $region46: #{transformer_forward.3} parent=15 // pred_check_branch
        %438 = sbr.rel (%p436) target = $region48
      $region47: #{transformer_forward.3} parent=15 // pred_region
        %p439 = scmp.lt.s32.totalorder %s26, 1
        %s440 = scalar_select %p439, %s26, 1
        %s441 = scalar_lea.vmem %s7, %s440
      $region48: #{transformer_forward.3} parent=15 // pred_fallthru
        _
      // Predicated region
      $region49: #{transformer_forward.3} parent=15 // pred_check
        %p442 = pneg %p258
      $region50: #{transformer_forward.3} parent=15 // pred_check_branch
        %444 = sbr.rel (%p442) target = $region52
      $region51: #{transformer_forward.3} parent=15 // pred_region
        %p445 = scmp.lt.s32.totalorder %s26, 1
        %s446 = scalar_select %p445, %s26, 1
        %s447 = smul.addr %s446, 8
        %s448 = smul.addr %s447, 4
        %s449 = scalar_lea.vmem %s8, %s448
      $region52: #{transformer_forward.3} parent=15 // pred_fallthru
        _
      // Predicated region
      $region53: #{transformer_forward.3} parent=15 // pred_check
        %p450 = pneg %p284
      $region54: #{transformer_forward.3} parent=15 // pred_check_branch
        %452 = sbr.rel (%p450) target = $region56
      $region55: #{transformer_forward.3} parent=15 // pred_region
        %p453 = scmp.lt.s32.totalorder %s26, 1
        %s454 = scalar_select %p453, %s26, 1
        %s455 = scalar_lea.vmem %s9, %s454
      $region56: #{transformer_forward.3} parent=15 // pred_fallthru
        _
      // Predicated region
      $region57: #{transformer_forward.3} parent=15 // pred_check
        %p456 = pneg %p310
      $region58: #{transformer_forward.3} parent=15 // pred_check_branch
        %458 = sbr.rel (%p456) target = $region60
      $region59: #{transformer_forward.3} parent=15 // pred_region
        %p459 = scmp.lt.s32.totalorder %s26, 1
        %s460 = scalar_select %p459, %s26, 1
        %s461 = scalar_lea.vmem %s10, %s460
      $region60: #{transformer_forward.3} parent=15 // pred_fallthru
        _
      // Predicated region
      $region61: #{transformer_forward.3} parent=15 // pred_check
        %p462 = pneg %p336
      $region62: #{transformer_forward.3} parent=15 // pred_check_branch
        %464 = sbr.rel (%p462) target = $region64
      $region63: #{transformer_forward.3} parent=15 // pred_region
        %p465 = scmp.lt.s32.totalorder %s26, 1
        %s466 = scalar_select %p465, %s26, 1
        %s467 = scalar_lea.vmem %s11, %s466
      $region64: #{transformer_forward.3} parent=15 // pred_fallthru
        _
    $region16: #{transformer_forward.3} parent=5 // pred_fallthru
      _
    %p468 = scmp.le.s32.totalorder 1, %s18
    %p469 = scmp.lt.s32.totalorder %s18, 5
    %p470 = pnand %p468, %p469
    %p471 = pneg %p470
    // Predicated region
    $region65: #{transformer_forward.3} parent=5 // pred_check
      _
    $region66: #{transformer_forward.3} parent=5 // pred_check_branch
      %473 = sbr.rel (%p470) target = $region68
    $region67: #{transformer_forward.3} parent=5 // pred_region
      %s474 = ssub.s32 %s18, 1
      %p475 = scmp.lt.s32.totalorder %s27, 1
      %s476 = scalar_select %p475, %s27, 1
      %s477 = smul.addr %s476, 8
      %s478 = scalar_lea.vmem %s0, %s477
      %p479 = pneg %p56
      %p480 = pneg %p53
      %p481 = scmp.lt.s32.totalorder %s28, 1
      %s482 = scalar_select %p481, %s28, 1
      %s483 = smul.addr %s482, 4
      %s484 = smul.addr %s483, 4
      %s485 = scalar_lea.vmem %s1, %s484
      %p486 = pneg %p82
      %p487 = pneg %p79
      %p488 = scmp.lt.s32.totalorder %s28, 1
      %s489 = scalar_select %p488, %s28, 1
      %s490 = smul.addr %s489, 4
      %s491 = smul.addr %s490, 4
      %s492 = scalar_lea.vmem %s2, %s491
      %p493 = pneg %p108
      %p494 = pneg %p105
      %p495 = scmp.lt.s32.totalorder %s28, 1
      %s496 = scalar_select %p495, %s28, 1
      %s497 = scalar_lea.vmem %s3, %s496
      %p498 = pneg %p134
      %p499 = pneg %p131
      %p500 = scmp.lt.s32.totalorder %s28, 1
      %s501 = scalar_select %p500, %s28, 1
      %s502 = scalar_lea.vmem %s4, %s501
      %p503 = pneg %p160
      %p504 = pneg %p157
      %p505 = scmp.lt.s32.totalorder %s28, 1
      %s506 = scalar_select %p505, %s28, 1
      %s507 = scalar_lea.vmem %s5, %s506
      %p508 = pneg %p186
      %p509 = pneg %p183
      %p510 = scmp.lt.s32.totalorder %s28, 1
      %s511 = scalar_select %p510, %s28, 1
      %s512 = smul.addr %s511, 4
      %s513 = smul.addr %s512, 4
      %s514 = scalar_lea.vmem %s6, %s513
      %p515 = pneg %p212
      %p516 = pneg %p209
      %p517 = scmp.lt.s32.totalorder %s28, 1
      %s518 = scalar_select %p517, %s28, 1
      %s519 = scalar_lea.vmem %s7, %s518
      %p520 = pneg %p238
      %p521 = pneg %p235
      %p522 = scmp.lt.s32.totalorder %s28, 1
      %s523 = scalar_select %p522, %s28, 1
      %s524 = smul.addr %s523, 8
      %s525 = smul.addr %s524, 4
      %s526 = scalar_lea.vmem %s8, %s525
      %p527 = pneg %p264
      %p528 = pneg %p261
      %p529 = scmp.lt.s32.totalorder %s28, 1
      %s530 = scalar_select %p529, %s28, 1
      %s531 = scalar_lea.vmem %s9, %s530
      %p532 = pneg %p290
      %p533 = pneg %p287
      %p534 = scmp.lt.s32.totalorder %s28, 1
      %s535 = scalar_select %p534, %s28, 1
      %s536 = scalar_lea.vmem %s10, %s535
      %p537 = pneg %p316
      %p538 = pneg %p313
      %p539 = scmp.lt.s32.totalorder %s28, 1
      %s540 = scalar_select %p539, %s28, 1
      %s541 = scalar_lea.vmem %s11, %s540
      %p542 = pneg %p342
      %p543 = pneg %p339
      %p544 = pneg %p368
      %p545 = pneg %p365
      %p546 = scmp.lt.s32.totalorder %s27, 1
      %s547 = scalar_select %p546, %s27, 1
      %s548 = smul.addr %s547, 8
      %s549 = scalar_lea.vmem %s12, %s548
      %p550 = scmp.lt.s32.totalorder %s27, 1
      %s551 = scalar_select %p550, %s27, 1
      %s552 = smul.addr %s551, 8
      %s553 = scalar_lea.vmem %s0, %s552
      %p554 = scmp.lt.s32.totalorder %s28, 1
      %s555 = scalar_select %p554, %s28, 1
      %s556 = smul.addr %s555, 4
      %s557 = smul.addr %s556, 4
      %s558 = scalar_lea.vmem %s1, %s557
      %p559 = scmp.lt.s32.totalorder %s28, 1
      %s560 = scalar_select %p559, %s28, 1
      %s561 = smul.addr %s560, 4
      %s562 = smul.addr %s561, 4
      %s563 = scalar_lea.vmem %s2, %s562
      %p564 = scmp.lt.s32.totalorder %s28, 1
      %s565 = scalar_select %p564, %s28, 1
      %s566 = scalar_lea.vmem %s3, %s565
      %p567 = scmp.lt.s32.totalorder %s28, 1
      %s568 = scalar_select %p567, %s28, 1
      %s569 = scalar_lea.vmem %s4, %s568
      %p570 = scmp.lt.s32.totalorder %s28, 1
      %s571 = scalar_select %p570, %s28, 1
      %s572 = scalar_lea.vmem %s5, %s571
      %p573 = scmp.lt.s32.totalorder %s28, 1
      %s574 = scalar_select %p573, %s28, 1
      %s575 = smul.addr %s574, 4
      %s576 = smul.addr %s575, 4
      %s577 = scalar_lea.vmem %s6, %s576
      %p578 = scmp.lt.s32.totalorder %s28, 1
      %s579 = scalar_select %p578, %s28, 1
      %s580 = scalar_lea.vmem %s7, %s579
      %p581 = scmp.lt.s32.totalorder %s28, 1
      %s582 = scalar_select %p581, %s28, 1
      %s583 = smul.addr %s582, 8
      %s584 = smul.addr %s583, 4
      %s585 = scalar_lea.vmem %s8, %s584
      %p586 = scmp.lt.s32.totalorder %s28, 1
      %s587 = scalar_select %p586, %s28, 1
      %s588 = scalar_lea.vmem %s9, %s587
      %p589 = scmp.lt.s32.totalorder %s28, 1
      %s590 = scalar_select %p589, %s28, 1
      %s591 = scalar_lea.vmem %s10, %s590
      %p592 = scmp.lt.s32.totalorder %s28, 1
      %s593 = scalar_select %p592, %s28, 1
      %s594 = scalar_lea.vmem %s11, %s593
      %p595 = scmp.lt.s32.totalorder %s27, 1
      %s596 = scalar_select %p595, %s27, 1
      %s597 = smul.addr %s596, 8
      %s598 = scalar_lea.vmem %s12, %s597
      %p600 = scmp.eq.s32.totalorder %s28, 0
      // Predicated region
      $region69: #{transformer_forward.3} parent=67 // pred_check
        %p601 = pneg %p600
      $region70: #{transformer_forward.3} parent=67 // pred_check_branch
        %603 = sbr.rel (%p601) target = $region72
      $region71: #{transformer_forward.3} parent=67 // pred_region
        %v604 = vld [vmem:[%s553] sm:$0xff]
        %vm605 = vcmask 261120
        %606 = vst.msk [vmem:[%s598] sm:$0xff] %vm605, %v604
      $region72: #{transformer_forward.3} parent=67 // pred_fallthru
        _
      %v607 = vld [vmem:[%s598] sm:$0xff]
      %v608 = vld [vmem:[%s558] sm:$0xf]
      %v609 = vld [vmem:[%s558 + $0x4] sm:$0xf]
      %v610 = vld [vmem:[%s558 + $0x8] sm:$0xf]
      %v611 = vld [vmem:[%s558 + $0xc] sm:$0xf]
      %v612 = vld [vmem:[%s563] sm:$0xf]
      %v613 = vld [vmem:[%s563 + $0x4] sm:$0xf]
      %v614 = vld [vmem:[%s563 + $0x8] sm:$0xf]
      %v615 = vld [vmem:[%s563 + $0xc] sm:$0xf]
      %v616 = vld [vmem:[%s566] sm:$0x1]
      %v617 = vpack.c.bf16 %v607, %v607
      %v622 = vunpack.c.l.b16 %v608
      %v623 = vunpack.c.l.b16 %v609
      %v624 = vunpack.c.l.b16 %v610
      %v625 = vunpack.c.l.b16 %v611
      %v626 = vpack.c.b16 %v623, %v622
      %v627 = vpack.c.b16 %v625, %v624
      %vm630 = vcmask 261120
      %v632 = vsel %vm630, %v617, 0
      %634 = vmatprep.subr.bf16.mxu0 0
      %635 = vmatpush1.bf16.msra.mxu0 %v626
      %636 = vmatprep.subr.bf16.mxu0 0
      %637 = vmatpush1.bf16.msra.mxu0 %v627
      %638 = vmatprep.subr.bf16.mxu0 0
      %639 = vmatpush1.bf16.msra.mxu0 0
      %640 = vmatprep.subr.bf16.mxu0 0
      %641 = vmatpush1.bf16.msra.mxu0 0
      %642 = vmatprep.subr.bf16.mxu0 0
      %643 = vmatpush1.bf16.msra.mxu0 0
      %644 = vmatprep.subr.bf16.mxu0 0
      %645 = vmatpush1.bf16.msra.mxu0 0
      %646 = vmatprep.subr.bf16.mxu0 0
      %647 = vmatpush1.bf16.msra.mxu0 0
      %648 = vmatprep.subr.bf16.mxu0 0
      %649 = vmatpush1.bf16.msra.mxu0 0
      %650 = vmatprep.subr.bf16.mxu0 0
      %651 = vmatpush1.bf16.msra.mxu0 0
      %652 = vmatprep.subr.bf16.mxu0 0
      %653 = vmatpush1.bf16.msra.mxu0 0
      %654 = vmatprep.subr.bf16.mxu0 0
      %655 = vmatpush1.bf16.msra.mxu0 0
      %656 = vmatprep.subr.bf16.mxu0 0
      %657 = vmatpush1.bf16.msra.mxu0 0
      %658 = vmatprep.subr.bf16.mxu0 0
      %659 = vmatpush1.bf16.msra.mxu0 0
      %660 = vmatprep.subr.bf16.mxu0 0
      %661 = vmatpush1.bf16.msra.mxu0 0
      %662 = vmatprep.subr.bf16.mxu0 0
      %663 = vmatpush1.bf16.msra.mxu0 0
      %664 = vmatprep.subr.bf16.mxu0 0
      %665 = vmatpush1.bf16.msra.mxu0 0
      %666 = vmatprep.mubr.bf16.mxu0 0
      %667 = vmatmul.mubr.bf16.gmra.mrb[0].mxu0 %v632
      %v668 = vpop.f32.mrb[0].mxu0
      %v669 = vadd.f32 0.0, %v668
      %v670 = vpop.f32.mrb[0].mxu0
      %v671 = vpop.f32.mrb[0].mxu0
      %v672 = vpop.f32.mrb[0].mxu0
      %673 = vdwg.mxu0
      %v674 = vpack.c.bf16 %v669, %v669
      %676 = vrot.lane.b32.xlu0 %v674, 96
      %v677 = vpop.permute.xlu0 %676
      %vm678 = vcmask 64512
      %v680 = vsel %vm678, %v674, 0
      %v683 = vsel %vm678, %v677, 0
      %685 = vmatprep.subr.bf16.mxu0 0
      %686 = vmatpush1.bf16.xpose.msra.mxu0 %v683
      %687 = vmatprep.subr.bf16.mxu0 0
      %688 = vmatpush1.bf16.xpose.msra.mxu0 0
      %689 = vmatprep.subr.bf16.mxu0 0
      %690 = vmatpush1.bf16.xpose.msra.mxu0 0
      %691 = vmatprep.subr.bf16.mxu0 0
      %692 = vmatpush1.bf16.xpose.msra.mxu0 0
      %693 = vmatprep.subr.bf16.mxu0 0
      %694 = vmatpush1.bf16.xpose.msra.mxu0 0
      %695 = vmatprep.subr.bf16.mxu0 0
      %696 = vmatpush1.bf16.xpose.msra.mxu0 0
      %697 = vmatprep.subr.bf16.mxu0 0
      %698 = vmatpush1.bf16.xpose.msra.mxu0 0
      %699 = vmatprep.subr.bf16.mxu0 0
      %700 = vmatpush1.bf16.xpose.msra.mxu0 0
      %701 = vmatprep.subr.bf16.mxu0 0
      %702 = vmatpush1.bf16.xpose.msra.mxu0 0
      %703 = vmatprep.subr.bf16.mxu0 0
      %704 = vmatpush1.bf16.xpose.msra.mxu0 0
      %705 = vmatprep.subr.bf16.mxu0 0
      %706 = vmatpush1.bf16.xpose.msra.mxu0 0
      %707 = vmatprep.subr.bf16.mxu0 0
      %708 = vmatpush1.bf16.xpose.msra.mxu0 0
      %709 = vmatprep.subr.bf16.mxu0 0
      %710 = vmatpush1.bf16.xpose.msra.mxu0 0
      %711 = vmatprep.subr.bf16.mxu0 0
      %712 = vmatpush1.bf16.xpose.msra.mxu0 0
      %713 = vmatprep.subr.bf16.mxu0 0
      %714 = vmatpush1.bf16.xpose.msra.mxu0 0
      %715 = vmatprep.subr.bf16.mxu0 0
      %716 = vmatpush1.bf16.xpose.msra.mxu0 0
      %717 = vmatprep.mubr.bf16.mxu0 0
      %718 = vmatmul.mubr.bf16.gmra.mrb[0].mxu0 %v680
      %v719 = vpop.f32.mrb[0].mxu0
      %v720 = vadd.f32 0.0, %v719
      %v721 = vpop.f32.mrb[0].mxu0
      %v722 = vpop.f32.mrb[0].mxu0
      %v723 = vpop.f32.mrb[0].mxu0
      %724 = vdwg.mxu0
      %v725 = vsel %vm678, %v720, -inf
      %726 = vmax.xlane.f32.xlu0 %v725
      %v727 = vpop.xlane.xlu0 %726
      %v728 = vsub.f32 %v720, %v727
      %v729 = vmul.f32 %v728, 1.442695
      %v730 = vpow.pop %v729
      %v731 = vsel %vm678, %v730, 0.0
      %732 = vadd.xlane.f32.xlu0 %v731
      %v733 = vpop.xlane.xlu0 %732
      %v734 = vrcp.pop %v733
      %v735 = vmul.f32 %v730, %v734
      %v736 = vpack.c.bf16 %v735, %v735
      %737 = vrot.lane.b32.xlu0 %v674, 64
      %v738 = vpop.permute.xlu0 %737
      %v740 = vsel %vm678, %v736, 0
      %vm742 = vcmask 1043456
      %v744 = vsel %vm742, %v738, 0
      %746 = vmatprep.subr.bf16.mxu0 0
      %747 = vmatpush1.bf16.msra.mxu0 %v744
      %748 = vmatprep.subr.bf16.mxu0 0
      %749 = vmatpush1.bf16.msra.mxu0 0
      %750 = vmatprep.subr.bf16.mxu0 0
      %751 = vmatpush1.bf16.msra.mxu0 0
      %752 = vmatprep.subr.bf16.mxu0 0
      %753 = vmatpush1.bf16.msra.mxu0 0
      %754 = vmatprep.subr.bf16.mxu0 0
      %755 = vmatpush1.bf16.msra.mxu0 0
      %756 = vmatprep.subr.bf16.mxu0 0
      %757 = vmatpush1.bf16.msra.mxu0 0
      %758 = vmatprep.subr.bf16.mxu0 0
      %759 = vmatpush1.bf16.msra.mxu0 0
      %760 = vmatprep.subr.bf16.mxu0 0
      %761 = vmatpush1.bf16.msra.mxu0 0
      %762 = vmatprep.subr.bf16.mxu0 0
      %763 = vmatpush1.bf16.msra.mxu0 0
      %764 = vmatprep.subr.bf16.mxu0 0
      %765 = vmatpush1.bf16.msra.mxu0 0
      %766 = vmatprep.subr.bf16.mxu0 0
      %767 = vmatpush1.bf16.msra.mxu0 0
      %768 = vmatprep.subr.bf16.mxu0 0
      %769 = vmatpush1.bf16.msra.mxu0 0
      %770 = vmatprep.subr.bf16.mxu0 0
      %771 = vmatpush1.bf16.msra.mxu0 0
      %772 = vmatprep.subr.bf16.mxu0 0
      %773 = vmatpush1.bf16.msra.mxu0 0
      %774 = vmatprep.subr.bf16.mxu0 0
      %775 = vmatpush1.bf16.msra.mxu0 0
      %776 = vmatprep.subr.bf16.mxu0 0
      %777 = vmatpush1.bf16.msra.mxu0 0
      %778 = vmatprep.mubr.bf16.mxu0 0
      %779 = vmatmul.mubr.bf16.gmra.mrb[0].mxu0 %v740
      %v780 = vpop.f32.mrb[0].mxu0
      %v781 = vadd.f32 0.0, %v780
      %v782 = vpop.f32.mrb[0].mxu0
      %v783 = vpop.f32.mrb[0].mxu0
      %v784 = vpop.f32.mrb[0].mxu0
      %785 = vdwg.mxu0
      %786 = vrot.lane.b32.xlu0 %v674, 120
      %v787 = vpop.permute.xlu0 %786
      %788 = vrot.lane.b32.xlu0 %v674, 88
      %v789 = vpop.permute.xlu0 %788
      %v791 = vsel %vm678, %v787, 0
      %v794 = vsel %vm678, %v789, 0
      %796 = vmatprep.subr.bf16.mxu0 0
      %797 = vmatpush1.bf16.xpose.msra.mxu0 %v794
      %798 = vmatprep.subr.bf16.mxu0 0
      %799 = vmatpush1.bf16.xpose.msra.mxu0 0
      %800 = vmatprep.subr.bf16.mxu0 0
      %801 = vmatpush1.bf16.xpose.msra.mxu0 0
      %802 = vmatprep.subr.bf16.mxu0 0
      %803 = vmatpush1.bf16.xpose.msra.mxu0 0
      %804 = vmatprep.subr.bf16.mxu0 0
      %805 = vmatpush1.bf16.xpose.msra.mxu0 0
      %806 = vmatprep.subr.bf16.mxu0 0
      %807 = vmatpush1.bf16.xpose.msra.mxu0 0
      %808 = vmatprep.subr.bf16.mxu0 0
      %809 = vmatpush1.bf16.xpose.msra.mxu0 0
      %810 = vmatprep.subr.bf16.mxu0 0
      %811 = vmatpush1.bf16.xpose.msra.mxu0 0
      %812 = vmatprep.subr.bf16.mxu0 0
      %813 = vmatpush1.bf16.xpose.msra.mxu0 0
      %814 = vmatprep.subr.bf16.mxu0 0
      %815 = vmatpush1.bf16.xpose.msra.mxu0 0
      %816 = vmatprep.subr.bf16.mxu0 0
      %817 = vmatpush1.bf16.xpose.msra.mxu0 0
      %818 = vmatprep.subr.bf16.mxu0 0
      %819 = vmatpush1.bf16.xpose.msra.mxu0 0
      %820 = vmatprep.subr.bf16.mxu0 0
      %821 = vmatpush1.bf16.xpose.msra.mxu0 0
      %822 = vmatprep.subr.bf16.mxu0 0
      %823 = vmatpush1.bf16.xpose.msra.mxu0 0
      %824 = vmatprep.subr.bf16.mxu0 0
      %825 = vmatpush1.bf16.xpose.msra.mxu0 0
      %826 = vmatprep.subr.bf16.mxu0 0
      %827 = vmatpush1.bf16.xpose.msra.mxu0 0
      %828 = vmatprep.mubr.bf16.mxu0 0
      %829 = vmatmul.mubr.bf16.gmra.mrb[0].mxu0 %v791
      %v830 = vpop.f32.mrb[0].mxu0
      %v831 = vadd.f32 0.0, %v830
      %v832 = vpop.f32.mrb[0].mxu0
      %v833 = vpop.f32.mrb[0].mxu0
      %v834 = vpop.f32.mrb[0].mxu0
      %835 = vdwg.mxu0
      %v836 = vsel %vm678, %v831, -inf
      %837 = vmax.xlane.f32.xlu0 %v836
      %v838 = vpop.xlane.xlu0 %837
      %v839 = vsub.f32 %v831, %v838
      %v840 = vmul.f32 %v839, 1.442695
      %v841 = vpow.pop %v840
      %v842 = vsel %vm678, %v841, 0.0
      %843 = vadd.xlane.f32.xlu0 %v842
      %v844 = vpop.xlane.xlu0 %843
      %v845 = vrcp.pop %v844
      %v846 = vmul.f32 %v841, %v845
      %v847 = vpack.c.bf16 %v846, %v846
      %848 = vrot.lane.b32.xlu0 %v674, 56
      %v849 = vpop.permute.xlu0 %848
      %v851 = vsel %vm678, %v847, 0
      %v854 = vsel %vm742, %v849, 0
      %856 = vmatprep.subr.bf16.mxu0 0
      %857 = vmatpush1.bf16.msra.mxu0 %v854
      %858 = vmatprep.subr.bf16.mxu0 0
      %859 = vmatpush1.bf16.msra.mxu0 0
      %860 = vmatprep.subr.bf16.mxu0 0
      %861 = vmatpush1.bf16.msra.mxu0 0
      %862 = vmatprep.subr.bf16.mxu0 0
      %863 = vmatpush1.bf16.msra.mxu0 0
      %864 = vmatprep.subr.bf16.mxu0 0
      %865 = vmatpush1.bf16.msra.mxu0 0
      %866 = vmatprep.subr.bf16.mxu0 0
      %867 = vmatpush1.bf16.msra.mxu0 0
      %868 = vmatprep.subr.bf16.mxu0 0
      %869 = vmatpush1.bf16.msra.mxu0 0
      %870 = vmatprep.subr.bf16.mxu0 0
      %871 = vmatpush1.bf16.msra.mxu0 0
      %872 = vmatprep.subr.bf16.mxu0 0
      %873 = vmatpush1.bf16.msra.mxu0 0
      %874 = vmatprep.subr.bf16.mxu0 0
      %875 = vmatpush1.bf16.msra.mxu0 0
      %876 = vmatprep.subr.bf16.mxu0 0
      %877 = vmatpush1.bf16.msra.mxu0 0
      %878 = vmatprep.subr.bf16.mxu0 0
      %879 = vmatpush1.bf16.msra.mxu0 0
      %880 = vmatprep.subr.bf16.mxu0 0
      %881 = vmatpush1.bf16.msra.mxu0 0
      %882 = vmatprep.subr.bf16.mxu0 0
      %883 = vmatpush1.bf16.msra.mxu0 0
      %884 = vmatprep.subr.bf16.mxu0 0
      %885 = vmatpush1.bf16.msra.mxu0 0
      %886 = vmatprep.subr.bf16.mxu0 0
      %887 = vmatpush1.bf16.msra.mxu0 0
      %888 = vmatprep.mubr.bf16.mxu0 0
      %889 = vmatmul.mubr.bf16.gmra.mrb[0].mxu0 %v851
      %v890 = vpop.f32.mrb[0].mxu0
      %v891 = vadd.f32 0.0, %v890
      %v892 = vpop.f32.mrb[0].mxu0
      %v893 = vpop.f32.mrb[0].mxu0
      %v894 = vpop.f32.mrb[0].mxu0
      %895 = vdwg.mxu0
      %896 = vrot.lane.b32.xlu0 %v674, 112
      %v897 = vpop.permute.xlu0 %896
      %898 = vrot.lane.b32.xlu0 %v674, 80
      %v899 = vpop.permute.xlu0 %898
      %v901 = vsel %vm678, %v897, 0
      %v904 = vsel %vm678, %v899, 0
      %906 = vmatprep.subr.bf16.mxu0 0
      %907 = vmatpush1.bf16.xpose.msra.mxu0 %v904
      %908 = vmatprep.subr.bf16.mxu0 0
      %909 = vmatpush1.bf16.xpose.msra.mxu0 0
      %910 = vmatprep.subr.bf16.mxu0 0
      %911 = vmatpush1.bf16.xpose.msra.mxu0 0
      %912 = vmatprep.subr.bf16.mxu0 0
      %913 = vmatpush1.bf16.xpose.msra.mxu0 0
      %914 = vmatprep.subr.bf16.mxu0 0
      %915 = vmatpush1.bf16.xpose.msra.mxu0 0
      %916 = vmatprep.subr.bf16.mxu0 0
      %917 = vmatpush1.bf16.xpose.msra.mxu0 0
      %918 = vmatprep.subr.bf16.mxu0 0
      %919 = vmatpush1.bf16.xpose.msra.mxu0 0
      %920 = vmatprep.subr.bf16.mxu0 0
      %921 = vmatpush1.bf16.xpose.msra.mxu0 0
      %922 = vmatprep.subr.bf16.mxu0 0
      %923 = vmatpush1.bf16.xpose.msra.mxu0 0
      %924 = vmatprep.subr.bf16.mxu0 0
      %925 = vmatpush1.bf16.xpose.msra.mxu0 0
      %926 = vmatprep.subr.bf16.mxu0 0
      %927 = vmatpush1.bf16.xpose.msra.mxu0 0
      %928 = vmatprep.subr.bf16.mxu0 0
      %929 = vmatpush1.bf16.xpose.msra.mxu0 0
      %930 = vmatprep.subr.bf16.mxu0 0
      %931 = vmatpush1.bf16.xpose.msra.mxu0 0
      %932 = vmatprep.subr.bf16.mxu0 0
      %933 = vmatpush1.bf16.xpose.msra.mxu0 0
      %934 = vmatprep.subr.bf16.mxu0 0
      %935 = vmatpush1.bf16.xpose.msra.mxu0 0
      %936 = vmatprep.subr.bf16.mxu0 0
      %937 = vmatpush1.bf16.xpose.msra.mxu0 0
      %938 = vmatprep.mubr.bf16.mxu0 0
      %939 = vmatmul.mubr.bf16.gmra.mrb[0].mxu0 %v901
      %v940 = vpop.f32.mrb[0].mxu0
      %v941 = vadd.f32 0.0, %v940
      %v942 = vpop.f32.mrb[0].mxu0
      %v943 = vpop.f32.mrb[0].mxu0
      %v944 = vpop.f32.mrb[0].mxu0
      %945 = vdwg.mxu0
      %v946 = vsel %vm678, %v941, -inf
      %947 = vmax.xlane.f32.xlu0 %v946
      %v948 = vpop.xlane.xlu0 %947
      %v949 = vsub.f32 %v941, %v948
      %v950 = vmul.f32 %v949, 1.442695
      %v951 = vpow.pop %v950
      %v952 = vsel %vm678, %v951, 0.0
      %953 = vadd.xlane.f32.xlu0 %v952
      %v954 = vpop.xlane.xlu0 %953
      %v955 = vrcp.pop %v954
      %v956 = vmul.f32 %v951, %v955
      %v957 = vpack.c.bf16 %v956, %v956
      %958 = vrot.lane.b32.xlu0 %v674, 48
      %v959 = vpop.permute.xlu0 %958
      %v961 = vsel %vm678, %v957, 0
      %v964 = vsel %vm742, %v959, 0
      %966 = vmatprep.subr.bf16.mxu0 0
      %967 = vmatpush1.bf16.msra.mxu0 %v964
      %968 = vmatprep.subr.bf16.mxu0 0
      %969 = vmatpush1.bf16.msra.mxu0 0
      %970 = vmatprep.subr.bf16.mxu0 0
      %971 = vmatpush1.bf16.msra.mxu0 0
      %972 = vmatprep.subr.bf16.mxu0 0
      %973 = vmatpush1.bf16.msra.mxu0 0
      %974 = vmatprep.subr.bf16.mxu0 0
      %975 = vmatpush1.bf16.msra.mxu0 0
      %976 = vmatprep.subr.bf16.mxu0 0
      %977 = vmatpush1.bf16.msra.mxu0 0
      %978 = vmatprep.subr.bf16.mxu0 0
      %979 = vmatpush1.bf16.msra.mxu0 0
      %980 = vmatprep.subr.bf16.mxu0 0
      %981 = vmatpush1.bf16.msra.mxu0 0
      %982 = vmatprep.subr.bf16.mxu0 0
      %983 = vmatpush1.bf16.msra.mxu0 0
      %984 = vmatprep.subr.bf16.mxu0 0
      %985 = vmatpush1.bf16.msra.mxu0 0
      %986 = vmatprep.subr.bf16.mxu0 0
      %987 = vmatpush1.bf16.msra.mxu0 0
      %988 = vmatprep.subr.bf16.mxu0 0
      %989 = vmatpush1.bf16.msra.mxu0 0
      %990 = vmatprep.subr.bf16.mxu0 0
      %991 = vmatpush1.bf16.msra.mxu0 0
      %992 = vmatprep.subr.bf16.mxu0 0
      %993 = vmatpush1.bf16.msra.mxu0 0
      %994 = vmatprep.subr.bf16.mxu0 0
      %995 = vmatpush1.bf16.msra.mxu0 0
      %996 = vmatprep.subr.bf16.mxu0 0
      %997 = vmatpush1.bf16.msra.mxu0 0
      %998 = vmatprep.mubr.bf16.mxu0 0
      %999 = vmatmul.mubr.bf16.gmra.mrb[0].mxu0 %v961
      %v1000 = vpop.f32.mrb[0].mxu0
      %v1001 = vadd.f32 0.0, %v1000
      %v1002 = vpop.f32.mrb[0].mxu0
      %v1003 = vpop.f32.mrb[0].mxu0
      %v1004 = vpop.f32.mrb[0].mxu0
      %1005 = vdwg.mxu0
      %1006 = vrot.lane.b32.xlu0 %v674, 104
      %v1007 = vpop.permute.xlu0 %1006
      %1008 = vrot.lane.b32.xlu0 %v674, 72
      %v1009 = vpop.permute.xlu0 %1008
      %v1011 = vsel %vm678, %v1007, 0
      %v1014 = vsel %vm678, %v1009, 0
      %1016 = vmatprep.subr.bf16.mxu0 0
      %1017 = vmatpush1.bf16.xpose.msra.mxu0 %v1014
      %1018 = vmatprep.subr.bf16.mxu0 0
      %1019 = vmatpush1.bf16.xpose.msra.mxu0 0
      %1020 = vmatprep.subr.bf16.mxu0 0
      %1021 = vmatpush1.bf16.xpose.msra.mxu0 0
      %1022 = vmatprep.subr.bf16.mxu0 0
      %1023 = vmatpush1.bf16.xpose.msra.mxu0 0
      %1024 = vmatprep.subr.bf16.mxu0 0
      %1025 = vmatpush1.bf16.xpose.msra.mxu0 0
      %1026 = vmatprep.subr.bf16.mxu0 0
      %1027 = vmatpush1.bf16.xpose.msra.mxu0 0
      %1028 = vmatprep.subr.bf16.mxu0 0
      %1029 = vmatpush1.bf16.xpose.msra.mxu0 0
      %1030 = vmatprep.subr.bf16.mxu0 0
      %1031 = vmatpush1.bf16.xpose.msra.mxu0 0
      %1032 = vmatprep.subr.bf16.mxu0 0
      %1033 = vmatpush1.bf16.xpose.msra.mxu0 0
      %1034 = vmatprep.subr.bf16.mxu0 0
      %1035 = vmatpush1.bf16.xpose.msra.mxu0 0
      %1036 = vmatprep.subr.bf16.mxu0 0
      %1037 = vmatpush1.bf16.xpose.msra.mxu0 0
      %1038 = vmatprep.subr.bf16.mxu0 0
      %1039 = vmatpush1.bf16.xpose.msra.mxu0 0
      %1040 = vmatprep.subr.bf16.mxu0 0
      %1041 = vmatpush1.bf16.xpose.msra.mxu0 0
      %1042 = vmatprep.subr.bf16.mxu0 0
      %1043 = vmatpush1.bf16.xpose.msra.mxu0 0
      %1044 = vmatprep.subr.bf16.mxu0 0
      %1045 = vmatpush1.bf16.xpose.msra.mxu0 0
      %1046 = vmatprep.subr.bf16.mxu0 0
      %1047 = vmatpush1.bf16.xpose.msra.mxu0 0
      %1048 = vmatprep.mubr.bf16.mxu0 0
      %1049 = vmatmul.mubr.bf16.gmra.mrb[0].mxu0 %v1011
      %v1050 = vpop.f32.mrb[0].mxu0
      %v1051 = vadd.f32 0.0, %v1050
      %v1052 = vpop.f32.mrb[0].mxu0
      %v1053 = vpop.f32.mrb[0].mxu0
      %v1054 = vpop.f32.mrb[0].mxu0
      %1055 = vdwg.mxu0
      %v1056 = vsel %vm678, %v1051, -inf
      %1057 = vmax.xlane.f32.xlu0 %v1056
      %v1058 = vpop.xlane.xlu0 %1057
      %v1059 = vsub.f32 %v1051, %v1058
      %v1060 = vmul.f32 %v1059, 1.442695
      %v1061 = vpow.pop %v1060
      %v1062 = vsel %vm678, %v1061, 0.0
      %1063 = vadd.xlane.f32.xlu0 %v1062
      %v1064 = vpop.xlane.xlu0 %1063
      %v1065 = vrcp.pop %v1064
      %v1066 = vmul.f32 %v1061, %v1065
      %v1067 = vpack.c.bf16 %v1066, %v1066
      %1068 = vrot.lane.b32.xlu0 %v674, 40
      %v1069 = vpop.permute.xlu0 %1068
      %v1071 = vsel %vm678, %v1067, 0
      %v1074 = vsel %vm742, %v1069, 0
      %1076 = vmatprep.subr.bf16.mxu0 0
      %1077 = vmatpush1.bf16.msra.mxu0 %v1074
      %1078 = vmatprep.subr.bf16.mxu0 0
      %1079 = vmatpush1.bf16.msra.mxu0 0
      %1080 = vmatprep.subr.bf16.mxu0 0
      %1081 = vmatpush1.bf16.msra.mxu0 0
      %1082 = vmatprep.subr.bf16.mxu0 0
      %1083 = vmatpush1.bf16.msra.mxu0 0
      %1084 = vmatprep.subr.bf16.mxu0 0
      %1085 = vmatpush1.bf16.msra.mxu0 0
      %1086 = vmatprep.subr.bf16.mxu0 0
      %1087 = vmatpush1.bf16.msra.mxu0 0
      %1088 = vmatprep.subr.bf16.mxu0 0
      %1089 = vmatpush1.bf16.msra.mxu0 0
      %1090 = vmatprep.subr.bf16.mxu0 0
      %1091 = vmatpush1.bf16.msra.mxu0 0
      %1092 = vmatprep.subr.bf16.mxu0 0
      %1093 = vmatpush1.bf16.msra.mxu0 0
      %1094 = vmatprep.subr.bf16.mxu0 0
      %1095 = vmatpush1.bf16.msra.mxu0 0
      %1096 = vmatprep.subr.bf16.mxu0 0
      %1097 = vmatpush1.bf16.msra.mxu0 0
      %1098 = vmatprep.subr.bf16.mxu0 0
      %1099 = vmatpush1.bf16.msra.mxu0 0
      %1100 = vmatprep.subr.bf16.mxu0 0
      %1101 = vmatpush1.bf16.msra.mxu0 0
      %1102 = vmatprep.subr.bf16.mxu0 0
      %1103 = vmatpush1.bf16.msra.mxu0 0
      %1104 = vmatprep.subr.bf16.mxu0 0
      %1105 = vmatpush1.bf16.msra.mxu0 0
      %1106 = vmatprep.subr.bf16.mxu0 0
      %1107 = vmatpush1.bf16.msra.mxu0 0
      %1108 = vmatprep.mubr.bf16.mxu0 0
      %1109 = vmatmul.mubr.bf16.gmra.mrb[0].mxu0 %v1071
      %v1110 = vpop.f32.mrb[0].mxu0
      %v1111 = vadd.f32 0.0, %v1110
      %v1112 = vpop.f32.mrb[0].mxu0
      %v1113 = vpop.f32.mrb[0].mxu0
      %v1114 = vpop.f32.mrb[0].mxu0
      %1115 = vdwg.mxu0
      %1117 = vrot.lane.b32.xlu0 %v891, 8
      %v1118 = vpop.permute.xlu0 %1117
      %1121 = vrot.lane.b32.xlu0 %v1001, 16
      %v1122 = vpop.permute.xlu0 %1121
      %1125 = vrot.lane.b32.xlu0 %v1111, 24
      %v1126 = vpop.permute.xlu0 %1125
      %v1128 = vsel %vm678, %v781, %v1118
      %vm1129 = vcmask 130048
      %v1130 = vsel %vm1129, %v1128, %v1122
      %vm1131 = vcmask 195584
      %v1132 = vsel %vm1131, %v1130, %v1126
      %v1133 = vpack.c.bf16 %v1132, %v1132
      %v1135 = vlaneseq
      %v1136 = vshrl.u32 %v1135, 7
      %v1137 = vsub.s32 0, %v1136
      %v1138 = vrot.slane %v616, %v1137
      %v1144 = vunpack.c.l.b16 %v612
      %v1145 = vunpack.c.l.b16 %v613
      %v1146 = vunpack.c.l.b16 %v614
      %v1147 = vunpack.c.l.b16 %v615
      %v1148 = vpack.c.b16 %v1145, %v1144
      %v1149 = vpack.c.b16 %v1147, %v1146
      %v1153 = vsel %vm630, %v1133, 0
      %1155 = vmatprep.subr.bf16.mxu0 0
      %1156 = vmatpush1.bf16.msra.mxu0 %v1148
      %1157 = vmatprep.subr.bf16.mxu0 0
      %1158 = vmatpush1.bf16.msra.mxu0 %v1149
      %1159 = vmatprep.subr.bf16.mxu0 0
      %1160 = vmatpush1.bf16.msra.mxu0 0
      %1161 = vmatprep.subr.bf16.mxu0 0
      %1162 = vmatpush1.bf16.msra.mxu0 0
      %1163 = vmatprep.subr.bf16.mxu0 0
      %1164 = vmatpush1.bf16.msra.mxu0 0
      %1165 = vmatprep.subr.bf16.mxu0 0
      %1166 = vmatpush1.bf16.msra.mxu0 0
      %1167 = vmatprep.subr.bf16.mxu0 0
      %1168 = vmatpush1.bf16.msra.mxu0 0
      %1169 = vmatprep.subr.bf16.mxu0 0
      %1170 = vmatpush1.bf16.msra.mxu0 0
      %1171 = vmatprep.subr.bf16.mxu0 0
      %1172 = vmatpush1.bf16.msra.mxu0 0
      %1173 = vmatprep.subr.bf16.mxu0 0
      %1174 = vmatpush1.bf16.msra.mxu0 0
      %1175 = vmatprep.subr.bf16.mxu0 0
      %1176 = vmatpush1.bf16.msra.mxu0 0
      %1177 = vmatprep.subr.bf16.mxu0 0
      %1178 = vmatpush1.bf16.msra.mxu0 0
      %1179 = vmatprep.subr.bf16.mxu0 0
      %1180 = vmatpush1.bf16.msra.mxu0 0
      %1181 = vmatprep.subr.bf16.mxu0 0
      %1182 = vmatpush1.bf16.msra.mxu0 0
      %1183 = vmatprep.subr.bf16.mxu0 0
      %1184 = vmatpush1.bf16.msra.mxu0 0
      %1185 = vmatprep.subr.bf16.mxu0 0
      %1186 = vmatpush1.bf16.msra.mxu0 0
      %1187 = vmatprep.mubr.bf16.mxu0 0
      %1188 = vmatmul.mubr.bf16.gmra.mrb[0].mxu0 %v1153
      %v1189 = vpop.f32.mrb[0].mxu0
      %v1190 = vadd.f32 %v1138, %v1189
      %v1191 = vpop.f32.mrb[0].mxu0
      %v1192 = vpop.f32.mrb[0].mxu0
      %v1193 = vpop.f32.mrb[0].mxu0
      %1194 = vdwg.mxu0
      %v1195 = vadd.f32 %v1190, %v607
      %v1196 = vld [vmem:[%s569] sm:$0x1]
      %v1197 = vld [vmem:[%s572] sm:$0x1]
      %v1198 = vsel %vm630, %v1195, 0.0
      %1199 = vadd.xlane.f32.xlu0 %v1198
      %v1200 = vpop.xlane.xlu0 %1199
      %v1201 = vrcp.pop 32.0
      %v1202 = vmul.f32 %v1200, %v1201
      %v1203 = vsub.f32 %v1195, %v1202
      %v1204 = vmul.f32 %v1203, %v1203
      %v1205 = vsel %vm630, %v1204, 0.0
      %1206 = vadd.xlane.f32.xlu0 %v1205
      %v1207 = vpop.xlane.xlu0 %1206
      %v1208 = vmul.f32 %v1207, %v1201
      %v1209 = vadd.f32 %v1208, 1e-05
      %v1210 = vrsqrt.pop %v1209
      %v1211 = vmul.f32 %v1203, %v1210
      %v1213 = vlaneseq
      %v1214 = vshrl.u32 %v1213, 7
      %v1215 = vsub.s32 0, %v1214
      %v1216 = vrot.slane %v1196, %v1215
      %v1218 = vmul.f32 %v1211, %v1216
      %v1220 = vlaneseq
      %v1221 = vshrl.u32 %v1220, 7
      %v1222 = vsub.s32 0, %v1221
      %v1223 = vrot.slane %v1197, %v1222
      %v1225 = vadd.f32 %v1218, %v1223
      %v1226 = vpack.c.bf16 %v1225, %v1225
      %v1227 = vld [vmem:[%s577] sm:$0xf]
      %v1228 = vld [vmem:[%s577 + $0x4] sm:$0xf]
      %v1229 = vld [vmem:[%s577 + $0x8] sm:$0xf]
      %v1230 = vld [vmem:[%s577 + $0xc] sm:$0xf]
      %v1231 = vld [vmem:[%s580] sm:$0x1]
      %v1233 = vlaneseq
      %v1234 = vshrl.u32 %v1233, 7
      %v1235 = vsub.s32 0, %v1234
      %v1236 = vrot.slane %v1231, %v1235
      %v1242 = vunpack.c.l.b16 %v1227
      %v1243 = vunpack.c.l.b16 %v1228
      %v1244 = vunpack.c.l.b16 %v1229
      %v1245 = vunpack.c.l.b16 %v1230
      %v1246 = vpack.c.b16 %v1243, %v1242
      %v1247 = vpack.c.b16 %v1245, %v1244
      %v1251 = vsel %vm630, %v1226, 0
      %1253 = vmatprep.subr.bf16.mxu0 0
      %1254 = vmatpush1.bf16.msra.mxu0 %v1246
      %1255 = vmatprep.subr.bf16.mxu0 0
      %1256 = vmatpush1.bf16.msra.mxu0 %v1247
      %1257 = vmatprep.subr.bf16.mxu0 0
      %1258 = vmatpush1.bf16.msra.mxu0 0
      %1259 = vmatprep.subr.bf16.mxu0 0
      %1260 = vmatpush1.bf16.msra.mxu0 0
      %1261 = vmatprep.subr.bf16.mxu0 0
      %1262 = vmatpush1.bf16.msra.mxu0 0
      %1263 = vmatprep.subr.bf16.mxu0 0
      %1264 = vmatpush1.bf16.msra.mxu0 0
      %1265 = vmatprep.subr.bf16.mxu0 0
      %1266 = vmatpush1.bf16.msra.mxu0 0
      %1267 = vmatprep.subr.bf16.mxu0 0
      %1268 = vmatpush1.bf16.msra.mxu0 0
      %1269 = vmatprep.subr.bf16.mxu0 0
      %1270 = vmatpush1.bf16.msra.mxu0 0
      %1271 = vmatprep.subr.bf16.mxu0 0
      %1272 = vmatpush1.bf16.msra.mxu0 0
      %1273 = vmatprep.subr.bf16.mxu0 0
      %1274 = vmatpush1.bf16.msra.mxu0 0
      %1275 = vmatprep.subr.bf16.mxu0 0
      %1276 = vmatpush1.bf16.msra.mxu0 0
      %1277 = vmatprep.subr.bf16.mxu0 0
      %1278 = vmatpush1.bf16.msra.mxu0 0
      %1279 = vmatprep.subr.bf16.mxu0 0
      %1280 = vmatpush1.bf16.msra.mxu0 0
      %1281 = vmatprep.subr.bf16.mxu0 0
      %1282 = vmatpush1.bf16.msra.mxu0 0
      %1283 = vmatprep.subr.bf16.mxu0 0
      %1284 = vmatpush1.bf16.msra.mxu0 0
      %1285 = vmatprep.mubr.bf16.mxu0 0
      %1286 = vmatmul.mubr.bf16.gmra.mrb[0].mxu0 %v1251
      %v1287 = vpop.f32.mrb[0].mxu0
      %v1288 = vadd.f32 %v1236, %v1287
      %v1289 = vpop.f32.mrb[0].mxu0
      %v1290 = vpop.f32.mrb[0].mxu0
      %v1291 = vpop.f32.mrb[0].mxu0
      %1292 = vdwg.mxu0
      %v1293 = vmax.f32 %v1288, 0.0
      %v1294 = vpack.c.bf16 %v1293, %v1293
      %v1295 = vld [vmem:[%s585] sm:$0xf]
      %v1296 = vld [vmem:[%s585 + $0x4] sm:$0xf]
      %v1297 = vld [vmem:[%s585 + $0x8] sm:$0xf]
      %v1298 = vld [vmem:[%s585 + $0xc] sm:$0xf]
      %v1299 = vld [vmem:[%s585 + $0x10] sm:$0xf]
      %v1300 = vld [vmem:[%s585 + $0x14] sm:$0xf]
      %v1301 = vld [vmem:[%s585 + $0x18] sm:$0xf]
      %v1302 = vld [vmem:[%s585 + $0x1c] sm:$0xf]
      %v1303 = vld [vmem:[%s588] sm:$0x1]
      %v1305 = vlaneseq
      %v1306 = vshrl.u32 %v1305, 7
      %v1307 = vsub.s32 0, %v1306
      %v1308 = vrot.slane %v1303, %v1307
      %v1318 = vunpack.c.l.b16 %v1295
      %v1319 = vunpack.c.l.b16 %v1296
      %v1320 = vunpack.c.l.b16 %v1297
      %v1321 = vunpack.c.l.b16 %v1298
      %v1322 = vunpack.c.l.b16 %v1299
      %v1323 = vunpack.c.l.b16 %v1300
      %v1324 = vunpack.c.l.b16 %v1301
      %v1325 = vunpack.c.l.b16 %v1302
      %v1326 = vpack.c.b16 %v1319, %v1318
      %v1327 = vpack.c.b16 %v1321, %v1320
      %v1328 = vpack.c.b16 %v1323, %v1322
      %v1329 = vpack.c.b16 %v1325, %v1324
      %vm1334 = vcmask 523264
      %v1336 = vsel %vm1334, %v1294, 0
      %1338 = vmatprep.subr.bf16.mxu0 0
      %1339 = vmatpush1.bf16.msra.mxu0 %v1326
      %1340 = vmatprep.subr.bf16.mxu0 0
      %1341 = vmatpush1.bf16.msra.mxu0 %v1327
      %1342 = vmatprep.subr.bf16.mxu0 0
      %1343 = vmatpush1.bf16.msra.mxu0 %v1328
      %1344 = vmatprep.subr.bf16.mxu0 0
      %1345 = vmatpush1.bf16.msra.mxu0 %v1329
      %1346 = vmatprep.subr.bf16.mxu0 0
      %1347 = vmatpush1.bf16.msra.mxu0 0
      %1348 = vmatprep.subr.bf16.mxu0 0
      %1349 = vmatpush1.bf16.msra.mxu0 0
      %1350 = vmatprep.subr.bf16.mxu0 0
      %1351 = vmatpush1.bf16.msra.mxu0 0
      %1352 = vmatprep.subr.bf16.mxu0 0
      %1353 = vmatpush1.bf16.msra.mxu0 0
      %1354 = vmatprep.subr.bf16.mxu0 0
      %1355 = vmatpush1.bf16.msra.mxu0 0
      %1356 = vmatprep.subr.bf16.mxu0 0
      %1357 = vmatpush1.bf16.msra.mxu0 0
      %1358 = vmatprep.subr.bf16.mxu0 0
      %1359 = vmatpush1.bf16.msra.mxu0 0
      %1360 = vmatprep.subr.bf16.mxu0 0
      %1361 = vmatpush1.bf16.msra.mxu0 0
      %1362 = vmatprep.subr.bf16.mxu0 0
      %1363 = vmatpush1.bf16.msra.mxu0 0
      %1364 = vmatprep.subr.bf16.mxu0 0
      %1365 = vmatpush1.bf16.msra.mxu0 0
      %1366 = vmatprep.subr.bf16.mxu0 0
      %1367 = vmatpush1.bf16.msra.mxu0 0
      %1368 = vmatprep.subr.bf16.mxu0 0
      %1369 = vmatpush1.bf16.msra.mxu0 0
      %1370 = vmatprep.mubr.bf16.mxu0 0
      %1371 = vmatmul.mubr.bf16.gmra.mrb[0].mxu0 %v1336
      %v1372 = vpop.f32.mrb[0].mxu0
      %v1373 = vadd.f32 %v1308, %v1372
      %v1374 = vpop.f32.mrb[0].mxu0
      %v1375 = vpop.f32.mrb[0].mxu0
      %v1376 = vpop.f32.mrb[0].mxu0
      %1377 = vdwg.mxu0
      %v1378 = vadd.f32 %v1373, %v1225
      %v1379 = vld [vmem:[%s591] sm:$0x1]
      %v1380 = vld [vmem:[%s594] sm:$0x1]
      %v1381 = vsel %vm630, %v1378, 0.0
      %1382 = vadd.xlane.f32.xlu0 %v1381
      %v1383 = vpop.xlane.xlu0 %1382
      %v1384 = vmul.f32 %v1383, %v1201
      %v1385 = vsub.f32 %v1378, %v1384
      %v1386 = vmul.f32 %v1385, %v1385
      %v1387 = vsel %vm630, %v1386, 0.0
      %1388 = vadd.xlane.f32.xlu0 %v1387
      %v1389 = vpop.xlane.xlu0 %1388
      %v1390 = vmul.f32 %v1389, %v1201
      %v1391 = vadd.f32 %v1390, 1e-05
      %v1392 = vrsqrt.pop %v1391
      %v1393 = vmul.f32 %v1385, %v1392
      %v1395 = vlaneseq
      %v1396 = vshrl.u32 %v1395, 7
      %v1397 = vsub.s32 0, %v1396
      %v1398 = vrot.slane %v1379, %v1397
      %v1400 = vmul.f32 %v1393, %v1398
      %v1402 = vlaneseq
      %v1403 = vshrl.u32 %v1402, 7
      %v1404 = vsub.s32 0, %v1403
      %v1405 = vrot.slane %v1380, %v1404
      %v1407 = vadd.f32 %v1400, %v1405
      %1408 = vst.msk [vmem:[%s598] sm:$0xff] %vm630, %v1407
      %p1409 = scmp.lt.s32.totalorder %s27, 1
      %s1410 = scalar_select %p1409, %s27, 1
      %s1411 = smul.addr %s1410, 8
      %s1412 = scalar_lea.vmem %s12, %s1411
      // Predicated region
      $region73: #{transformer_forward.3} parent=67 // pred_check
        %p1413 = pneg %p365
      $region74: #{transformer_forward.3} parent=67 // pred_check_branch
        %1415 = sbr.rel (%p1413) target = $region76
      $region75: #{transformer_forward.3} parent=67 // pred_region
        _
      $region76: #{transformer_forward.3} parent=67 // pred_fallthru
        _
    $region68: #{transformer_forward.3} parent=5 // pred_fallthru
      _
    %p1416 = scmp.le.s32.totalorder 2, %s18
    // Predicated region
    $region77: #{transformer_forward.3} parent=5 // pred_check
      %p1417 = pneg %p1416
    $region78: #{transformer_forward.3} parent=5 // pred_check_branch
      %1419 = sbr.rel (%p1417) target = $region80
    $region79: #{transformer_forward.3} parent=5 // pred_region
      %s1420 = ssub.s32 %s18, 2
      // Predicated region
      $region81: #{transformer_forward.3} parent=79 // pred_check
        %p1421 = pneg %p371
      $region82: #{transformer_forward.3} parent=79 // pred_check_branch
        %1423 = sbr.rel (%p1421) target = $region84
      $region83: #{transformer_forward.3} parent=79 // pred_region
        %p1424 = scmp.lt.s32.totalorder %s29, 1
        %s1425 = scalar_select %p1424, %s29, 1
        %s1426 = smul.addr %s1425, 8
        %s1427 = scalar_lea.vmem %s12, %s1426
      $region84: #{transformer_forward.3} parent=79 // pred_fallthru
        _
    $region80: #{transformer_forward.3} parent=5 // pred_fallthru
      _
  $region6: #{transformer_forward.3} parent=0 // loop_footer
    %s22 = sadd.s32 1, %s18
  $region7: #{transformer_forward.3} parent=0 // loop_footer_branch
    %17 = sbr.rel target = $region3
  $region8: #{transformer_forward.3} parent=0 // loop_exit
    _

// kernel: transformer_forward.4
$region0: #{transformer_forward.4}
  #allocation0 [shape = 'u32[]', space=smem, size = 0x4, offset = 0x4, fixed_abs, tag = 'smem constant byte address 0x4 - core index']
  #allocation1 [shape = 'u32[144,128]{1,0:T(1,128)}', space=vmem, size = 0x12000, scoped, tag = 'internal scratch']
  %s0 = inlined_call_operand.vmem [shape: f32[16,32], index: 0, kind: input, shape index: {}]
  %s1 = inlined_call_operand.vmem [shape: f32[16,32], index: 1, kind: input, shape index: {}]
  %s2 = inlined_call_operand.vmem [shape: bf16[2,32,96], index: 2, kind: input, shape index: {}]
  %s3 = inlined_call_operand.vmem [shape: bf16[2,32,32], index: 3, kind: input, shape index: {}]
  %s4 = inlined_call_operand.vmem [shape: f32[2,1,32], index: 4, kind: input, shape index: {}]
  %s5 = inlined_call_operand.vmem [shape: f32[2,1,32], index: 5, kind: input, shape index: {}]
  %s6 = inlined_call_operand.vmem [shape: f32[2,1,32], index: 6, kind: input, shape index: {}]
  %s7 = inlined_call_operand.vmem [shape: f32[2,1,32], index: 7, kind: input, shape index: {}]
  %s8 = inlined_call_operand.vmem [shape: f32[2,1,32], index: 8, kind: input, shape index: {}]
  %s9 = inlined_call_operand.vmem [shape: bf16[2,32,64], index: 9, kind: input, shape index: {}]
  %s10 = inlined_call_operand.vmem [shape: f32[2,1,64], index: 10, kind: input, shape index: {}]
  %s11 = inlined_call_operand.vmem [shape: bf16[2,64,32], index: 11, kind: input, shape index: {}]
  %s12 = inlined_call_operand.vmem [shape: f32[2,1,32], index: 12, kind: input, shape index: {}]
  %s13 = inlined_call_operand.vmem [shape: f32[2,1,32], index: 13, kind: input, shape index: {}]
  %s14 = inlined_call_operand.vmem [shape: f32[2,1,32], index: 14, kind: input, shape index: {}]
  %s15 = inlined_call_operand.vmem [shape: f32[16,32], index: 15, kind: output, shape index: {}]
  %s16 = sld [smem:[#allocation0]]
  $region97: #{transformer_forward.4} parent=0
    _
  %s18 = ssub.s32 1, %s16
  %s19 = scalar_select 0, %s18, %s16
  loop: start=0, step=1, limit=6
  $region2: #{transformer_forward.4} parent=0 // loop_pre_header
    _
  $region3: #{transformer_forward.4} parent=0 // loop_header
    %s21 = sphi 0, %s25
    %p22 = scmp.ge.s32.totalorder %s21, 6
    %s28 = sphi 0, %s40
    %s29 = sphi 0, %s36
    %s30 = sphi 0, %s28
    %s31 = sphi 0, %s29
    %s32 = sphi 0, %s30
    %s33 = sphi 0, %s31
    %s43 = sphi 0, %s45
    %s46 = sphi 0, %s43
    %s47 = sphi 0, %s46
    %s63 = sphi 0, %s47
    %s69 = sphi 0, %s71
    %s72 = sphi 0, %s69
    %s73 = sphi 0, %s72
    %s89 = sphi 0, %s73
    %s95 = sphi 0, %s97
    %s98 = sphi 0, %s95
    %s99 = sphi 0, %s98
    %s115 = sphi 0, %s99
    %s121 = sphi 0, %s123
    %s124 = sphi 0, %s121
    %s125 = sphi 0, %s124
    %s141 = sphi 0, %s125
    %s147 = sphi 0, %s149
    %s150 = sphi 0, %s147
    %s151 = sphi 0, %s150
    %s167 = sphi 0, %s151
    %s173 = sphi 0, %s175
    %s176 = sphi 0, %s173
    %s177 = sphi 0, %s176
    %s193 = sphi 0, %s177
    %s199 = sphi 0, %s201
    %s202 = sphi 0, %s199
    %s203 = sphi 0, %s202
    %s219 = sphi 0, %s203
    %s225 = sphi 0, %s227
    %s228 = sphi 0, %s225
    %s229 = sphi 0, %s228
    %s245 = sphi 0, %s229
    %s251 = sphi 0, %s253
    %s254 = sphi 0, %s251
    %s255 = sphi 0, %s254
    %s271 = sphi 0, %s255
    %s277 = sphi 0, %s279
    %s280 = sphi 0, %s277
    %s281 = sphi 0, %s280
    %s297 = sphi 0, %s281
    %s303 = sphi 0, %s305
    %s306 = sphi 0, %s303
    %s307 = sphi 0, %s306
    %s323 = sphi 0, %s307
    %s329 = sphi 0, %s331
    %s332 = sphi 0, %s329
    %s333 = sphi 0, %s332
    %s349 = sphi 0, %s333
    %s355 = sphi 0, %s357
    %s358 = sphi 0, %s355
    %s359 = sphi 0, %s358
    %s375 = sphi 0, %s359
    %s381 = sphi 0, %s383
    %s384 = sphi 0, %s381
    %s385 = sphi 0, %s384
    %s401 = sphi 0, %s385
    %s407 = sphi 0, %s409
    %s410 = sphi 0, %s407
    %s411 = sphi 0, %s410
    %s427 = sphi 0, %s411
    %s433 = sphi 0, %s435
    %s436 = sphi 0, %s433
    %s437 = sphi 0, %s436
    %s453 = sphi 0, %s437
  $region4: #{transformer_forward.4} parent=0 // loop_header_branch
    %24 = sbr.rel (%p22) target = $region8
  $region5: #{transformer_forward.4} parent=0 // loop_body
    %s26 = ssub.s32 %s21, 1
    %s27 = ssub.s32 %s21, 2
    %s34 = sadd.s32 1, %s29
    %p35 = scmp.ge.s32.totalorder %s34, 2
    %s36 = scalar_select %p35, 0, %s34
    %s37 = sadd.s32 1, %s28
    %s38 = scalar_select %p35, %s37, %s28
    %p39 = scmp.ge.s32.totalorder %s38, 2
    %s40 = scalar_select %p39, 0, %s38
    %s41 = ssub.s32 %s28, %s40
    %p42 = scmp.eq.s32.totalorder %s41, 0
    %s44 = sadd.s32 %s43, 1
    %s45 = scalar_select %p42, %s43, %s44
    %p48 = pneg %p42
    %p49 = scmp.eq.s32.totalorder %s21, 3
    %p50 = por %p48, %p49
    %p51 = scmp.ne.s32.totalorder %s43, %s46
    %p52 = scmp.eq.s32.totalorder %s21, 0
    %p53 = por %p51, %p52
    %p54 = scmp.ne.s32.totalorder %s43, %s46
    %p55 = scmp.eq.s32.totalorder %s26, 3
    %p56 = por %p54, %p55
    %p57 = scmp.ne.s32.totalorder %s46, %s47
    %p58 = scmp.eq.s32.totalorder %s26, 0
    %p59 = por %p57, %p58
    %p60 = scmp.ne.s32.totalorder %s46, %s47
    %p61 = scmp.eq.s32.totalorder %s27, 3
    %p62 = por %p60, %p61
    %p64 = scmp.ne.s32.totalorder %s47, %s63
    %p65 = scmp.eq.s32.totalorder %s27, 0
    %p66 = por %p64, %p65
    %s67 = ssub.s32 %s28, %s40
    %p68 = scmp.eq.s32.totalorder %s67, 0
    %s70 = sadd.s32 %s69, 1
    %s71 = scalar_select %p68, %s69, %s70
    %p74 = pneg %p68
    %p75 = scmp.eq.s32.totalorder %s21, 3
    %p76 = por %p74, %p75
    %p77 = scmp.ne.s32.totalorder %s69, %s72
    %p78 = scmp.eq.s32.totalorder %s21, 0
    %p79 = por %p77, %p78
    %p80 = scmp.ne.s32.totalorder %s69, %s72
    %p81 = scmp.eq.s32.totalorder %s26, 3
    %p82 = por %p80, %p81
    %p83 = scmp.ne.s32.totalorder %s72, %s73
    %p84 = scmp.eq.s32.totalorder %s26, 0
    %p85 = por %p83, %p84
    %p86 = scmp.ne.s32.totalorder %s72, %s73
    %p87 = scmp.eq.s32.totalorder %s27, 3
    %p88 = por %p86, %p87
    %p90 = scmp.ne.s32.totalorder %s73, %s89
    %p91 = scmp.eq.s32.totalorder %s27, 0
    %p92 = por %p90, %p91
    %s93 = ssub.s32 %s29, %s36
    %p94 = scmp.eq.s32.totalorder %s93, 0
    %s96 = sadd.s32 %s95, 1
    %s97 = scalar_select %p94, %s95, %s96
    %p100 = pneg %p94
    %p101 = scmp.eq.s32.totalorder %s21, 3
    %p102 = por %p100, %p101
    %p103 = scmp.ne.s32.totalorder %s95, %s98
    %p104 = scmp.eq.s32.totalorder %s21, 0
    %p105 = por %p103, %p104
    %p106 = scmp.ne.s32.totalorder %s95, %s98
    %p107 = scmp.eq.s32.totalorder %s26, 3
    %p108 = por %p106, %p107
    %p109 = scmp.ne.s32.totalorder %s98, %s99
    %p110 = scmp.eq.s32.totalorder %s26, 0
    %p111 = por %p109, %p110
    %p112 = scmp.ne.s32.totalorder %s98, %s99
    %p113 = scmp.eq.s32.totalorder %s27, 3
    %p114 = por %p112, %p113
    %p116 = scmp.ne.s32.totalorder %s99, %s115
    %p117 = scmp.eq.s32.totalorder %s27, 0
    %p118 = por %p116, %p117
    %s119 = ssub.s32 %s29, %s36
    %p120 = scmp.eq.s32.totalorder %s119, 0
    %s122 = sadd.s32 %s121, 1
    %s123 = scalar_select %p120, %s121, %s122
    %p126 = pneg %p120
    %p127 = scmp.eq.s32.totalorder %s21, 3
    %p128 = por %p126, %p127
    %p129 = scmp.ne.s32.totalorder %s121, %s124
    %p130 = scmp.eq.s32.totalorder %s21, 0
    %p131 = por %p129, %p130
    %p132 = scmp.ne.s32.totalorder %s121, %s124
    %p133 = scmp.eq.s32.totalorder %s26, 3
    %p134 = por %p132, %p133
    %p135 = scmp.ne.s32.totalorder %s124, %s125
    %p136 = scmp.eq.s32.totalorder %s26, 0
    %p137 = por %p135, %p136
    %p138 = scmp.ne.s32.totalorder %s124, %s125
    %p139 = scmp.eq.s32.totalorder %s27, 3
    %p140 = por %p138, %p139
    %p142 = scmp.ne.s32.totalorder %s125, %s141
    %p143 = scmp.eq.s32.totalorder %s27, 0
    %p144 = por %p142, %p143
    %s145 = ssub.s32 %s29, %s36
    %p146 = scmp.eq.s32.totalorder %s145, 0
    %s148 = sadd.s32 %s147, 1
    %s149 = scalar_select %p146, %s147, %s148
    %p152 = pneg %p146
    %p153 = scmp.eq.s32.totalorder %s21, 3
    %p154 = por %p152, %p153
    %p155 = scmp.ne.s32.totalorder %s147, %s150
    %p156 = scmp.eq.s32.totalorder %s21, 0
    %p157 = por %p155, %p156
    %p158 = scmp.ne.s32.totalorder %s147, %s150
    %p159 = scmp.eq.s32.totalorder %s26, 3
    %p160 = por %p158, %p159
    %p161 = scmp.ne.s32.totalorder %s150, %s151
    %p162 = scmp.eq.s32.totalorder %s26, 0
    %p163 = por %p161, %p162
    %p164 = scmp.ne.s32.totalorder %s150, %s151
    %p165 = scmp.eq.s32.totalorder %s27, 3
    %p166 = por %p164, %p165
    %p168 = scmp.ne.s32.totalorder %s151, %s167
    %p169 = scmp.eq.s32.totalorder %s27, 0
    %p170 = por %p168, %p169
    %s171 = ssub.s32 %s29, %s36
    %p172 = scmp.eq.s32.totalorder %s171, 0
    %s174 = sadd.s32 %s173, 1
    %s175 = scalar_select %p172, %s173, %s174
    %p178 = pneg %p172
    %p179 = scmp.eq.s32.totalorder %s21, 3
    %p180 = por %p178, %p179
    %p181 = scmp.ne.s32.totalorder %s173, %s176
    %p182 = scmp.eq.s32.totalorder %s21, 0
    %p183 = por %p181, %p182
    %p184 = scmp.ne.s32.totalorder %s173, %s176
    %p185 = scmp.eq.s32.totalorder %s26, 3
    %p186 = por %p184, %p185
    %p187 = scmp.ne.s32.totalorder %s176, %s177
    %p188 = scmp.eq.s32.totalorder %s26, 0
    %p189 = por %p187, %p188
    %p190 = scmp.ne.s32.totalorder %s176, %s177
    %p191 = scmp.eq.s32.totalorder %s27, 3
    %p192 = por %p190, %p191
    %p194 = scmp.ne.s32.totalorder %s177, %s193
    %p195 = scmp.eq.s32.totalorder %s27, 0
    %p196 = por %p194, %p195
    %s197 = ssub.s32 %s29, %s36
    %p198 = scmp.eq.s32.totalorder %s197, 0
    %s200 = sadd.s32 %s199, 1
    %s201 = scalar_select %p198, %s199, %s200
    %p204 = pneg %p198
    %p205 = scmp.eq.s32.totalorder %s21, 3
    %p206 = por %p204, %p205
    %p207 = scmp.ne.s32.totalorder %s199, %s202
    %p208 = scmp.eq.s32.totalorder %s21, 0
    %p209 = por %p207, %p208
    %p210 = scmp.ne.s32.totalorder %s199, %s202
    %p211 = scmp.eq.s32.totalorder %s26, 3
    %p212 = por %p210, %p211
    %p213 = scmp.ne.s32.totalorder %s202, %s203
    %p214 = scmp.eq.s32.totalorder %s26, 0
    %p215 = por %p213, %p214
    %p216 = scmp.ne.s32.totalorder %s202, %s203
    %p217 = scmp.eq.s32.totalorder %s27, 3
    %p218 = por %p216, %p217
    %p220 = scmp.ne.s32.totalorder %s203, %s219
    %p221 = scmp.eq.s32.totalorder %s27, 0
    %p222 = por %p220, %p221
    %s223 = ssub.s32 %s29, %s36
    %p224 = scmp.eq.s32.totalorder %s223, 0
    %s226 = sadd.s32 %s225, 1
    %s227 = scalar_select %p224, %s225, %s226
    %p230 = pneg %p224
    %p231 = scmp.eq.s32.totalorder %s21, 3
    %p232 = por %p230, %p231
    %p233 = scmp.ne.s32.totalorder %s225, %s228
    %p234 = scmp.eq.s32.totalorder %s21, 0
    %p235 = por %p233, %p234
    %p236 = scmp.ne.s32.totalorder %s225, %s228
    %p237 = scmp.eq.s32.totalorder %s26, 3
    %p238 = por %p236, %p237
    %p239 = scmp.ne.s32.totalorder %s228, %s229
    %p240 = scmp.eq.s32.totalorder %s26, 0
    %p241 = por %p239, %p240
    %p242 = scmp.ne.s32.totalorder %s228, %s229
    %p243 = scmp.eq.s32.totalorder %s27, 3
    %p244 = por %p242, %p243
    %p246 = scmp.ne.s32.totalorder %s229, %s245
    %p247 = scmp.eq.s32.totalorder %s27, 0
    %p248 = por %p246, %p247
    %s249 = ssub.s32 %s29, %s36
    %p250 = scmp.eq.s32.totalorder %s249, 0
    %s252 = sadd.s32 %s251, 1
    %s253 = scalar_select %p250, %s251, %s252
    %p256 = pneg %p250
    %p257 = scmp.eq.s32.totalorder %s21, 3
    %p258 = por %p256, %p257
    %p259 = scmp.ne.s32.totalorder %s251, %s254
    %p260 = scmp.eq.s32.totalorder %s21, 0
    %p261 = por %p259, %p260
    %p262 = scmp.ne.s32.totalorder %s251, %s254
    %p263 = scmp.eq.s32.totalorder %s26, 3
    %p264 = por %p262, %p263
    %p265 = scmp.ne.s32.totalorder %s254, %s255
    %p266 = scmp.eq.s32.totalorder %s26, 0
    %p267 = por %p265, %p266
    %p268 = scmp.ne.s32.totalorder %s254, %s255
    %p269 = scmp.eq.s32.totalorder %s27, 3
    %p270 = por %p268, %p269
    %p272 = scmp.ne.s32.totalorder %s255, %s271
    %p273 = scmp.eq.s32.totalorder %s27, 0
    %p274 = por %p272, %p273
    %s275 = ssub.s32 %s29, %s36
    %p276 = scmp.eq.s32.totalorder %s275, 0
    %s278 = sadd.s32 %s277, 1
    %s279 = scalar_select %p276, %s277, %s278
    %p282 = pneg %p276
    %p283 = scmp.eq.s32.totalorder %s21, 3
    %p284 = por %p282, %p283
    %p285 = scmp.ne.s32.totalorder %s277, %s280
    %p286 = scmp.eq.s32.totalorder %s21, 0
    %p287 = por %p285, %p286
    %p288 = scmp.ne.s32.totalorder %s277, %s280
    %p289 = scmp.eq.s32.totalorder %s26, 3
    %p290 = por %p288, %p289
    %p291 = scmp.ne.s32.totalorder %s280, %s281
    %p292 = scmp.eq.s32.totalorder %s26, 0
    %p293 = por %p291, %p292
    %p294 = scmp.ne.s32.totalorder %s280, %s281
    %p295 = scmp.eq.s32.totalorder %s27, 3
    %p296 = por %p294, %p295
    %p298 = scmp.ne.s32.totalorder %s281, %s297
    %p299 = scmp.eq.s32.totalorder %s27, 0
    %p300 = por %p298, %p299
    %s301 = ssub.s32 %s29, %s36
    %p302 = scmp.eq.s32.totalorder %s301, 0
    %s304 = sadd.s32 %s303, 1
    %s305 = scalar_select %p302, %s303, %s304
    %p308 = pneg %p302
    %p309 = scmp.eq.s32.totalorder %s21, 3
    %p310 = por %p308, %p309
    %p311 = scmp.ne.s32.totalorder %s303, %s306
    %p312 = scmp.eq.s32.totalorder %s21, 0
    %p313 = por %p311, %p312
    %p314 = scmp.ne.s32.totalorder %s303, %s306
    %p315 = scmp.eq.s32.totalorder %s26, 3
    %p316 = por %p314, %p315
    %p317 = scmp.ne.s32.totalorder %s306, %s307
    %p318 = scmp.eq.s32.totalorder %s26, 0
    %p319 = por %p317, %p318
    %p320 = scmp.ne.s32.totalorder %s306, %s307
    %p321 = scmp.eq.s32.totalorder %s27, 3
    %p322 = por %p320, %p321
    %p324 = scmp.ne.s32.totalorder %s307, %s323
    %p325 = scmp.eq.s32.totalorder %s27, 0
    %p326 = por %p324, %p325
    %s327 = ssub.s32 %s29, %s36
    %p328 = scmp.eq.s32.totalorder %s327, 0
    %s330 = sadd.s32 %s329, 1
    %s331 = scalar_select %p328, %s329, %s330
    %p334 = pneg %p328
    %p335 = scmp.eq.s32.totalorder %s21, 3
    %p336 = por %p334, %p335
    %p337 = scmp.ne.s32.totalorder %s329, %s332
    %p338 = scmp.eq.s32.totalorder %s21, 0
    %p339 = por %p337, %p338
    %p340 = scmp.ne.s32.totalorder %s329, %s332
    %p341 = scmp.eq.s32.totalorder %s26, 3
    %p342 = por %p340, %p341
    %p343 = scmp.ne.s32.totalorder %s332, %s333
    %p344 = scmp.eq.s32.totalorder %s26, 0
    %p345 = por %p343, %p344
    %p346 = scmp.ne.s32.totalorder %s332, %s333
    %p347 = scmp.eq.s32.totalorder %s27, 3
    %p348 = por %p346, %p347
    %p350 = scmp.ne.s32.totalorder %s333, %s349
    %p351 = scmp.eq.s32.totalorder %s27, 0
    %p352 = por %p350, %p351
    %s353 = ssub.s32 %s29, %s36
    %p354 = scmp.eq.s32.totalorder %s353, 0
    %s356 = sadd.s32 %s355, 1
    %s357 = scalar_select %p354, %s355, %s356
    %p360 = pneg %p354
    %p361 = scmp.eq.s32.totalorder %s21, 3
    %p362 = por %p360, %p361
    %p363 = scmp.ne.s32.totalorder %s355, %s358
    %p364 = scmp.eq.s32.totalorder %s21, 0
    %p365 = por %p363, %p364
    %p366 = scmp.ne.s32.totalorder %s355, %s358
    %p367 = scmp.eq.s32.totalorder %s26, 3
    %p368 = por %p366, %p367
    %p369 = scmp.ne.s32.totalorder %s358, %s359
    %p370 = scmp.eq.s32.totalorder %s26, 0
    %p371 = por %p369, %p370
    %p372 = scmp.ne.s32.totalorder %s358, %s359
    %p373 = scmp.eq.s32.totalorder %s27, 3
    %p374 = por %p372, %p373
    %p376 = scmp.ne.s32.totalorder %s359, %s375
    %p377 = scmp.eq.s32.totalorder %s27, 0
    %p378 = por %p376, %p377
    %s379 = ssub.s32 %s29, %s36
    %p380 = scmp.eq.s32.totalorder %s379, 0
    %s382 = sadd.s32 %s381, 1
    %s383 = scalar_select %p380, %s381, %s382
    %p386 = pneg %p380
    %p387 = scmp.eq.s32.totalorder %s21, 3
    %p388 = por %p386, %p387
    %p389 = scmp.ne.s32.totalorder %s381, %s384
    %p390 = scmp.eq.s32.totalorder %s21, 0
    %p391 = por %p389, %p390
    %p392 = scmp.ne.s32.totalorder %s381, %s384
    %p393 = scmp.eq.s32.totalorder %s26, 3
    %p394 = por %p392, %p393
    %p395 = scmp.ne.s32.totalorder %s384, %s385
    %p396 = scmp.eq.s32.totalorder %s26, 0
    %p397 = por %p395, %p396
    %p398 = scmp.ne.s32.totalorder %s384, %s385
    %p399 = scmp.eq.s32.totalorder %s27, 3
    %p400 = por %p398, %p399
    %p402 = scmp.ne.s32.totalorder %s385, %s401
    %p403 = scmp.eq.s32.totalorder %s27, 0
    %p404 = por %p402, %p403
    %s405 = ssub.s32 %s29, %s36
    %p406 = scmp.eq.s32.totalorder %s405, 0
    %s408 = sadd.s32 %s407, 1
    %s409 = scalar_select %p406, %s407, %s408
    %p412 = pneg %p406
    %p413 = scmp.eq.s32.totalorder %s21, 3
    %p414 = por %p412, %p413
    %p415 = scmp.ne.s32.totalorder %s407, %s410
    %p416 = scmp.eq.s32.totalorder %s21, 0
    %p417 = por %p415, %p416
    %p418 = scmp.ne.s32.totalorder %s407, %s410
    %p419 = scmp.eq.s32.totalorder %s26, 3
    %p420 = por %p418, %p419
    %p421 = scmp.ne.s32.totalorder %s410, %s411
    %p422 = scmp.eq.s32.totalorder %s26, 0
    %p423 = por %p421, %p422
    %p424 = scmp.ne.s32.totalorder %s410, %s411
    %p425 = scmp.eq.s32.totalorder %s27, 3
    %p426 = por %p424, %p425
    %p428 = scmp.ne.s32.totalorder %s411, %s427
    %p429 = scmp.eq.s32.totalorder %s27, 0
    %p430 = por %p428, %p429
    %s431 = ssub.s32 %s28, %s40
    %p432 = scmp.eq.s32.totalorder %s431, 0
    %s434 = sadd.s32 %s433, 1
    %s435 = scalar_select %p432, %s433, %s434
    %p438 = pneg %p432
    %p439 = scmp.eq.s32.totalorder %s21, 3
    %p440 = por %p438, %p439
    %p441 = scmp.ne.s32.totalorder %s433, %s436
    %p442 = scmp.eq.s32.totalorder %s21, 0
    %p443 = por %p441, %p442
    %p444 = scmp.ne.s32.totalorder %s433, %s436
    %p445 = scmp.eq.s32.totalorder %s26, 3
    %p446 = por %p444, %p445
    %p447 = scmp.ne.s32.totalorder %s436, %s437
    %p448 = scmp.eq.s32.totalorder %s26, 0
    %p449 = por %p447, %p448
    %p450 = scmp.ne.s32.totalorder %s436, %s437
    %p451 = scmp.eq.s32.totalorder %s27, 3
    %p452 = por %p450, %p451
    %p454 = scmp.ne.s32.totalorder %s437, %s453
    %p455 = scmp.eq.s32.totalorder %s27, 0
    %p456 = por %p454, %p455
    %p457 = scmp.le.s32.totalorder 1, %s21
    %p458 = scmp.lt.s32.totalorder %s21, 5
    %p459 = pnand %p457, %p458
    %p460 = pneg %p459
    // Predicated region
    $region9: #{transformer_forward.4} parent=5 // pred_check
      _
    $region10: #{transformer_forward.4} parent=5 // pred_check_branch
      %462 = sbr.rel (%p459) target = $region12
    $region11: #{transformer_forward.4} parent=5 // pred_region
      %s463 = ssub.s32 %s21, 1
    $region12: #{transformer_forward.4} parent=5 // pred_fallthru
      _
    %p464 = scmp.lt.s32.totalorder %s21, 4
    // Predicated region
    $region13: #{transformer_forward.4} parent=5 // pred_check
      %p465 = pneg %p464
    $region14: #{transformer_forward.4} parent=5 // pred_check_branch
      %467 = sbr.rel (%p465) target = $region16
    $region15: #{transformer_forward.4} parent=5 // pred_region
      // Predicated region
      $region17: #{transformer_forward.4} parent=15 // pred_check
        %p468 = pneg %p53
      $region18: #{transformer_forward.4} parent=15 // pred_check_branch
        %470 = sbr.rel (%p468) target = $region20
      $region19: #{transformer_forward.4} parent=15 // pred_region
        %p471 = scmp.lt.s32.totalorder %s28, 1
        %s472 = scalar_select %p471, %s28, 1
        %s473 = smul.addr %s472, 8
        %s474 = scalar_lea.vmem %s0, %s473
      $region20: #{transformer_forward.4} parent=15 // pred_fallthru
        _
      // Predicated region
      $region21: #{transformer_forward.4} parent=15 // pred_check
        %p475 = pneg %p79
      $region22: #{transformer_forward.4} parent=15 // pred_check_branch
        %477 = sbr.rel (%p475) target = $region24
      $region23: #{transformer_forward.4} parent=15 // pred_region
        %p478 = scmp.lt.s32.totalorder %s28, 1
        %s479 = scalar_select %p478, %s28, 1
        %s480 = smul.addr %s479, 8
        %s481 = scalar_lea.vmem %s1, %s480
      $region24: #{transformer_forward.4} parent=15 // pred_fallthru
        _
      // Predicated region
      $region25: #{transformer_forward.4} parent=15 // pred_check
        %p482 = pneg %p105
      $region26: #{transformer_forward.4} parent=15 // pred_check_branch
        %484 = sbr.rel (%p482) target = $region28
      $region27: #{transformer_forward.4} parent=15 // pred_region
        %p485 = scmp.lt.s32.totalorder %s29, 1
        %s486 = scalar_select %p485, %s29, 1
        %s487 = smul.addr %s486, 4
        %s488 = smul.addr %s487, 4
        %s489 = scalar_lea.vmem %s2, %s488
      $region28: #{transformer_forward.4} parent=15 // pred_fallthru
        _
      // Predicated region
      $region29: #{transformer_forward.4} parent=15 // pred_check
        %p490 = pneg %p131
      $region30: #{transformer_forward.4} parent=15 // pred_check_branch
        %492 = sbr.rel (%p490) target = $region32
      $region31: #{transformer_forward.4} parent=15 // pred_region
        %p493 = scmp.lt.s32.totalorder %s29, 1
        %s494 = scalar_select %p493, %s29, 1
        %s495 = smul.addr %s494, 4
        %s496 = smul.addr %s495, 4
        %s497 = scalar_lea.vmem %s3, %s496
      $region32: #{transformer_forward.4} parent=15 // pred_fallthru
        _
      // Predicated region
      $region33: #{transformer_forward.4} parent=15 // pred_check
        %p498 = pneg %p157
      $region34: #{transformer_forward.4} parent=15 // pred_check_branch
        %500 = sbr.rel (%p498) target = $region36
      $region35: #{transformer_forward.4} parent=15 // pred_region
        %p501 = scmp.lt.s32.totalorder %s29, 1
        %s502 = scalar_select %p501, %s29, 1
        %s503 = scalar_lea.vmem %s4, %s502
      $region36: #{transformer_forward.4} parent=15 // pred_fallthru
        _
      // Predicated region
      $region37: #{transformer_forward.4} parent=15 // pred_check
        %p504 = pneg %p183
      $region38: #{transformer_forward.4} parent=15 // pred_check_branch
        %506 = sbr.rel (%p504) target = $region40
      $region39: #{transformer_forward.4} parent=15 // pred_region
        %p507 = scmp.lt.s32.totalorder %s29, 1
        %s508 = scalar_select %p507, %s29, 1
        %s509 = scalar_lea.vmem %s5, %s508
      $region40: #{transformer_forward.4} parent=15 // pred_fallthru
        _
      // Predicated region
      $region41: #{transformer_forward.4} parent=15 // pred_check
        %p510 = pneg %p209
      $region42: #{transformer_forward.4} parent=15 // pred_check_branch
        %512 = sbr.rel (%p510) target = $region44
      $region43: #{transformer_forward.4} parent=15 // pred_region
        %p513 = scmp.lt.s32.totalorder %s29, 1
        %s514 = scalar_select %p513, %s29, 1
        %s515 = scalar_lea.vmem %s6, %s514
      $region44: #{transformer_forward.4} parent=15 // pred_fallthru
        _
      // Predicated region
      $region45: #{transformer_forward.4} parent=15 // pred_check
        %p516 = pneg %p235
      $region46: #{transformer_forward.4} parent=15 // pred_check_branch
        %518 = sbr.rel (%p516) target = $region48
      $region47: #{transformer_forward.4} parent=15 // pred_region
        %p519 = scmp.lt.s32.totalorder %s29, 1
        %s520 = scalar_select %p519, %s29, 1
        %s521 = scalar_lea.vmem %s7, %s520
      $region48: #{transformer_forward.4} parent=15 // pred_fallthru
        _
      // Predicated region
      $region49: #{transformer_forward.4} parent=15 // pred_check
        %p522 = pneg %p261
      $region50: #{transformer_forward.4} parent=15 // pred_check_branch
        %524 = sbr.rel (%p522) target = $region52
      $region51: #{transformer_forward.4} parent=15 // pred_region
        %p525 = scmp.lt.s32.totalorder %s29, 1
        %s526 = scalar_select %p525, %s29, 1
        %s527 = scalar_lea.vmem %s8, %s526
      $region52: #{transformer_forward.4} parent=15 // pred_fallthru
        _
      // Predicated region
      $region53: #{transformer_forward.4} parent=15 // pred_check
        %p528 = pneg %p287
      $region54: #{transformer_forward.4} parent=15 // pred_check_branch
        %530 = sbr.rel (%p528) target = $region56
      $region55: #{transformer_forward.4} parent=15 // pred_region
        %p531 = scmp.lt.s32.totalorder %s29, 1
        %s532 = scalar_select %p531, %s29, 1
        %s533 = smul.addr %s532, 4
        %s534 = smul.addr %s533, 4
        %s535 = scalar_lea.vmem %s9, %s534
      $region56: #{transformer_forward.4} parent=15 // pred_fallthru
        _
      // Predicated region
      $region57: #{transformer_forward.4} parent=15 // pred_check
        %p536 = pneg %p313
      $region58: #{transformer_forward.4} parent=15 // pred_check_branch
        %538 = sbr.rel (%p536) target = $region60
      $region59: #{transformer_forward.4} parent=15 // pred_region
        %p539 = scmp.lt.s32.totalorder %s29, 1
        %s540 = scalar_select %p539, %s29, 1
        %s541 = scalar_lea.vmem %s10, %s540
      $region60: #{transformer_forward.4} parent=15 // pred_fallthru
        _
      // Predicated region
      $region61: #{transformer_forward.4} parent=15 // pred_check
        %p542 = pneg %p339
      $region62: #{transformer_forward.4} parent=15 // pred_check_branch
        %544 = sbr.rel (%p542) target = $region64
      $region63: #{transformer_forward.4} parent=15 // pred_region
        %p545 = scmp.lt.s32.totalorder %s29, 1
        %s546 = scalar_select %p545, %s29, 1
        %s547 = smul.addr %s546, 8
        %s548 = smul.addr %s547, 4
        %s549 = scalar_lea.vmem %s11, %s548
      $region64: #{transformer_forward.4} parent=15 // pred_fallthru
        _
      // Predicated region
      $region65: #{transformer_forward.4} parent=15 // pred_check
        %p550 = pneg %p365
      $region66: #{transformer_forward.4} parent=15 // pred_check_branch
        %552 = sbr.rel (%p550) target = $region68
      $region67: #{transformer_forward.4} parent=15 // pred_region
        %p553 = scmp.lt.s32.totalorder %s29, 1
        %s554 = scalar_select %p553, %s29, 1
        %s555 = scalar_lea.vmem %s12, %s554
      $region68: #{transformer_forward.4} parent=15 // pred_fallthru
        _
      // Predicated region
      $region69: #{transformer_forward.4} parent=15 // pred_check
        %p556 = pneg %p391
      $region70: #{transformer_forward.4} parent=15 // pred_check_branch
        %558 = sbr.rel (%p556) target = $region72
      $region71: #{transformer_forward.4} parent=15 // pred_region
        %p559 = scmp.lt.s32.totalorder %s29, 1
        %s560 = scalar_select %p559, %s29, 1
        %s561 = scalar_lea.vmem %s13, %s560
      $region72: #{transformer_forward.4} parent=15 // pred_fallthru
        _
      // Predicated region
      $region73: #{transformer_forward.4} parent=15 // pred_check
        %p562 = pneg %p417
      $region74: #{transformer_forward.4} parent=15 // pred_check_branch
        %564 = sbr.rel (%p562) target = $region76
      $region75: #{transformer_forward.4} parent=15 // pred_region
        %p565 = scmp.lt.s32.totalorder %s29, 1
        %s566 = scalar_select %p565, %s29, 1
        %s567 = scalar_lea.vmem %s14, %s566
      $region76: #{transformer_forward.4} parent=15 // pred_fallthru
        _
    $region16: #{transformer_forward.4} parent=5 // pred_fallthru
      _
    %p568 = scmp.le.s32.totalorder 1, %s21
    %p569 = scmp.lt.s32.totalorder %s21, 5
    %p570 = pnand %p568, %p569
    %p571 = pneg %p570
    // Predicated region
    $region77: #{transformer_forward.4} parent=5 // pred_check
      _
    $region78: #{transformer_forward.4} parent=5 // pred_check_branch
      %573 = sbr.rel (%p570) target = $region80
    $region79: #{transformer_forward.4} parent=5 // pred_region
      %s574 = ssub.s32 %s21, 1
      %p575 = scmp.lt.s32.totalorder %s30, 1
      %s576 = scalar_select %p575, %s30, 1
      %s577 = smul.addr %s576, 8
      %s578 = scalar_lea.vmem %s0, %s577
      %p579 = pneg %p59
      %p580 = pneg %p56
      %p581 = scmp.lt.s32.totalorder %s30, 1
      %s582 = scalar_select %p581, %s30, 1
      %s583 = smul.addr %s582, 8
      %s584 = scalar_lea.vmem %s1, %s583
      %p585 = pneg %p85
      %p586 = pneg %p82
      %p587 = scmp.lt.s32.totalorder %s31, 1
      %s588 = scalar_select %p587, %s31, 1
      %s589 = smul.addr %s588, 4
      %s590 = smul.addr %s589, 4
      %s591 = scalar_lea.vmem %s2, %s590
      %p592 = pneg %p111
      %p593 = pneg %p108
      %p594 = scmp.lt.s32.totalorder %s31, 1
      %s595 = scalar_select %p594, %s31, 1
      %s596 = smul.addr %s595, 4
      %s597 = smul.addr %s596, 4
      %s598 = scalar_lea.vmem %s3, %s597
      %p599 = pneg %p137
      %p600 = pneg %p134
      %p601 = scmp.lt.s32.totalorder %s31, 1
      %s602 = scalar_select %p601, %s31, 1
      %s603 = scalar_lea.vmem %s4, %s602
      %p604 = pneg %p163
      %p605 = pneg %p160
      %p606 = scmp.lt.s32.totalorder %s31, 1
      %s607 = scalar_select %p606, %s31, 1
      %s608 = scalar_lea.vmem %s5, %s607
      %p609 = pneg %p189
      %p610 = pneg %p186
      %p611 = scmp.lt.s32.totalorder %s31, 1
      %s612 = scalar_select %p611, %s31, 1
      %s613 = scalar_lea.vmem %s6, %s612
      %p614 = pneg %p215
      %p615 = pneg %p212
      %p616 = scmp.lt.s32.totalorder %s31, 1
      %s617 = scalar_select %p616, %s31, 1
      %s618 = scalar_lea.vmem %s7, %s617
      %p619 = pneg %p241
      %p620 = pneg %p238
      %p621 = scmp.lt.s32.totalorder %s31, 1
      %s622 = scalar_select %p621, %s31, 1
      %s623 = scalar_lea.vmem %s8, %s622
      %p624 = pneg %p267
      %p625 = pneg %p264
      %p626 = scmp.lt.s32.totalorder %s31, 1
      %s627 = scalar_select %p626, %s31, 1
      %s628 = smul.addr %s627, 4
      %s629 = smul.addr %s628, 4
      %s630 = scalar_lea.vmem %s9, %s629
      %p631 = pneg %p293
      %p632 = pneg %p290
      %p633 = scmp.lt.s32.totalorder %s31, 1
      %s634 = scalar_select %p633, %s31, 1
      %s635 = scalar_lea.vmem %s10, %s634
      %p636 = pneg %p319
      %p637 = pneg %p316
      %p638 = scmp.lt.s32.totalorder %s31, 1
      %s639 = scalar_select %p638, %s31, 1
      %s640 = smul.addr %s639, 8
      %s641 = smul.addr %s640, 4
      %s642 = scalar_lea.vmem %s11, %s641
      %p643 = pneg %p345
      %p644 = pneg %p342
      %p645 = scmp.lt.s32.totalorder %s31, 1
      %s646 = scalar_select %p645, %s31, 1
      %s647 = scalar_lea.vmem %s12, %s646
      %p648 = pneg %p371
      %p649 = pneg %p368
      %p650 = scmp.lt.s32.totalorder %s31, 1
      %s651 = scalar_select %p650, %s31, 1
      %s652 = scalar_lea.vmem %s13, %s651
      %p653 = pneg %p397
      %p654 = pneg %p394
      %p655 = scmp.lt.s32.totalorder %s31, 1
      %s656 = scalar_select %p655, %s31, 1
      %s657 = scalar_lea.vmem %s14, %s656
      %p658 = pneg %p423
      %p659 = pneg %p420
      %p660 = pneg %p449
      %p661 = pneg %p446
      %p662 = scmp.lt.s32.totalorder %s30, 1
      %s663 = scalar_select %p662, %s30, 1
      %s664 = smul.addr %s663, 8
      %s665 = scalar_lea.vmem %s15, %s664
      %p666 = scmp.lt.s32.totalorder %s30, 1
      %s667 = scalar_select %p666, %s30, 1
      %s668 = smul.addr %s667, 8
      %s669 = scalar_lea.vmem %s0, %s668
      %p670 = scmp.lt.s32.totalorder %s30, 1
      %s671 = scalar_select %p670, %s30, 1
      %s672 = smul.addr %s671, 8
      %s673 = scalar_lea.vmem %s1, %s672
      %p674 = scmp.lt.s32.totalorder %s31, 1
      %s675 = scalar_select %p674, %s31, 1
      %s676 = smul.addr %s675, 4
      %s677 = smul.addr %s676, 4
      %s678 = scalar_lea.vmem %s2, %s677
      %p679 = scmp.lt.s32.totalorder %s31, 1
      %s680 = scalar_select %p679, %s31, 1
      %s681 = smul.addr %s680, 4
      %s682 = smul.addr %s681, 4
      %s683 = scalar_lea.vmem %s3, %s682
      %p684 = scmp.lt.s32.totalorder %s31, 1
      %s685 = scalar_select %p684, %s31, 1
      %s686 = scalar_lea.vmem %s4, %s685
      %p687 = scmp.lt.s32.totalorder %s31, 1
      %s688 = scalar_select %p687, %s31, 1
      %s689 = scalar_lea.vmem %s5, %s688
      %p690 = scmp.lt.s32.totalorder %s31, 1
      %s691 = scalar_select %p690, %s31, 1
      %s692 = scalar_lea.vmem %s6, %s691
      %p693 = scmp.lt.s32.totalorder %s31, 1
      %s694 = scalar_select %p693, %s31, 1
      %s695 = scalar_lea.vmem %s7, %s694
      %p696 = scmp.lt.s32.totalorder %s31, 1
      %s697 = scalar_select %p696, %s31, 1
      %s698 = scalar_lea.vmem %s8, %s697
      %p699 = scmp.lt.s32.totalorder %s31, 1
      %s700 = scalar_select %p699, %s31, 1
      %s701 = smul.addr %s700, 4
      %s702 = smul.addr %s701, 4
      %s703 = scalar_lea.vmem %s9, %s702
      %p704 = scmp.lt.s32.totalorder %s31, 1
      %s705 = scalar_select %p704, %s31, 1
      %s706 = scalar_lea.vmem %s10, %s705
      %p707 = scmp.lt.s32.totalorder %s31, 1
      %s708 = scalar_select %p707, %s31, 1
      %s709 = smul.addr %s708, 8
      %s710 = smul.addr %s709, 4
      %s711 = scalar_lea.vmem %s11, %s710
      %p712 = scmp.lt.s32.totalorder %s31, 1
      %s713 = scalar_select %p712, %s31, 1
      %s714 = scalar_lea.vmem %s12, %s713
      %p715 = scmp.lt.s32.totalorder %s31, 1
      %s716 = scalar_select %p715, %s31, 1
      %s717 = scalar_lea.vmem %s13, %s716
      %p718 = scmp.lt.s32.totalorder %s31, 1
      %s719 = scalar_select %p718, %s31, 1
      %s720 = scalar_lea.vmem %s14, %s719
      %p721 = scmp.lt.s32.totalorder %s30, 1
      %s722 = scalar_select %p721, %s30, 1
      %s723 = smul.addr %s722, 8
      %s724 = scalar_lea.vmem %s15, %s723
      %p726 = scmp.eq.s32.totalorder %s31, 0
      // Predicated region
      $region81: #{transformer_forward.4} parent=79 // pred_check
        %p727 = pneg %p726
      $region82: #{transformer_forward.4} parent=79 // pred_check_branch
        %729 = sbr.rel (%p727) target = $region84
      $region83: #{transformer_forward.4} parent=79 // pred_region
        %v730 = vld [vmem:[%s669] sm:$0xff]
        %vm731 = vcmask 261120
        %732 = vst.msk [vmem:[%s724] sm:$0xff] %vm731, %v730
      $region84: #{transformer_forward.4} parent=79 // pred_fallthru
        _
      %v733 = vld [vmem:[%s724] sm:$0xff]
      %v734 = vld [vmem:[%s673] sm:$0xff]
      %v735 = vld [vmem:[%s678] sm:$0xf]
      %v736 = vld [vmem:[%s678 + $0x4] sm:$0xf]
      %v737 = vld [vmem:[%s678 + $0x8] sm:$0xf]
      %v738 = vld [vmem:[%s678 + $0xc] sm:$0xf]
      %v739 = vld [vmem:[%s683] sm:$0xf]
      %v740 = vld [vmem:[%s683 + $0x4] sm:$0xf]
      %v741 = vld [vmem:[%s683 + $0x8] sm:$0xf]
      %v742 = vld [vmem:[%s683 + $0xc] sm:$0xf]
      %v743 = vld [vmem:[%s686] sm:$0x1]
      %v744 = vpack.c.bf16 %v733, %v733
      %v749 = vunpack.c.l.b16 %v735
      %v750 = vunpack.c.l.b16 %v736
      %v751 = vunpack.c.l.b16 %v737
      %v752 = vunpack.c.l.b16 %v738
      %v753 = vpack.c.b16 %v750, %v749
      %v754 = vpack.c.b16 %v752, %v751
      %vm757 = vcmask 261120
      %v759 = vsel %vm757, %v744, 0
      %761 = vmatprep.subr.bf16.mxu0 0
      %762 = vmatpush1.bf16.msra.mxu0 %v753
      %763 = vmatprep.subr.bf16.mxu0 0
      %764 = vmatpush1.bf16.msra.mxu0 %v754
      %765 = vmatprep.subr.bf16.mxu0 0
      %766 = vmatpush1.bf16.msra.mxu0 0
      %767 = vmatprep.subr.bf16.mxu0 0
      %768 = vmatpush1.bf16.msra.mxu0 0
      %769 = vmatprep.subr.bf16.mxu0 0
      %770 = vmatpush1.bf16.msra.mxu0 0
      %771 = vmatprep.subr.bf16.mxu0 0
      %772 = vmatpush1.bf16.msra.mxu0 0
      %773 = vmatprep.subr.bf16.mxu0 0
      %774 = vmatpush1.bf16.msra.mxu0 0
      %775 = vmatprep.subr.bf16.mxu0 0
      %776 = vmatpush1.bf16.msra.mxu0 0
      %777 = vmatprep.subr.bf16.mxu0 0
      %778 = vmatpush1.bf16.msra.mxu0 0
      %779 = vmatprep.subr.bf16.mxu0 0
      %780 = vmatpush1.bf16.msra.mxu0 0
      %781 = vmatprep.subr.bf16.mxu0 0
      %782 = vmatpush1.bf16.msra.mxu0 0
      %783 = vmatprep.subr.bf16.mxu0 0
      %784 = vmatpush1.bf16.msra.mxu0 0
      %785 = vmatprep.subr.bf16.mxu0 0
      %786 = vmatpush1.bf16.msra.mxu0 0
      %787 = vmatprep.subr.bf16.mxu0 0
      %788 = vmatpush1.bf16.msra.mxu0 0
      %789 = vmatprep.subr.bf16.mxu0 0
      %790 = vmatpush1.bf16.msra.mxu0 0
      %791 = vmatprep.subr.bf16.mxu0 0
      %792 = vmatpush1.bf16.msra.mxu0 0
      %793 = vmatprep.mubr.bf16.mxu0 0
      %794 = vmatmul.mubr.bf16.gmra.mrb[0].mxu0 %v759
      %v795 = vpop.f32.mrb[0].mxu0
      %v796 = vadd.f32 0.0, %v795
      %v797 = vpop.f32.mrb[0].mxu0
      %v798 = vpop.f32.mrb[0].mxu0
      %v799 = vpop.f32.mrb[0].mxu0
      %800 = vdwg.mxu0
      %v801 = vpack.c.bf16 %v796, %v796
      %803 = vrot.lane.b32.xlu0 %v801, 96
      %v804 = vpop.permute.xlu0 %803
      %vm805 = vcmask 64512
      %v807 = vsel %vm805, %v801, 0
      %v810 = vsel %vm805, %v804, 0
      %812 = vmatprep.subr.bf16.mxu0 0
      %813 = vmatpush1.bf16.xpose.msra.mxu0 %v810
      %814 = vmatprep.subr.bf16.mxu0 0
      %815 = vmatpush1.bf16.xpose.msra.mxu0 0
      %816 = vmatprep.subr.bf16.mxu0 0
      %817 = vmatpush1.bf16.xpose.msra.mxu0 0
      %818 = vmatprep.subr.bf16.mxu0 0
      %819 = vmatpush1.bf16.xpose.msra.mxu0 0
      %820 = vmatprep.subr.bf16.mxu0 0
      %821 = vmatpush1.bf16.xpose.msra.mxu0 0
      %822 = vmatprep.subr.bf16.mxu0 0
      %823 = vmatpush1.bf16.xpose.msra.mxu0 0
      %824 = vmatprep.subr.bf16.mxu0 0
      %825 = vmatpush1.bf16.xpose.msra.mxu0 0
      %826 = vmatprep.subr.bf16.mxu0 0
      %827 = vmatpush1.bf16.xpose.msra.mxu0 0
      %828 = vmatprep.subr.bf16.mxu0 0
      %829 = vmatpush1.bf16.xpose.msra.mxu0 0
      %830 = vmatprep.subr.bf16.mxu0 0
      %831 = vmatpush1.bf16.xpose.msra.mxu0 0
      %832 = vmatprep.subr.bf16.mxu0 0
      %833 = vmatpush1.bf16.xpose.msra.mxu0 0
      %834 = vmatprep.subr.bf16.mxu0 0
      %835 = vmatpush1.bf16.xpose.msra.mxu0 0
      %836 = vmatprep.subr.bf16.mxu0 0
      %837 = vmatpush1.bf16.xpose.msra.mxu0 0
      %838 = vmatprep.subr.bf16.mxu0 0
      %839 = vmatpush1.bf16.xpose.msra.mxu0 0
      %840 = vmatprep.subr.bf16.mxu0 0
      %841 = vmatpush1.bf16.xpose.msra.mxu0 0
      %842 = vmatprep.subr.bf16.mxu0 0
      %843 = vmatpush1.bf16.xpose.msra.mxu0 0
      %844 = vmatprep.mubr.bf16.mxu0 0
      %845 = vmatmul.mubr.bf16.gmra.mrb[0].mxu0 %v807
      %v846 = vpop.f32.mrb[0].mxu0
      %v847 = vadd.f32 0.0, %v846
      %v848 = vpop.f32.mrb[0].mxu0
      %v849 = vpop.f32.mrb[0].mxu0
      %v850 = vpop.f32.mrb[0].mxu0
      %851 = vdwg.mxu0
      %v852 = vsel %vm805, %v847, -inf
      %853 = vmax.xlane.f32.xlu0 %v852
      %v854 = vpop.xlane.xlu0 %853
      %v855 = vsub.f32 %v847, %v854
      %v856 = vmul.f32 %v855, 1.442695
      %v857 = vpow.pop %v856
      %v858 = vsel %vm805, %v857, 0.0
      %859 = vadd.xlane.f32.xlu0 %v858
      %v860 = vpop.xlane.xlu0 %859
      %v861 = vrcp.pop %v860
      %v862 = vmul.f32 %v857, %v861
      %v863 = vpack.c.bf16 %v862, %v862
      %864 = vrot.lane.b32.xlu0 %v801, 64
      %v865 = vpop.permute.xlu0 %864
      %v867 = vsel %vm805, %v863, 0
      %vm869 = vcmask 1043456
      %v871 = vsel %vm869, %v865, 0
      %873 = vmatprep.subr.bf16.mxu0 0
      %874 = vmatpush1.bf16.msra.mxu0 %v871
      %875 = vmatprep.subr.bf16.mxu0 0
      %876 = vmatpush1.bf16.msra.mxu0 0
      %877 = vmatprep.subr.bf16.mxu0 0
      %878 = vmatpush1.bf16.msra.mxu0 0
      %879 = vmatprep.subr.bf16.mxu0 0
      %880 = vmatpush1.bf16.msra.mxu0 0
      %881 = vmatprep.subr.bf16.mxu0 0
      %882 = vmatpush1.bf16.msra.mxu0 0
      %883 = vmatprep.subr.bf16.mxu0 0
      %884 = vmatpush1.bf16.msra.mxu0 0
      %885 = vmatprep.subr.bf16.mxu0 0
      %886 = vmatpush1.bf16.msra.mxu0 0
      %887 = vmatprep.subr.bf16.mxu0 0
      %888 = vmatpush1.bf16.msra.mxu0 0
      %889 = vmatprep.subr.bf16.mxu0 0
      %890 = vmatpush1.bf16.msra.mxu0 0
      %891 = vmatprep.subr.bf16.mxu0 0
      %892 = vmatpush1.bf16.msra.mxu0 0
      %893 = vmatprep.subr.bf16.mxu0 0
      %894 = vmatpush1.bf16.msra.mxu0 0
      %895 = vmatprep.subr.bf16.mxu0 0
      %896 = vmatpush1.bf16.msra.mxu0 0
      %897 = vmatprep.subr.bf16.mxu0 0
      %898 = vmatpush1.bf16.msra.mxu0 0
      %899 = vmatprep.subr.bf16.mxu0 0
      %900 = vmatpush1.bf16.msra.mxu0 0
      %901 = vmatprep.subr.bf16.mxu0 0
      %902 = vmatpush1.bf16.msra.mxu0 0
      %903 = vmatprep.subr.bf16.mxu0 0
      %904 = vmatpush1.bf16.msra.mxu0 0
      %905 = vmatprep.mubr.bf16.mxu0 0
      %906 = vmatmul.mubr.bf16.gmra.mrb[0].mxu0 %v867
      %v907 = vpop.f32.mrb[0].mxu0
      %v908 = vadd.f32 0.0, %v907
      %v909 = vpop.f32.mrb[0].mxu0
      %v910 = vpop.f32.mrb[0].mxu0
      %v911 = vpop.f32.mrb[0].mxu0
      %912 = vdwg.mxu0
      %913 = vrot.lane.b32.xlu0 %v801, 120
      %v914 = vpop.permute.xlu0 %913
      %915 = vrot.lane.b32.xlu0 %v801, 88
      %v916 = vpop.permute.xlu0 %915
      %v918 = vsel %vm805, %v914, 0
      %v921 = vsel %vm805, %v916, 0
      %923 = vmatprep.subr.bf16.mxu0 0
      %924 = vmatpush1.bf16.xpose.msra.mxu0 %v921
      %925 = vmatprep.subr.bf16.mxu0 0
      %926 = vmatpush1.bf16.xpose.msra.mxu0 0
      %927 = vmatprep.subr.bf16.mxu0 0
      %928 = vmatpush1.bf16.xpose.msra.mxu0 0
      %929 = vmatprep.subr.bf16.mxu0 0
      %930 = vmatpush1.bf16.xpose.msra.mxu0 0
      %931 = vmatprep.subr.bf16.mxu0 0
      %932 = vmatpush1.bf16.xpose.msra.mxu0 0
      %933 = vmatprep.subr.bf16.mxu0 0
      %934 = vmatpush1.bf16.xpose.msra.mxu0 0
      %935 = vmatprep.subr.bf16.mxu0 0
      %936 = vmatpush1.bf16.xpose.msra.mxu0 0
      %937 = vmatprep.subr.bf16.mxu0 0
      %938 = vmatpush1.bf16.xpose.msra.mxu0 0
      %939 = vmatprep.subr.bf16.mxu0 0
      %940 = vmatpush1.bf16.xpose.msra.mxu0 0
      %941 = vmatprep.subr.bf16.mxu0 0
      %942 = vmatpush1.bf16.xpose.msra.mxu0 0
      %943 = vmatprep.subr.bf16.mxu0 0
      %944 = vmatpush1.bf16.xpose.msra.mxu0 0
      %945 = vmatprep.subr.bf16.mxu0 0
      %946 = vmatpush1.bf16.xpose.msra.mxu0 0
      %947 = vmatprep.subr.bf16.mxu0 0
      %948 = vmatpush1.bf16.xpose.msra.mxu0 0
      %949 = vmatprep.subr.bf16.mxu0 0
      %950 = vmatpush1.bf16.xpose.msra.mxu0 0
      %951 = vmatprep.subr.bf16.mxu0 0
      %952 = vmatpush1.bf16.xpose.msra.mxu0 0
      %953 = vmatprep.subr.bf16.mxu0 0
      %954 = vmatpush1.bf16.xpose.msra.mxu0 0
      %955 = vmatprep.mubr.bf16.mxu0 0
      %956 = vmatmul.mubr.bf16.gmra.mrb[0].mxu0 %v918
      %v957 = vpop.f32.mrb[0].mxu0
      %v958 = vadd.f32 0.0, %v957
      %v959 = vpop.f32.mrb[0].mxu0
      %v960 = vpop.f32.mrb[0].mxu0
      %v961 = vpop.f32.mrb[0].mxu0
      %962 = vdwg.mxu0
      %v963 = vsel %vm805, %v958, -inf
      %964 = vmax.xlane.f32.xlu0 %v963
      %v965 = vpop.xlane.xlu0 %964
      %v966 = vsub.f32 %v958, %v965
      %v967 = vmul.f32 %v966, 1.442695
      %v968 = vpow.pop %v967
      %v969 = vsel %vm805, %v968, 0.0
      %970 = vadd.xlane.f32.xlu0 %v969
      %v971 = vpop.xlane.xlu0 %970
      %v972 = vrcp.pop %v971
      %v973 = vmul.f32 %v968, %v972
      %v974 = vpack.c.bf16 %v973, %v973
      %975 = vrot.lane.b32.xlu0 %v801, 56
      %v976 = vpop.permute.xlu0 %975
      %v978 = vsel %vm805, %v974, 0
      %v981 = vsel %vm869, %v976, 0
      %983 = vmatprep.subr.bf16.mxu0 0
      %984 = vmatpush1.bf16.msra.mxu0 %v981
      %985 = vmatprep.subr.bf16.mxu0 0
      %986 = vmatpush1.bf16.msra.mxu0 0
      %987 = vmatprep.subr.bf16.mxu0 0
      %988 = vmatpush1.bf16.msra.mxu0 0
      %989 = vmatprep.subr.bf16.mxu0 0
      %990 = vmatpush1.bf16.msra.mxu0 0
      %991 = vmatprep.subr.bf16.mxu0 0
      %992 = vmatpush1.bf16.msra.mxu0 0
      %993 = vmatprep.subr.bf16.mxu0 0
      %994 = vmatpush1.bf16.msra.mxu0 0
      %995 = vmatprep.subr.bf16.mxu0 0
      %996 = vmatpush1.bf16.msra.mxu0 0
      %997 = vmatprep.subr.bf16.mxu0 0
      %998 = vmatpush1.bf16.msra.mxu0 0
      %999 = vmatprep.subr.bf16.mxu0 0
      %1000 = vmatpush1.bf16.msra.mxu0 0
      %1001 = vmatprep.subr.bf16.mxu0 0
      %1002 = vmatpush1.bf16.msra.mxu0 0
      %1003 = vmatprep.subr.bf16.mxu0 0
      %1004 = vmatpush1.bf16.msra.mxu0 0
      %1005 = vmatprep.subr.bf16.mxu0 0
      %1006 = vmatpush1.bf16.msra.mxu0 0
      %1007 = vmatprep.subr.bf16.mxu0 0
      %1008 = vmatpush1.bf16.msra.mxu0 0
      %1009 = vmatprep.subr.bf16.mxu0 0
      %1010 = vmatpush1.bf16.msra.mxu0 0
      %1011 = vmatprep.subr.bf16.mxu0 0
      %1012 = vmatpush1.bf16.msra.mxu0 0
      %1013 = vmatprep.subr.bf16.mxu0 0
      %1014 = vmatpush1.bf16.msra.mxu0 0
      %1015 = vmatprep.mubr.bf16.mxu0 0
      %1016 = vmatmul.mubr.bf16.gmra.mrb[0].mxu0 %v978
      %v1017 = vpop.f32.mrb[0].mxu0
      %v1018 = vadd.f32 0.0, %v1017
      %v1019 = vpop.f32.mrb[0].mxu0
      %v1020 = vpop.f32.mrb[0].mxu0
      %v1021 = vpop.f32.mrb[0].mxu0
      %1022 = vdwg.mxu0
      %1023 = vrot.lane.b32.xlu0 %v801, 112
      %v1024 = vpop.permute.xlu0 %1023
      %1025 = vrot.lane.b32.xlu0 %v801, 80
      %v1026 = vpop.permute.xlu0 %1025
      %v1028 = vsel %vm805, %v1024, 0
      %v1031 = vsel %vm805, %v1026, 0
      %1033 = vmatprep.subr.bf16.mxu0 0
      %1034 = vmatpush1.bf16.xpose.msra.mxu0 %v1031
      %1035 = vmatprep.subr.bf16.mxu0 0
      %1036 = vmatpush1.bf16.xpose.msra.mxu0 0
      %1037 = vmatprep.subr.bf16.mxu0 0
      %1038 = vmatpush1.bf16.xpose.msra.mxu0 0
      %1039 = vmatprep.subr.bf16.mxu0 0
      %1040 = vmatpush1.bf16.xpose.msra.mxu0 0
      %1041 = vmatprep.subr.bf16.mxu0 0
      %1042 = vmatpush1.bf16.xpose.msra.mxu0 0
      %1043 = vmatprep.subr.bf16.mxu0 0
      %1044 = vmatpush1.bf16.xpose.msra.mxu0 0
      %1045 = vmatprep.subr.bf16.mxu0 0
      %1046 = vmatpush1.bf16.xpose.msra.mxu0 0
      %1047 = vmatprep.subr.bf16.mxu0 0
      %1048 = vmatpush1.bf16.xpose.msra.mxu0 0
      %1049 = vmatprep.subr.bf16.mxu0 0
      %1050 = vmatpush1.bf16.xpose.msra.mxu0 0
      %1051 = vmatprep.subr.bf16.mxu0 0
      %1052 = vmatpush1.bf16.xpose.msra.mxu0 0
      %1053 = vmatprep.subr.bf16.mxu0 0
      %1054 = vmatpush1.bf16.xpose.msra.mxu0 0
      %1055 = vmatprep.subr.bf16.mxu0 0
      %1056 = vmatpush1.bf16.xpose.msra.mxu0 0
      %1057 = vmatprep.subr.bf16.mxu0 0
      %1058 = vmatpush1.bf16.xpose.msra.mxu0 0
      %1059 = vmatprep.subr.bf16.mxu0 0
      %1060 = vmatpush1.bf16.xpose.msra.mxu0 0
      %1061 = vmatprep.subr.bf16.mxu0 0
      %1062 = vmatpush1.bf16.xpose.msra.mxu0 0
      %1063 = vmatprep.subr.bf16.mxu0 0
      %1064 = vmatpush1.bf16.xpose.msra.mxu0 0
      %1065 = vmatprep.mubr.bf16.mxu0 0
      %1066 = vmatmul.mubr.bf16.gmra.mrb[0].mxu0 %v1028
      %v1067 = vpop.f32.mrb[0].mxu0
      %v1068 = vadd.f32 0.0, %v1067
      %v1069 = vpop.f32.mrb[0].mxu0
      %v1070 = vpop.f32.mrb[0].mxu0
      %v1071 = vpop.f32.mrb[0].mxu0
      %1072 = vdwg.mxu0
      %v1073 = vsel %vm805, %v1068, -inf
      %1074 = vmax.xlane.f32.xlu0 %v1073
      %v1075 = vpop.xlane.xlu0 %1074
      %v1076 = vsub.f32 %v1068, %v1075
      %v1077 = vmul.f32 %v1076, 1.442695
      %v1078 = vpow.pop %v1077
      %v1079 = vsel %vm805, %v1078, 0.0
      %1080 = vadd.xlane.f32.xlu0 %v1079
      %v1081 = vpop.xlane.xlu0 %1080
      %v1082 = vrcp.pop %v1081
      %v1083 = vmul.f32 %v1078, %v1082
      %v1084 = vpack.c.bf16 %v1083, %v1083
      %1085 = vrot.lane.b32.xlu0 %v801, 48
      %v1086 = vpop.permute.xlu0 %1085
      %v1088 = vsel %vm805, %v1084, 0
      %v1091 = vsel %vm869, %v1086, 0
      %1093 = vmatprep.subr.bf16.mxu0 0
      %1094 = vmatpush1.bf16.msra.mxu0 %v1091
      %1095 = vmatprep.subr.bf16.mxu0 0
      %1096 = vmatpush1.bf16.msra.mxu0 0
      %1097 = vmatprep.subr.bf16.mxu0 0
      %1098 = vmatpush1.bf16.msra.mxu0 0
      %1099 = vmatprep.subr.bf16.mxu0 0
      %1100 = vmatpush1.bf16.msra.mxu0 0
      %1101 = vmatprep.subr.bf16.mxu0 0
      %1102 = vmatpush1.bf16.msra.mxu0 0
      %1103 = vmatprep.subr.bf16.mxu0 0
      %1104 = vmatpush1.bf16.msra.mxu0 0
      %1105 = vmatprep.subr.bf16.mxu0 0
      %1106 = vmatpush1.bf16.msra.mxu0 0
      %1107 = vmatprep.subr.bf16.mxu0 0
      %1108 = vmatpush1.bf16.msra.mxu0 0
      %1109 = vmatprep.subr.bf16.mxu0 0
      %1110 = vmatpush1.bf16.msra.mxu0 0
      %1111 = vmatprep.subr.bf16.mxu0 0
      %1112 = vmatpush1.bf16.msra.mxu0 0
      %1113 = vmatprep.subr.bf16.mxu0 0
      %1114 = vmatpush1.bf16.msra.mxu0 0
      %1115 = vmatprep.subr.bf16.mxu0 0
      %1116 = vmatpush1.bf16.msra.mxu0 0
      %1117 = vmatprep.subr.bf16.mxu0 0
      %1118 = vmatpush1.bf16.msra.mxu0 0
      %1119 = vmatprep.subr.bf16.mxu0 0
      %1120 = vmatpush1.bf16.msra.mxu0 0
      %1121 = vmatprep.subr.bf16.mxu0 0
      %1122 = vmatpush1.bf16.msra.mxu0 0
      %1123 = vmatprep.subr.bf16.mxu0 0
      %1124 = vmatpush1.bf16.msra.mxu0 0
      %1125 = vmatprep.mubr.bf16.mxu0 0
      %1126 = vmatmul.mubr.bf16.gmra.mrb[0].mxu0 %v1088
      %v1127 = vpop.f32.mrb[0].mxu0
      %v1128 = vadd.f32 0.0, %v1127
      %v1129 = vpop.f32.mrb[0].mxu0
      %v1130 = vpop.f32.mrb[0].mxu0
      %v1131 = vpop.f32.mrb[0].mxu0
      %1132 = vdwg.mxu0
      %1133 = vrot.lane.b32.xlu0 %v801, 104
      %v1134 = vpop.permute.xlu0 %1133
      %1135 = vrot.lane.b32.xlu0 %v801, 72
      %v1136 = vpop.permute.xlu0 %1135
      %v1138 = vsel %vm805, %v1134, 0
      %v1141 = vsel %vm805, %v1136, 0
      %1143 = vmatprep.subr.bf16.mxu0 0
      %1144 = vmatpush1.bf16.xpose.msra.mxu0 %v1141
      %1145 = vmatprep.subr.bf16.mxu0 0
      %1146 = vmatpush1.bf16.xpose.msra.mxu0 0
      %1147 = vmatprep.subr.bf16.mxu0 0
      %1148 = vmatpush1.bf16.xpose.msra.mxu0 0
      %1149 = vmatprep.subr.bf16.mxu0 0
      %1150 = vmatpush1.bf16.xpose.msra.mxu0 0
      %1151 = vmatprep.subr.bf16.mxu0 0
      %1152 = vmatpush1.bf16.xpose.msra.mxu0 0
      %1153 = vmatprep.subr.bf16.mxu0 0
      %1154 = vmatpush1.bf16.xpose.msra.mxu0 0
      %1155 = vmatprep.subr.bf16.mxu0 0
      %1156 = vmatpush1.bf16.xpose.msra.mxu0 0
      %1157 = vmatprep.subr.bf16.mxu0 0
      %1158 = vmatpush1.bf16.xpose.msra.mxu0 0
      %1159 = vmatprep.subr.bf16.mxu0 0
      %1160 = vmatpush1.bf16.xpose.msra.mxu0 0
      %1161 = vmatprep.subr.bf16.mxu0 0
      %1162 = vmatpush1.bf16.xpose.msra.mxu0 0
      %1163 = vmatprep.subr.bf16.mxu0 0
      %1164 = vmatpush1.bf16.xpose.msra.mxu0 0
      %1165 = vmatprep.subr.bf16.mxu0 0
      %1166 = vmatpush1.bf16.xpose.msra.mxu0 0
      %1167 = vmatprep.subr.bf16.mxu0 0
      %1168 = vmatpush1.bf16.xpose.msra.mxu0 0
      %1169 = vmatprep.subr.bf16.mxu0 0
      %1170 = vmatpush1.bf16.xpose.msra.mxu0 0
      %1171 = vmatprep.subr.bf16.mxu0 0
      %1172 = vmatpush1.bf16.xpose.msra.mxu0 0
      %1173 = vmatprep.subr.bf16.mxu0 0
      %1174 = vmatpush1.bf16.xpose.msra.mxu0 0
      %1175 = vmatprep.mubr.bf16.mxu0 0
      %1176 = vmatmul.mubr.bf16.gmra.mrb[0].mxu0 %v1138
      %v1177 = vpop.f32.mrb[0].mxu0
      %v1178 = vadd.f32 0.0, %v1177
      %v1179 = vpop.f32.mrb[0].mxu0
      %v1180 = vpop.f32.mrb[0].mxu0
      %v1181 = vpop.f32.mrb[0].mxu0
      %1182 = vdwg.mxu0
      %v1183 = vsel %vm805, %v1178, -inf
      %1184 = vmax.xlane.f32.xlu0 %v1183
      %v1185 = vpop.xlane.xlu0 %1184
      %v1186 = vsub.f32 %v1178, %v1185
      %v1187 = vmul.f32 %v1186, 1.442695
      %v1188 = vpow.pop %v1187
      %v1189 = vsel %vm805, %v1188, 0.0
      %1190 = vadd.xlane.f32.xlu0 %v1189
      %v1191 = vpop.xlane.xlu0 %1190
      %v1192 = vrcp.pop %v1191
      %v1193 = vmul.f32 %v1188, %v1192
      %v1194 = vpack.c.bf16 %v1193, %v1193
      %1195 = vrot.lane.b32.xlu0 %v801, 40
      %v1196 = vpop.permute.xlu0 %1195
      %v1198 = vsel %vm805, %v1194, 0
      %v1201 = vsel %vm869, %v1196, 0
      %1203 = vmatprep.subr.bf16.mxu0 0
      %1204 = vmatpush1.bf16.msra.mxu0 %v1201
      %1205 = vmatprep.subr.bf16.mxu0 0
      %1206 = vmatpush1.bf16.msra.mxu0 0
      %1207 = vmatprep.subr.bf16.mxu0 0
      %1208 = vmatpush1.bf16.msra.mxu0 0
      %1209 = vmatprep.subr.bf16.mxu0 0
      %1210 = vmatpush1.bf16.msra.mxu0 0
      %1211 = vmatprep.subr.bf16.mxu0 0
      %1212 = vmatpush1.bf16.msra.mxu0 0
      %1213 = vmatprep.subr.bf16.mxu0 0
      %1214 = vmatpush1.bf16.msra.mxu0 0
      %1215 = vmatprep.subr.bf16.mxu0 0
      %1216 = vmatpush1.bf16.msra.mxu0 0
      %1217 = vmatprep.subr.bf16.mxu0 0
      %1218 = vmatpush1.bf16.msra.mxu0 0
      %1219 = vmatprep.subr.bf16.mxu0 0
      %1220 = vmatpush1.bf16.msra.mxu0 0
      %1221 = vmatprep.subr.bf16.mxu0 0
      %1222 = vmatpush1.bf16.msra.mxu0 0
      %1223 = vmatprep.subr.bf16.mxu0 0
      %1224 = vmatpush1.bf16.msra.mxu0 0
      %1225 = vmatprep.subr.bf16.mxu0 0
      %1226 = vmatpush1.bf16.msra.mxu0 0
      %1227 = vmatprep.subr.bf16.mxu0 0
      %1228 = vmatpush1.bf16.msra.mxu0 0
      %1229 = vmatprep.subr.bf16.mxu0 0
      %1230 = vmatpush1.bf16.msra.mxu0 0
      %1231 = vmatprep.subr.bf16.mxu0 0
      %1232 = vmatpush1.bf16.msra.mxu0 0
      %1233 = vmatprep.subr.bf16.mxu0 0
      %1234 = vmatpush1.bf16.msra.mxu0 0
      %1235 = vmatprep.mubr.bf16.mxu0 0
      %1236 = vmatmul.mubr.bf16.gmra.mrb[0].mxu0 %v1198
      %v1237 = vpop.f32.mrb[0].mxu0
      %v1238 = vadd.f32 0.0, %v1237
      %v1239 = vpop.f32.mrb[0].mxu0
      %v1240 = vpop.f32.mrb[0].mxu0
      %v1241 = vpop.f32.mrb[0].mxu0
      %1242 = vdwg.mxu0
      %1244 = vrot.lane.b32.xlu0 %v1018, 8
      %v1245 = vpop.permute.xlu0 %1244
      %1248 = vrot.lane.b32.xlu0 %v1128, 16
      %v1249 = vpop.permute.xlu0 %1248
      %1252 = vrot.lane.b32.xlu0 %v1238, 24
      %v1253 = vpop.permute.xlu0 %1252
      %v1255 = vsel %vm805, %v908, %v1245
      %vm1256 = vcmask 130048
      %v1257 = vsel %vm1256, %v1255, %v1249
      %vm1258 = vcmask 195584
      %v1259 = vsel %vm1258, %v1257, %v1253
      %v1260 = vpack.c.bf16 %v1259, %v1259
      %v1262 = vlaneseq
      %v1263 = vshrl.u32 %v1262, 7
      %v1264 = vsub.s32 0, %v1263
      %v1265 = vrot.slane %v743, %v1264
      %v1271 = vunpack.c.l.b16 %v739
      %v1272 = vunpack.c.l.b16 %v740
      %v1273 = vunpack.c.l.b16 %v741
      %v1274 = vunpack.c.l.b16 %v742
      %v1275 = vpack.c.b16 %v1272, %v1271
      %v1276 = vpack.c.b16 %v1274, %v1273
      %v1280 = vsel %vm757, %v1260, 0
      %1282 = vmatprep.subr.bf16.mxu0 0
      %1283 = vmatpush1.bf16.msra.mxu0 %v1275
      %1284 = vmatprep.subr.bf16.mxu0 0
      %1285 = vmatpush1.bf16.msra.mxu0 %v1276
      %1286 = vmatprep.subr.bf16.mxu0 0
      %1287 = vmatpush1.bf16.msra.mxu0 0
      %1288 = vmatprep.subr.bf16.mxu0 0
      %1289 = vmatpush1.bf16.msra.mxu0 0
      %1290 = vmatprep.subr.bf16.mxu0 0
      %1291 = vmatpush1.bf16.msra.mxu0 0
      %1292 = vmatprep.subr.bf16.mxu0 0
      %1293 = vmatpush1.bf16.msra.mxu0 0
      %1294 = vmatprep.subr.bf16.mxu0 0
      %1295 = vmatpush1.bf16.msra.mxu0 0
      %1296 = vmatprep.subr.bf16.mxu0 0
      %1297 = vmatpush1.bf16.msra.mxu0 0
      %1298 = vmatprep.subr.bf16.mxu0 0
      %1299 = vmatpush1.bf16.msra.mxu0 0
      %1300 = vmatprep.subr.bf16.mxu0 0
      %1301 = vmatpush1.bf16.msra.mxu0 0
      %1302 = vmatprep.subr.bf16.mxu0 0
      %1303 = vmatpush1.bf16.msra.mxu0 0
      %1304 = vmatprep.subr.bf16.mxu0 0
      %1305 = vmatpush1.bf16.msra.mxu0 0
      %1306 = vmatprep.subr.bf16.mxu0 0
      %1307 = vmatpush1.bf16.msra.mxu0 0
      %1308 = vmatprep.subr.bf16.mxu0 0
      %1309 = vmatpush1.bf16.msra.mxu0 0
      %1310 = vmatprep.subr.bf16.mxu0 0
      %1311 = vmatpush1.bf16.msra.mxu0 0
      %1312 = vmatprep.subr.bf16.mxu0 0
      %1313 = vmatpush1.bf16.msra.mxu0 0
      %1314 = vmatprep.mubr.bf16.mxu0 0
      %1315 = vmatmul.mubr.bf16.gmra.mrb[0].mxu0 %v1280
      %v1316 = vpop.f32.mrb[0].mxu0
      %v1317 = vadd.f32 %v1265, %v1316
      %v1318 = vpop.f32.mrb[0].mxu0
      %v1319 = vpop.f32.mrb[0].mxu0
      %v1320 = vpop.f32.mrb[0].mxu0
      %1321 = vdwg.mxu0
      %v1322 = vadd.f32 %v1317, %v733
      %v1323 = vld [vmem:[%s689] sm:$0x1]
      %v1324 = vld [vmem:[%s692] sm:$0x1]
      %v1325 = vsel %vm757, %v1322, 0.0
      %1326 = vadd.xlane.f32.xlu0 %v1325
      %v1327 = vpop.xlane.xlu0 %1326
      %v1328 = vrcp.pop 32.0
      %v1329 = vmul.f32 %v1327, %v1328
      %v1330 = vsub.f32 %v1322, %v1329
      %v1331 = vmul.f32 %v1330, %v1330
      %v1332 = vsel %vm757, %v1331, 0.0
      %1333 = vadd.xlane.f32.xlu0 %v1332
      %v1334 = vpop.xlane.xlu0 %1333
      %v1335 = vmul.f32 %v1334, %v1328
      %v1336 = vadd.f32 %v1335, 1e-05
      %v1337 = vrsqrt.pop %v1336
      %v1338 = vmul.f32 %v1330, %v1337
      %v1340 = vlaneseq
      %v1341 = vshrl.u32 %v1340, 7
      %v1342 = vsub.s32 0, %v1341
      %v1343 = vrot.slane %v1323, %v1342
      %v1345 = vmul.f32 %v1338, %v1343
      %v1347 = vlaneseq
      %v1348 = vshrl.u32 %v1347, 7
      %v1349 = vsub.s32 0, %v1348
      %v1350 = vrot.slane %v1324, %v1349
      %v1352 = vadd.f32 %v1345, %v1350
      %v1353 = vpack.c.bf16 %v734, %v734
      %v1355 = vsel %vm757, %v1353, 0
      %1357 = vmatprep.subr.bf16.mxu0 0
      %1358 = vmatpush1.bf16.msra.mxu0 %v753
      %1359 = vmatprep.subr.bf16.mxu0 0
      %1360 = vmatpush1.bf16.msra.mxu0 %v754
      %1361 = vmatprep.subr.bf16.mxu0 0
      %1362 = vmatpush1.bf16.msra.mxu0 0
      %1363 = vmatprep.subr.bf16.mxu0 0
      %1364 = vmatpush1.bf16.msra.mxu0 0
      %1365 = vmatprep.subr.bf16.mxu0 0
      %1366 = vmatpush1.bf16.msra.mxu0 0
      %1367 = vmatprep.subr.bf16.mxu0 0
      %1368 = vmatpush1.bf16.msra.mxu0 0
      %1369 = vmatprep.subr.bf16.mxu0 0
      %1370 = vmatpush1.bf16.msra.mxu0 0
      %1371 = vmatprep.subr.bf16.mxu0 0
      %1372 = vmatpush1.bf16.msra.mxu0 0
      %1373 = vmatprep.subr.bf16.mxu0 0
      %1374 = vmatpush1.bf16.msra.mxu0 0
      %1375 = vmatprep.subr.bf16.mxu0 0
      %1376 = vmatpush1.bf16.msra.mxu0 0
      %1377 = vmatprep.subr.bf16.mxu0 0
      %1378 = vmatpush1.bf16.msra.mxu0 0
      %1379 = vmatprep.subr.bf16.mxu0 0
      %1380 = vmatpush1.bf16.msra.mxu0 0
      %1381 = vmatprep.subr.bf16.mxu0 0
      %1382 = vmatpush1.bf16.msra.mxu0 0
      %1383 = vmatprep.subr.bf16.mxu0 0
      %1384 = vmatpush1.bf16.msra.mxu0 0
      %1385 = vmatprep.subr.bf16.mxu0 0
      %1386 = vmatpush1.bf16.msra.mxu0 0
      %1387 = vmatprep.subr.bf16.mxu0 0
      %1388 = vmatpush1.bf16.msra.mxu0 0
      %1389 = vmatprep.mubr.bf16.mxu0 0
      %1390 = vmatmul.mubr.bf16.gmra.mrb[0].mxu0 %v1355
      %v1391 = vpop.f32.mrb[0].mxu0
      %v1392 = vadd.f32 0.0, %v1391
      %v1393 = vpop.f32.mrb[0].mxu0
      %v1394 = vpop.f32.mrb[0].mxu0
      %v1395 = vpop.f32.mrb[0].mxu0
      %1396 = vdwg.mxu0
      %v1397 = vpack.c.bf16 %v1352, %v1352
      %1398 = vrot.lane.b32.xlu0 %v753, 64
      %v1399 = vpop.permute.xlu0 %1398
      %1400 = vrot.lane.b32.xlu0 %v754, 64
      %v1401 = vpop.permute.xlu0 %1400
      %v1405 = vsel %vm757, %v1397, 0
      %1407 = vmatprep.subr.bf16.mxu0 0
      %1408 = vmatpush1.bf16.msra.mxu0 %v1399
      %1409 = vmatprep.subr.bf16.mxu0 0
      %1410 = vmatpush1.bf16.msra.mxu0 %v1401
      %1411 = vmatprep.subr.bf16.mxu0 0
      %1412 = vmatpush1.bf16.msra.mxu0 0
      %1413 = vmatprep.subr.bf16.mxu0 0
      %1414 = vmatpush1.bf16.msra.mxu0 0
      %1415 = vmatprep.subr.bf16.mxu0 0
      %1416 = vmatpush1.bf16.msra.mxu0 0
      %1417 = vmatprep.subr.bf16.mxu0 0
      %1418 = vmatpush1.bf16.msra.mxu0 0
      %1419 = vmatprep.subr.bf16.mxu0 0
      %1420 = vmatpush1.bf16.msra.mxu0 0
      %1421 = vmatprep.subr.bf16.mxu0 0
      %1422 = vmatpush1.bf16.msra.mxu0 0
      %1423 = vmatprep.subr.bf16.mxu0 0
      %1424 = vmatpush1.bf16.msra.mxu0 0
      %1425 = vmatprep.subr.bf16.mxu0 0
      %1426 = vmatpush1.bf16.msra.mxu0 0
      %1427 = vmatprep.subr.bf16.mxu0 0
      %1428 = vmatpush1.bf16.msra.mxu0 0
      %1429 = vmatprep.subr.bf16.mxu0 0
      %1430 = vmatpush1.bf16.msra.mxu0 0
      %1431 = vmatprep.subr.bf16.mxu0 0
      %1432 = vmatpush1.bf16.msra.mxu0 0
      %1433 = vmatprep.subr.bf16.mxu0 0
      %1434 = vmatpush1.bf16.msra.mxu0 0
      %1435 = vmatprep.subr.bf16.mxu0 0
      %1436 = vmatpush1.bf16.msra.mxu0 0
      %1437 = vmatprep.subr.bf16.mxu0 0
      %1438 = vmatpush1.bf16.msra.mxu0 0
      %1439 = vmatprep.mubr.bf16.mxu0 0
      %1440 = vmatmul.mubr.bf16.gmra.mrb[0].mxu0 %v1405
      %v1441 = vpop.f32.mrb[0].mxu0
      %v1442 = vadd.f32 0.0, %v1441
      %v1443 = vpop.f32.mrb[0].mxu0
      %v1444 = vpop.f32.mrb[0].mxu0
      %v1445 = vpop.f32.mrb[0].mxu0
      %1446 = vdwg.mxu0
      %v1447 = vpack.c.bf16 %v1392, %v1392
      %v1448 = vpack.c.bf16 %v1442, %v1442
      %1450 = vrot.lane.b32.xlu0 %v1447, 96
      %v1451 = vpop.permute.xlu0 %1450
      %v1453 = vsel %vm805, %v1447, 0
      %v1456 = vsel %vm805, %v1451, 0
      %1458 = vmatprep.subr.bf16.mxu0 0
      %1459 = vmatpush1.bf16.xpose.msra.mxu0 %v1456
      %1460 = vmatprep.subr.bf16.mxu0 0
      %1461 = vmatpush1.bf16.xpose.msra.mxu0 0
      %1462 = vmatprep.subr.bf16.mxu0 0
      %1463 = vmatpush1.bf16.xpose.msra.mxu0 0
      %1464 = vmatprep.subr.bf16.mxu0 0
      %1465 = vmatpush1.bf16.xpose.msra.mxu0 0
      %1466 = vmatprep.subr.bf16.mxu0 0
      %1467 = vmatpush1.bf16.xpose.msra.mxu0 0
      %1468 = vmatprep.subr.bf16.mxu0 0
      %1469 = vmatpush1.bf16.xpose.msra.mxu0 0
      %1470 = vmatprep.subr.bf16.mxu0 0
      %1471 = vmatpush1.bf16.xpose.msra.mxu0 0
      %1472 = vmatprep.subr.bf16.mxu0 0
      %1473 = vmatpush1.bf16.xpose.msra.mxu0 0
      %1474 = vmatprep.subr.bf16.mxu0 0
      %1475 = vmatpush1.bf16.xpose.msra.mxu0 0
      %1476 = vmatprep.subr.bf16.mxu0 0
      %1477 = vmatpush1.bf16.xpose.msra.mxu0 0
      %1478 = vmatprep.subr.bf16.mxu0 0
      %1479 = vmatpush1.bf16.xpose.msra.mxu0 0
      %1480 = vmatprep.subr.bf16.mxu0 0
      %1481 = vmatpush1.bf16.xpose.msra.mxu0 0
      %1482 = vmatprep.subr.bf16.mxu0 0
      %1483 = vmatpush1.bf16.xpose.msra.mxu0 0
      %1484 = vmatprep.subr.bf16.mxu0 0
      %1485 = vmatpush1.bf16.xpose.msra.mxu0 0
      %1486 = vmatprep.subr.bf16.mxu0 0
      %1487 = vmatpush1.bf16.xpose.msra.mxu0 0
      %1488 = vmatprep.subr.bf16.mxu0 0
      %1489 = vmatpush1.bf16.xpose.msra.mxu0 0
      %1490 = vmatprep.mubr.bf16.mxu0 0
      %1491 = vmatmul.mubr.bf16.gmra.mrb[0].mxu0 %v1453
      %v1492 = vpop.f32.mrb[0].mxu0
      %v1493 = vadd.f32 0.0, %v1492
      %v1494 = vpop.f32.mrb[0].mxu0
      %v1495 = vpop.f32.mrb[0].mxu0
      %v1496 = vpop.f32.mrb[0].mxu0
      %1497 = vdwg.mxu0
      %v1498 = vsel %vm805, %v1493, -inf
      %1499 = vmax.xlane.f32.xlu0 %v1498
      %v1500 = vpop.xlane.xlu0 %1499
      %v1501 = vsub.f32 %v1493, %v1500
      %v1502 = vmul.f32 %v1501, 1.442695
      %v1503 = vpow.pop %v1502
      %v1504 = vsel %vm805, %v1503, 0.0
      %1505 = vadd.xlane.f32.xlu0 %v1504
      %v1506 = vpop.xlane.xlu0 %1505
      %v1507 = vrcp.pop %v1506
      %v1508 = vmul.f32 %v1503, %v1507
      %v1509 = vpack.c.bf16 %v1508, %v1508
      %v1511 = vsel %vm805, %v1509, 0
      %v1514 = vsel %vm869, %v1448, 0
      %1516 = vmatprep.subr.bf16.mxu0 0
      %1517 = vmatpush1.bf16.msra.mxu0 %v1514
      %1518 = vmatprep.subr.bf16.mxu0 0
      %1519 = vmatpush1.bf16.msra.mxu0 0
      %1520 = vmatprep.subr.bf16.mxu0 0
      %1521 = vmatpush1.bf16.msra.mxu0 0
      %1522 = vmatprep.subr.bf16.mxu0 0
      %1523 = vmatpush1.bf16.msra.mxu0 0
      %1524 = vmatprep.subr.bf16.mxu0 0
      %1525 = vmatpush1.bf16.msra.mxu0 0
      %1526 = vmatprep.subr.bf16.mxu0 0
      %1527 = vmatpush1.bf16.msra.mxu0 0
      %1528 = vmatprep.subr.bf16.mxu0 0
      %1529 = vmatpush1.bf16.msra.mxu0 0
      %1530 = vmatprep.subr.bf16.mxu0 0
      %1531 = vmatpush1.bf16.msra.mxu0 0
      %1532 = vmatprep.subr.bf16.mxu0 0
      %1533 = vmatpush1.bf16.msra.mxu0 0
      %1534 = vmatprep.subr.bf16.mxu0 0
      %1535 = vmatpush1.bf16.msra.mxu0 0
      %1536 = vmatprep.subr.bf16.mxu0 0
      %1537 = vmatpush1.bf16.msra.mxu0 0
      %1538 = vmatprep.subr.bf16.mxu0 0
      %1539 = vmatpush1.bf16.msra.mxu0 0
      %1540 = vmatprep.subr.bf16.mxu0 0
      %1541 = vmatpush1.bf16.msra.mxu0 0
      %1542 = vmatprep.subr.bf16.mxu0 0
      %1543 = vmatpush1.bf16.msra.mxu0 0
      %1544 = vmatprep.subr.bf16.mxu0 0
      %1545 = vmatpush1.bf16.msra.mxu0 0
      %1546 = vmatprep.subr.bf16.mxu0 0
      %1547 = vmatpush1.bf16.msra.mxu0 0
      %1548 = vmatprep.mubr.bf16.mxu0 0
      %1549 = vmatmul.mubr.bf16.gmra.mrb[0].mxu0 %v1511
      %v1550 = vpop.f32.mrb[0].mxu0
      %v1551 = vadd.f32 0.0, %v1550
      %v1552 = vpop.f32.mrb[0].mxu0
      %v1553 = vpop.f32.mrb[0].mxu0
      %v1554 = vpop.f32.mrb[0].mxu0
      %1555 = vdwg.mxu0
      %1556 = vrot.lane.b32.xlu0 %v1447, 120
      %v1557 = vpop.permute.xlu0 %1556
      %1558 = vrot.lane.b32.xlu0 %v1447, 88
      %v1559 = vpop.permute.xlu0 %1558
      %v1561 = vsel %vm805, %v1557, 0
      %v1564 = vsel %vm805, %v1559, 0
      %1566 = vmatprep.subr.bf16.mxu0 0
      %1567 = vmatpush1.bf16.xpose.msra.mxu0 %v1564
      %1568 = vmatprep.subr.bf16.mxu0 0
      %1569 = vmatpush1.bf16.xpose.msra.mxu0 0
      %1570 = vmatprep.subr.bf16.mxu0 0
      %1571 = vmatpush1.bf16.xpose.msra.mxu0 0
      %1572 = vmatprep.subr.bf16.mxu0 0
      %1573 = vmatpush1.bf16.xpose.msra.mxu0 0
      %1574 = vmatprep.subr.bf16.mxu0 0
      %1575 = vmatpush1.bf16.xpose.msra.mxu0 0
      %1576 = vmatprep.subr.bf16.mxu0 0
      %1577 = vmatpush1.bf16.xpose.msra.mxu0 0
      %1578 = vmatprep.subr.bf16.mxu0 0
      %1579 = vmatpush1.bf16.xpose.msra.mxu0 0
      %1580 = vmatprep.subr.bf16.mxu0 0
      %1581 = vmatpush1.bf16.xpose.msra.mxu0 0
      %1582 = vmatprep.subr.bf16.mxu0 0
      %1583 = vmatpush1.bf16.xpose.msra.mxu0 0
      %1584 = vmatprep.subr.bf16.mxu0 0
      %1585 = vmatpush1.bf16.xpose.msra.mxu0 0
      %1586 = vmatprep.subr.bf16.mxu0 0
      %1587 = vmatpush1.bf16.xpose.msra.mxu0 0
      %1588 = vmatprep.subr.bf16.mxu0 0
      %1589 = vmatpush1.bf16.xpose.msra.mxu0 0
      %1590 = vmatprep.subr.bf16.mxu0 0
      %1591 = vmatpush1.bf16.xpose.msra.mxu0 0
      %1592 = vmatprep.subr.bf16.mxu0 0
      %1593 = vmatpush1.bf16.xpose.msra.mxu0 0
      %1594 = vmatprep.subr.bf16.mxu0 0
      %1595 = vmatpush1.bf16.xpose.msra.mxu0 0
      %1596 = vmatprep.subr.bf16.mxu0 0
      %1597 = vmatpush1.bf16.xpose.msra.mxu0 0
      %1598 = vmatprep.mubr.bf16.mxu0 0
      %1599 = vmatmul.mubr.bf16.gmra.mrb[0].mxu0 %v1561
      %v1600 = vpop.f32.mrb[0].mxu0
      %v1601 = vadd.f32 0.0, %v1600
      %v1602 = vpop.f32.mrb[0].mxu0
      %v1603 = vpop.f32.mrb[0].mxu0
      %v1604 = vpop.f32.mrb[0].mxu0
      %1605 = vdwg.mxu0
      %v1606 = vsel %vm805, %v1601, -inf
      %1607 = vmax.xlane.f32.xlu0 %v1606
      %v1608 = vpop.xlane.xlu0 %1607
      %v1609 = vsub.f32 %v1601, %v1608
      %v1610 = vmul.f32 %v1609, 1.442695
      %v1611 = vpow.pop %v1610
      %v1612 = vsel %vm805, %v1611, 0.0
      %1613 = vadd.xlane.f32.xlu0 %v1612
      %v1614 = vpop.xlane.xlu0 %1613
      %v1615 = vrcp.pop %v1614
      %v1616 = vmul.f32 %v1611, %v1615
      %v1617 = vpack.c.bf16 %v1616, %v1616
      %1619 = vrot.lane.b32.xlu0 %v1448, 120
      %v1620 = vpop.permute.xlu0 %1619
      %v1622 = vsel %vm805, %v1617, 0
      %v1625 = vsel %vm869, %v1620, 0
      %1627 = vmatprep.subr.bf16.mxu0 0
      %1628 = vmatpush1.bf16.msra.mxu0 %v1625
      %1629 = vmatprep.subr.bf16.mxu0 0
      %1630 = vmatpush1.bf16.msra.mxu0 0
      %1631 = vmatprep.subr.bf16.mxu0 0
      %1632 = vmatpush1.bf16.msra.mxu0 0
      %1633 = vmatprep.subr.bf16.mxu0 0
      %1634 = vmatpush1.bf16.msra.mxu0 0
      %1635 = vmatprep.subr.bf16.mxu0 0
      %1636 = vmatpush1.bf16.msra.mxu0 0
      %1637 = vmatprep.subr.bf16.mxu0 0
      %1638 = vmatpush1.bf16.msra.mxu0 0
      %1639 = vmatprep.subr.bf16.mxu0 0
      %1640 = vmatpush1.bf16.msra.mxu0 0
      %1641 = vmatprep.subr.bf16.mxu0 0
      %1642 = vmatpush1.bf16.msra.mxu0 0
      %1643 = vmatprep.subr.bf16.mxu0 0
      %1644 = vmatpush1.bf16.msra.mxu0 0
      %1645 = vmatprep.subr.bf16.mxu0 0
      %1646 = vmatpush1.bf16.msra.mxu0 0
      %1647 = vmatprep.subr.bf16.mxu0 0
      %1648 = vmatpush1.bf16.msra.mxu0 0
      %1649 = vmatprep.subr.bf16.mxu0 0
      %1650 = vmatpush1.bf16.msra.mxu0 0
      %1651 = vmatprep.subr.bf16.mxu0 0
      %1652 = vmatpush1.bf16.msra.mxu0 0
      %1653 = vmatprep.subr.bf16.mxu0 0
      %1654 = vmatpush1.bf16.msra.mxu0 0
      %1655 = vmatprep.subr.bf16.mxu0 0
      %1656 = vmatpush1.bf16.msra.mxu0 0
      %1657 = vmatprep.subr.bf16.mxu0 0
      %1658 = vmatpush1.bf16.msra.mxu0 0
      %1659 = vmatprep.mubr.bf16.mxu0 0
      %1660 = vmatmul.mubr.bf16.gmra.mrb[0].mxu0 %v1622
      %v1661 = vpop.f32.mrb[0].mxu0
      %v1662 = vadd.f32 0.0, %v1661
      %v1663 = vpop.f32.mrb[0].mxu0
      %v1664 = vpop.f32.mrb[0].mxu0
      %v1665 = vpop.f32.mrb[0].mxu0
      %1666 = vdwg.mxu0
      %1667 = vrot.lane.b32.xlu0 %v1447, 112
      %v1668 = vpop.permute.xlu0 %1667
      %1669 = vrot.lane.b32.xlu0 %v1447, 80
      %v1670 = vpop.permute.xlu0 %1669
      %v1672 = vsel %vm805, %v1668, 0
      %v1675 = vsel %vm805, %v1670, 0
      %1677 = vmatprep.subr.bf16.mxu0 0
      %1678 = vmatpush1.bf16.xpose.msra.mxu0 %v1675
      %1679 = vmatprep.subr.bf16.mxu0 0
      %1680 = vmatpush1.bf16.xpose.msra.mxu0 0
      %1681 = vmatprep.subr.bf16.mxu0 0
      %1682 = vmatpush1.bf16.xpose.msra.mxu0 0
      %1683 = vmatprep.subr.bf16.mxu0 0
      %1684 = vmatpush1.bf16.xpose.msra.mxu0 0
      %1685 = vmatprep.subr.bf16.mxu0 0
      %1686 = vmatpush1.bf16.xpose.msra.mxu0 0
      %1687 = vmatprep.subr.bf16.mxu0 0
      %1688 = vmatpush1.bf16.xpose.msra.mxu0 0
      %1689 = vmatprep.subr.bf16.mxu0 0
      %1690 = vmatpush1.bf16.xpose.msra.mxu0 0
      %1691 = vmatprep.subr.bf16.mxu0 0
      %1692 = vmatpush1.bf16.xpose.msra.mxu0 0
      %1693 = vmatprep.subr.bf16.mxu0 0
      %1694 = vmatpush1.bf16.xpose.msra.mxu0 0
      %1695 = vmatprep.subr.bf16.mxu0 0
      %1696 = vmatpush1.bf16.xpose.msra.mxu0 0
      %1697 = vmatprep.subr.bf16.mxu0 0
      %1698 = vmatpush1.bf16.xpose.msra.mxu0 0
      %1699 = vmatprep.subr.bf16.mxu0 0
      %1700 = vmatpush1.bf16.xpose.msra.mxu0 0
      %1701 = vmatprep.subr.bf16.mxu0 0
      %1702 = vmatpush1.bf16.xpose.msra.mxu0 0
      %1703 = vmatprep.subr.bf16.mxu0 0
      %1704 = vmatpush1.bf16.xpose.msra.mxu0 0
      %1705 = vmatprep.subr.bf16.mxu0 0
      %1706 = vmatpush1.bf16.xpose.msra.mxu0 0
      %1707 = vmatprep.subr.bf16.mxu0 0
      %1708 = vmatpush1.bf16.xpose.msra.mxu0 0
      %1709 = vmatprep.mubr.bf16.mxu0 0
      %1710 = vmatmul.mubr.bf16.gmra.mrb[0].mxu0 %v1672
      %v1711 = vpop.f32.mrb[0].mxu0
      %v1712 = vadd.f32 0.0, %v1711
      %v1713 = vpop.f32.mrb[0].mxu0
      %v1714 = vpop.f32.mrb[0].mxu0
      %v1715 = vpop.f32.mrb[0].mxu0
      %1716 = vdwg.mxu0
      %v1717 = vsel %vm805, %v1712, -inf
      %1718 = vmax.xlane.f32.xlu0 %v1717
      %v1719 = vpop.xlane.xlu0 %1718
      %v1720 = vsub.f32 %v1712, %v1719
      %v1721 = vmul.f32 %v1720, 1.442695
      %v1722 = vpow.pop %v1721
      %v1723 = vsel %vm805, %v1722, 0.0
      %1724 = vadd.xlane.f32.xlu0 %v1723
      %v1725 = vpop.xlane.xlu0 %1724
      %v1726 = vrcp.pop %v1725
      %v1727 = vmul.f32 %v1722, %v1726
      %v1728 = vpack.c.bf16 %v1727, %v1727
      %1729 = vrot.lane.b32.xlu0 %v1448, 112
      %v1730 = vpop.permute.xlu0 %1729
      %v1732 = vsel %vm805, %v1728, 0
      %v1735 = vsel %vm869, %v1730, 0
      %1737 = vmatprep.subr.bf16.mxu0 0
      %1738 = vmatpush1.bf16.msra.mxu0 %v1735
      %1739 = vmatprep.subr.bf16.mxu0 0
      %1740 = vmatpush1.bf16.msra.mxu0 0
      %1741 = vmatprep.subr.bf16.mxu0 0
      %1742 = vmatpush1.bf16.msra.mxu0 0
      %1743 = vmatprep.subr.bf16.mxu0 0
      %1744 = vmatpush1.bf16.msra.mxu0 0
      %1745 = vmatprep.subr.bf16.mxu0 0
      %1746 = vmatpush1.bf16.msra.mxu0 0
      %1747 = vmatprep.subr.bf16.mxu0 0
      %1748 = vmatpush1.bf16.msra.mxu0 0
      %1749 = vmatprep.subr.bf16.mxu0 0
      %1750 = vmatpush1.bf16.msra.mxu0 0
      %1751 = vmatprep.subr.bf16.mxu0 0
      %1752 = vmatpush1.bf16.msra.mxu0 0
      %1753 = vmatprep.subr.bf16.mxu0 0
      %1754 = vmatpush1.bf16.msra.mxu0 0
      %1755 = vmatprep.subr.bf16.mxu0 0
      %1756 = vmatpush1.bf16.msra.mxu0 0
      %1757 = vmatprep.subr.bf16.mxu0 0
      %1758 = vmatpush1.bf16.msra.mxu0 0
      %1759 = vmatprep.subr.bf16.mxu0 0
      %1760 = vmatpush1.bf16.msra.mxu0 0
      %1761 = vmatprep.subr.bf16.mxu0 0
      %1762 = vmatpush1.bf16.msra.mxu0 0
      %1763 = vmatprep.subr.bf16.mxu0 0
      %1764 = vmatpush1.bf16.msra.mxu0 0
      %1765 = vmatprep.subr.bf16.mxu0 0
      %1766 = vmatpush1.bf16.msra.mxu0 0
      %1767 = vmatprep.subr.bf16.mxu0 0
      %1768 = vmatpush1.bf16.msra.mxu0 0
      %1769 = vmatprep.mubr.bf16.mxu0 0
      %1770 = vmatmul.mubr.bf16.gmra.mrb[0].mxu0 %v1732
      %v1771 = vpop.f32.mrb[0].mxu0
      %v1772 = vadd.f32 0.0, %v1771
      %v1773 = vpop.f32.mrb[0].mxu0
      %v1774 = vpop.f32.mrb[0].mxu0
      %v1775 = vpop.f32.mrb[0].mxu0
      %1776 = vdwg.mxu0
      %1777 = vrot.lane.b32.xlu0 %v1447, 104
      %v1778 = vpop.permute.xlu0 %1777
      %1779 = vrot.lane.b32.xlu0 %v1447, 72
      %v1780 = vpop.permute.xlu0 %1779
      %v1782 = vsel %vm805, %v1778, 0
      %v1785 = vsel %vm805, %v1780, 0
      %1787 = vmatprep.subr.bf16.mxu0 0
      %1788 = vmatpush1.bf16.xpose.msra.mxu0 %v1785
      %1789 = vmatprep.subr.bf16.mxu0 0
      %1790 = vmatpush1.bf16.xpose.msra.mxu0 0
      %1791 = vmatprep.subr.bf16.mxu0 0
      %1792 = vmatpush1.bf16.xpose.msra.mxu0 0
      %1793 = vmatprep.subr.bf16.mxu0 0
      %1794 = vmatpush1.bf16.xpose.msra.mxu0 0
      %1795 = vmatprep.subr.bf16.mxu0 0
      %1796 = vmatpush1.bf16.xpose.msra.mxu0 0
      %1797 = vmatprep.subr.bf16.mxu0 0
      %1798 = vmatpush1.bf16.xpose.msra.mxu0 0
      %1799 = vmatprep.subr.bf16.mxu0 0
      %1800 = vmatpush1.bf16.xpose.msra.mxu0 0
      %1801 = vmatprep.subr.bf16.mxu0 0
      %1802 = vmatpush1.bf16.xpose.msra.mxu0 0
      %1803 = vmatprep.subr.bf16.mxu0 0
      %1804 = vmatpush1.bf16.xpose.msra.mxu0 0
      %1805 = vmatprep.subr.bf16.mxu0 0
      %1806 = vmatpush1.bf16.xpose.msra.mxu0 0
      %1807 = vmatprep.subr.bf16.mxu0 0
      %1808 = vmatpush1.bf16.xpose.msra.mxu0 0
      %1809 = vmatprep.subr.bf16.mxu0 0
      %1810 = vmatpush1.bf16.xpose.msra.mxu0 0
      %1811 = vmatprep.subr.bf16.mxu0 0
      %1812 = vmatpush1.bf16.xpose.msra.mxu0 0
      %1813 = vmatprep.subr.bf16.mxu0 0
      %1814 = vmatpush1.bf16.xpose.msra.mxu0 0
      %1815 = vmatprep.subr.bf16.mxu0 0
      %1816 = vmatpush1.bf16.xpose.msra.mxu0 0
      %1817 = vmatprep.subr.bf16.mxu0 0
      %1818 = vmatpush1.bf16.xpose.msra.mxu0 0
      %1819 = vmatprep.mubr.bf16.mxu0 0
      %1820 = vmatmul.mubr.bf16.gmra.mrb[0].mxu0 %v1782
      %v1821 = vpop.f32.mrb[0].mxu0
      %v1822 = vadd.f32 0.0, %v1821
      %v1823 = vpop.f32.mrb[0].mxu0
      %v1824 = vpop.f32.mrb[0].mxu0
      %v1825 = vpop.f32.mrb[0].mxu0
      %1826 = vdwg.mxu0
      %v1827 = vsel %vm805, %v1822, -inf
      %1828 = vmax.xlane.f32.xlu0 %v1827
      %v1829 = vpop.xlane.xlu0 %1828
      %v1830 = vsub.f32 %v1822, %v1829
      %v1831 = vmul.f32 %v1830, 1.442695
      %v1832 = vpow.pop %v1831
      %v1833 = vsel %vm805, %v1832, 0.0
      %1834 = vadd.xlane.f32.xlu0 %v1833
      %v1835 = vpop.xlane.xlu0 %1834
      %v1836 = vrcp.pop %v1835
      %v1837 = vmul.f32 %v1832, %v1836
      %v1838 = vpack.c.bf16 %v1837, %v1837
      %1839 = vrot.lane.b32.xlu0 %v1448, 104
      %v1840 = vpop.permute.xlu0 %1839
      %v1842 = vsel %vm805, %v1838, 0
      %v1845 = vsel %vm869, %v1840, 0
      %1847 = vmatprep.subr.bf16.mxu0 0
      %1848 = vmatpush1.bf16.msra.mxu0 %v1845
      %1849 = vmatprep.subr.bf16.mxu0 0
      %1850 = vmatpush1.bf16.msra.mxu0 0
      %1851 = vmatprep.subr.bf16.mxu0 0
      %1852 = vmatpush1.bf16.msra.mxu0 0
      %1853 = vmatprep.subr.bf16.mxu0 0
      %1854 = vmatpush1.bf16.msra.mxu0 0
      %1855 = vmatprep.subr.bf16.mxu0 0
      %1856 = vmatpush1.bf16.msra.mxu0 0
      %1857 = vmatprep.subr.bf16.mxu0 0
      %1858 = vmatpush1.bf16.msra.mxu0 0
      %1859 = vmatprep.subr.bf16.mxu0 0
      %1860 = vmatpush1.bf16.msra.mxu0 0
      %1861 = vmatprep.subr.bf16.mxu0 0
      %1862 = vmatpush1.bf16.msra.mxu0 0
      %1863 = vmatprep.subr.bf16.mxu0 0
      %1864 = vmatpush1.bf16.msra.mxu0 0
      %1865 = vmatprep.subr.bf16.mxu0 0
      %1866 = vmatpush1.bf16.msra.mxu0 0
      %1867 = vmatprep.subr.bf16.mxu0 0
      %1868 = vmatpush1.bf16.msra.mxu0 0
      %1869 = vmatprep.subr.bf16.mxu0 0
      %1870 = vmatpush1.bf16.msra.mxu0 0
      %1871 = vmatprep.subr.bf16.mxu0 0
      %1872 = vmatpush1.bf16.msra.mxu0 0
      %1873 = vmatprep.subr.bf16.mxu0 0
      %1874 = vmatpush1.bf16.msra.mxu0 0
      %1875 = vmatprep.subr.bf16.mxu0 0
      %1876 = vmatpush1.bf16.msra.mxu0 0
      %1877 = vmatprep.subr.bf16.mxu0 0
      %1878 = vmatpush1.bf16.msra.mxu0 0
      %1879 = vmatprep.mubr.bf16.mxu0 0
      %1880 = vmatmul.mubr.bf16.gmra.mrb[0].mxu0 %v1842
      %v1881 = vpop.f32.mrb[0].mxu0
      %v1882 = vadd.f32 0.0, %v1881
      %v1883 = vpop.f32.mrb[0].mxu0
      %v1884 = vpop.f32.mrb[0].mxu0
      %v1885 = vpop.f32.mrb[0].mxu0
      %1886 = vdwg.mxu0
      %1888 = vrot.lane.b32.xlu0 %v1662, 8
      %v1889 = vpop.permute.xlu0 %1888
      %1892 = vrot.lane.b32.xlu0 %v1772, 16
      %v1893 = vpop.permute.xlu0 %1892
      %1896 = vrot.lane.b32.xlu0 %v1882, 24
      %v1897 = vpop.permute.xlu0 %1896
      %v1899 = vsel %vm805, %v1551, %v1889
      %v1900 = vsel %vm1256, %v1899, %v1893
      %v1901 = vsel %vm1258, %v1900, %v1897
      %v1902 = vpack.c.bf16 %v1901, %v1901
      %v1904 = vsel %vm757, %v1902, 0
      %1906 = vmatprep.subr.bf16.mxu0 0
      %1907 = vmatpush1.bf16.msra.mxu0 %v1275
      %1908 = vmatprep.subr.bf16.mxu0 0
      %1909 = vmatpush1.bf16.msra.mxu0 %v1276
      %1910 = vmatprep.subr.bf16.mxu0 0
      %1911 = vmatpush1.bf16.msra.mxu0 0
      %1912 = vmatprep.subr.bf16.mxu0 0
      %1913 = vmatpush1.bf16.msra.mxu0 0
      %1914 = vmatprep.subr.bf16.mxu0 0
      %1915 = vmatpush1.bf16.msra.mxu0 0
      %1916 = vmatprep.subr.bf16.mxu0 0
      %1917 = vmatpush1.bf16.msra.mxu0 0
      %1918 = vmatprep.subr.bf16.mxu0 0
      %1919 = vmatpush1.bf16.msra.mxu0 0
      %1920 = vmatprep.subr.bf16.mxu0 0
      %1921 = vmatpush1.bf16.msra.mxu0 0
      %1922 = vmatprep.subr.bf16.mxu0 0
      %1923 = vmatpush1.bf16.msra.mxu0 0
      %1924 = vmatprep.subr.bf16.mxu0 0
      %1925 = vmatpush1.bf16.msra.mxu0 0
      %1926 = vmatprep.subr.bf16.mxu0 0
      %1927 = vmatpush1.bf16.msra.mxu0 0
      %1928 = vmatprep.subr.bf16.mxu0 0
      %1929 = vmatpush1.bf16.msra.mxu0 0
      %1930 = vmatprep.subr.bf16.mxu0 0
      %1931 = vmatpush1.bf16.msra.mxu0 0
      %1932 = vmatprep.subr.bf16.mxu0 0
      %1933 = vmatpush1.bf16.msra.mxu0 0
      %1934 = vmatprep.subr.bf16.mxu0 0
      %1935 = vmatpush1.bf16.msra.mxu0 0
      %1936 = vmatprep.subr.bf16.mxu0 0
      %1937 = vmatpush1.bf16.msra.mxu0 0
      %1938 = vmatprep.mubr.bf16.mxu0 0
      %1939 = vmatmul.mubr.bf16.gmra.mrb[0].mxu0 %v1904
      %v1940 = vpop.f32.mrb[0].mxu0
      %v1941 = vadd.f32 %v1265, %v1940
      %v1942 = vpop.f32.mrb[0].mxu0
      %v1943 = vpop.f32.mrb[0].mxu0
      %v1944 = vpop.f32.mrb[0].mxu0
      %1945 = vdwg.mxu0
      %v1946 = vadd.f32 %v1941, %v1352
      %v1947 = vld [vmem:[%s695] sm:$0x1]
      %v1948 = vld [vmem:[%s698] sm:$0x1]
      %v1949 = vsel %vm757, %v1946, 0.0
      %1950 = vadd.xlane.f32.xlu0 %v1949
      %v1951 = vpop.xlane.xlu0 %1950
      %v1952 = vmul.f32 %v1951, %v1328
      %v1953 = vsub.f32 %v1946, %v1952
      %v1954 = vmul.f32 %v1953, %v1953
      %v1955 = vsel %vm757, %v1954, 0.0
      %1956 = vadd.xlane.f32.xlu0 %v1955
      %v1957 = vpop.xlane.xlu0 %1956
      %v1958 = vmul.f32 %v1957, %v1328
      %v1959 = vadd.f32 %v1958, 1e-05
      %v1960 = vrsqrt.pop %v1959
      %v1961 = vmul.f32 %v1953, %v1960
      %v1963 = vlaneseq
      %v1964 = vshrl.u32 %v1963, 7
      %v1965 = vsub.s32 0, %v1964
      %v1966 = vrot.slane %v1947, %v1965
      %v1968 = vmul.f32 %v1961, %v1966
      %v1970 = vlaneseq
      %v1971 = vshrl.u32 %v1970, 7
      %v1972 = vsub.s32 0, %v1971
      %v1973 = vrot.slane %v1948, %v1972
      %v1975 = vadd.f32 %v1968, %v1973
      %v1976 = vpack.c.bf16 %v1975, %v1975
      %v1977 = vld [vmem:[%s703] sm:$0xf]
      %v1978 = vld [vmem:[%s703 + $0x4] sm:$0xf]
      %v1979 = vld [vmem:[%s703 + $0x8] sm:$0xf]
      %v1980 = vld [vmem:[%s703 + $0xc] sm:$0xf]
      %v1981 = vld [vmem:[%s706] sm:$0x1]
      %v1983 = vlaneseq
      %v1984 = vshrl.u32 %v1983, 7
      %v1985 = vsub.s32 0, %v1984
      %v1986 = vrot.slane %v1981, %v1985
      %v1992 = vunpack.c.l.b16 %v1977
      %v1993 = vunpack.c.l.b16 %v1978
      %v1994 = vunpack.c.l.b16 %v1979
      %v1995 = vunpack.c.l.b16 %v1980
      %v1996 = vpack.c.b16 %v1993, %v1992
      %v1997 = vpack.c.b16 %v1995, %v1994
      %v2001 = vsel %vm757, %v1976, 0
      %2003 = vmatprep.subr.bf16.mxu0 0
      %2004 = vmatpush1.bf16.msra.mxu0 %v1996
      %2005 = vmatprep.subr.bf16.mxu0 0
      %2006 = vmatpush1.bf16.msra.mxu0 %v1997
      %2007 = vmatprep.subr.bf16.mxu0 0
      %2008 = vmatpush1.bf16.msra.mxu0 0
      %2009 = vmatprep.subr.bf16.mxu0 0
      %2010 = vmatpush1.bf16.msra.mxu0 0
      %2011 = vmatprep.subr.bf16.mxu0 0
      %2012 = vmatpush1.bf16.msra.mxu0 0
      %2013 = vmatprep.subr.bf16.mxu0 0
      %2014 = vmatpush1.bf16.msra.mxu0 0
      %2015 = vmatprep.subr.bf16.mxu0 0
      %2016 = vmatpush1.bf16.msra.mxu0 0
      %2017 = vmatprep.subr.bf16.mxu0 0
      %2018 = vmatpush1.bf16.msra.mxu0 0
      %2019 = vmatprep.subr.bf16.mxu0 0
      %2020 = vmatpush1.bf16.msra.mxu0 0
      %2021 = vmatprep.subr.bf16.mxu0 0
      %2022 = vmatpush1.bf16.msra.mxu0 0
      %2023 = vmatprep.subr.bf16.mxu0 0
      %2024 = vmatpush1.bf16.msra.mxu0 0
      %2025 = vmatprep.subr.bf16.mxu0 0
      %2026 = vmatpush1.bf16.msra.mxu0 0
      %2027 = vmatprep.subr.bf16.mxu0 0
      %2028 = vmatpush1.bf16.msra.mxu0 0
      %2029 = vmatprep.subr.bf16.mxu0 0
      %2030 = vmatpush1.bf16.msra.mxu0 0
      %2031 = vmatprep.subr.bf16.mxu0 0
      %2032 = vmatpush1.bf16.msra.mxu0 0
      %2033 = vmatprep.subr.bf16.mxu0 0
      %2034 = vmatpush1.bf16.msra.mxu0 0
      %2035 = vmatprep.mubr.bf16.mxu0 0
      %2036 = vmatmul.mubr.bf16.gmra.mrb[0].mxu0 %v2001
      %v2037 = vpop.f32.mrb[0].mxu0
      %v2038 = vadd.f32 %v1986, %v2037
      %v2039 = vpop.f32.mrb[0].mxu0
      %v2040 = vpop.f32.mrb[0].mxu0
      %v2041 = vpop.f32.mrb[0].mxu0
      %2042 = vdwg.mxu0
      %v2043 = vmax.f32 %v2038, 0.0
      %v2044 = vpack.c.bf16 %v2043, %v2043
      %v2045 = vld [vmem:[%s711] sm:$0xf]
      %v2046 = vld [vmem:[%s711 + $0x4] sm:$0xf]
      %v2047 = vld [vmem:[%s711 + $0x8] sm:$0xf]
      %v2048 = vld [vmem:[%s711 + $0xc] sm:$0xf]
      %v2049 = vld [vmem:[%s711 + $0x10] sm:$0xf]
      %v2050 = vld [vmem:[%s711 + $0x14] sm:$0xf]
      %v2051 = vld [vmem:[%s711 + $0x18] sm:$0xf]
      %v2052 = vld [vmem:[%s711 + $0x1c] sm:$0xf]
      %v2053 = vld [vmem:[%s714] sm:$0x1]
      %v2055 = vlaneseq
      %v2056 = vshrl.u32 %v2055, 7
      %v2057 = vsub.s32 0, %v2056
      %v2058 = vrot.slane %v2053, %v2057
      %v2068 = vunpack.c.l.b16 %v2045
      %v2069 = vunpack.c.l.b16 %v2046
      %v2070 = vunpack.c.l.b16 %v2047
      %v2071 = vunpack.c.l.b16 %v2048
      %v2072 = vunpack.c.l.b16 %v2049
      %v2073 = vunpack.c.l.b16 %v2050
      %v2074 = vunpack.c.l.b16 %v2051
      %v2075 = vunpack.c.l.b16 %v2052
      %v2076 = vpack.c.b16 %v2069, %v2068
      %v2077 = vpack.c.b16 %v2071, %v2070
      %v2078 = vpack.c.b16 %v2073, %v2072
      %v2079 = vpack.c.b16 %v2075, %v2074
      %vm2084 = vcmask 523264
      %v2086 = vsel %vm2084, %v2044, 0
      %2088 = vmatprep.subr.bf16.mxu0 0
      %2089 = vmatpush1.bf16.msra.mxu0 %v2076
      %2090 = vmatprep.subr.bf16.mxu0 0
      %2091 = vmatpush1.bf16.msra.mxu0 %v2077
      %2092 = vmatprep.subr.bf16.mxu0 0
      %2093 = vmatpush1.bf16.msra.mxu0 %v2078
      %2094 = vmatprep.subr.bf16.mxu0 0
      %2095 = vmatpush1.bf16.msra.mxu0 %v2079
      %2096 = vmatprep.subr.bf16.mxu0 0
      %2097 = vmatpush1.bf16.msra.mxu0 0
      %2098 = vmatprep.subr.bf16.mxu0 0
      %2099 = vmatpush1.bf16.msra.mxu0 0
      %2100 = vmatprep.subr.bf16.mxu0 0
      %2101 = vmatpush1.bf16.msra.mxu0 0
      %2102 = vmatprep.subr.bf16.mxu0 0
      %2103 = vmatpush1.bf16.msra.mxu0 0
      %2104 = vmatprep.subr.bf16.mxu0 0
      %2105 = vmatpush1.bf16.msra.mxu0 0
      %2106 = vmatprep.subr.bf16.mxu0 0
      %2107 = vmatpush1.bf16.msra.mxu0 0
      %2108 = vmatprep.subr.bf16.mxu0 0
      %2109 = vmatpush1.bf16.msra.mxu0 0
      %2110 = vmatprep.subr.bf16.mxu0 0
      %2111 = vmatpush1.bf16.msra.mxu0 0
      %2112 = vmatprep.subr.bf16.mxu0 0
      %2113 = vmatpush1.bf16.msra.mxu0 0
      %2114 = vmatprep.subr.bf16.mxu0 0
      %2115 = vmatpush1.bf16.msra.mxu0 0
      %2116 = vmatprep.subr.bf16.mxu0 0
      %2117 = vmatpush1.bf16.msra.mxu0 0
      %2118 = vmatprep.subr.bf16.mxu0 0
      %2119 = vmatpush1.bf16.msra.mxu0 0
      %2120 = vmatprep.mubr.bf16.mxu0 0
      %2121 = vmatmul.mubr.bf16.gmra.mrb[0].mxu0 %v2086
      %v2122 = vpop.f32.mrb[0].mxu0
      %v2123 = vadd.f32 %v2058, %v2122
      %v2124 = vpop.f32.mrb[0].mxu0
      %v2125 = vpop.f32.mrb[0].mxu0
      %v2126 = vpop.f32.mrb[0].mxu0
      %2127 = vdwg.mxu0
      %v2128 = vadd.f32 %v2123, %v1975
      %v2129 = vld [vmem:[%s717] sm:$0x1]
      %v2130 = vld [vmem:[%s720] sm:$0x1]
      %v2131 = vsel %vm757, %v2128, 0.0
      %2132 = vadd.xlane.f32.xlu0 %v2131
      %v2133 = vpop.xlane.xlu0 %2132
      %v2134 = vmul.f32 %v2133, %v1328
      %v2135 = vsub.f32 %v2128, %v2134
      %v2136 = vmul.f32 %v2135, %v2135
      %v2137 = vsel %vm757, %v2136, 0.0
      %2138 = vadd.xlane.f32.xlu0 %v2137
      %v2139 = vpop.xlane.xlu0 %2138
      %v2140 = vmul.f32 %v2139, %v1328
      %v2141 = vadd.f32 %v2140, 1e-05
      %v2142 = vrsqrt.pop %v2141
      %v2143 = vmul.f32 %v2135, %v2142
      %v2145 = vlaneseq
      %v2146 = vshrl.u32 %v2145, 7
      %v2147 = vsub.s32 0, %v2146
      %v2148 = vrot.slane %v2129, %v2147
      %v2150 = vmul.f32 %v2143, %v2148
      %v2152 = vlaneseq
      %v2153 = vshrl.u32 %v2152, 7
      %v2154 = vsub.s32 0, %v2153
      %v2155 = vrot.slane %v2130, %v2154
      %v2157 = vadd.f32 %v2150, %v2155
      %2158 = vst.msk [vmem:[%s724] sm:$0xff] %vm757, %v2157
      %p2159 = scmp.lt.s32.totalorder %s30, 1
      %s2160 = scalar_select %p2159, %s30, 1
      %s2161 = smul.addr %s2160, 8
      %s2162 = scalar_lea.vmem %s15, %s2161
      // Predicated region
      $region85: #{transformer_forward.4} parent=79 // pred_check
        %p2163 = pneg %p446
      $region86: #{transformer_forward.4} parent=79 // pred_check_branch
        %2165 = sbr.rel (%p2163) target = $region88
      $region87: #{transformer_forward.4} parent=79 // pred_region
        _
      $region88: #{transformer_forward.4} parent=79 // pred_fallthru
        _
    $region80: #{transformer_forward.4} parent=5 // pred_fallthru
      _
    %p2166 = scmp.le.s32.totalorder 2, %s21
    // Predicated region
    $region89: #{transformer_forward.4} parent=5 // pred_check
      %p2167 = pneg %p2166
    $region90: #{transformer_forward.4} parent=5 // pred_check_branch
      %2169 = sbr.rel (%p2167) target = $region92
    $region91: #{transformer_forward.4} parent=5 // pred_region
      %s2170 = ssub.s32 %s21, 2
      // Predicated region
      $region93: #{transformer_forward.4} parent=91 // pred_check
        %p2171 = pneg %p452
      $region94: #{transformer_forward.4} parent=91 // pred_check_branch
        %2173 = sbr.rel (%p2171) target = $region96
      $region95: #{transformer_forward.4} parent=91 // pred_region
        %p2174 = scmp.lt.s32.totalorder %s32, 1
        %s2175 = scalar_select %p2174, %s32, 1
        %s2176 = smul.addr %s2175, 8
        %s2177 = scalar_lea.vmem %s15, %s2176
      $region96: #{transformer_forward.4} parent=91 // pred_fallthru
        _
    $region92: #{transformer_forward.4} parent=5 // pred_fallthru
      _
  $region6: #{transformer_forward.4} parent=0 // loop_footer
    %s25 = sadd.s32 1, %s21
  $region7: #{transformer_forward.4} parent=0 // loop_footer_branch
    %20 = sbr.rel target = $region3
  $region8: #{transformer_forward.4} parent=0 // loop_exit
    _

</llo_original>
